<compile_context>
chip_gen: v5e
topology: v5e:2x2
jax: 0.10.0
libtpu: 0.0.40
codegen_flags: <defaults>
</compile_context>

<pallas_src>
import math
import functools

import jax
import jax.numpy as jnp
from jax.experimental import pallas as pl
from jax.experimental.pallas import tpu as pltpu


# ---------------------------------------------------------------- in-kernel ops
def _layernorm(x, w, b, eps=1e-5):
    mu = jnp.mean(x, axis=-1, keepdims=True)
    var = jnp.mean(jnp.square(x - mu), axis=-1, keepdims=True)
    return (x - mu) * jax.lax.rsqrt(var + eps) * w + b


def _mm(x, w_bf16):
    """(M, K) f32 activations x (K, N) bf16 weight -> (M, N) f32 on the MXU."""
    return jnp.dot(x.astype(jnp.bfloat16), w_bf16,
                   preferred_element_type=jnp.float32)


def _attention(q, k, v, B, Tq, Tk, nhead, hd):
    """q: (B*Tq, D), k/v: (B*Tk, D) f32 -> (B*Tq, D) f32 (PyTorch MHA math)."""
    D = nhead * hd
    scale = 1.0 / math.sqrt(hd)
    q3 = (q * scale).astype(jnp.bfloat16).reshape(B, Tq, D)
    k3 = k.astype(jnp.bfloat16).reshape(B, Tk, D)
    v3 = v.astype(jnp.bfloat16).reshape(B, Tk, D)
    heads = []
    for h in range(nhead):
        qh = q3[:, :, h * hd:(h + 1) * hd]
        kh = k3[:, :, h * hd:(h + 1) * hd]
        vh = v3[:, :, h * hd:(h + 1) * hd]
        # batched over B (3-D einsum) -> fewer, larger MXU ops than per (b, h)
        s = jnp.einsum('bqd,bkd->bqk', qh, kh,
                       preferred_element_type=jnp.float32)
        s = s - jnp.max(s, axis=-1, keepdims=True)
        p = jnp.exp(s)
        p = p * pl.reciprocal(jnp.sum(p, axis=-1, keepdims=True), approx=True)
        heads.append(jnp.einsum('bqk,bkd->bqd', p.astype(jnp.bfloat16), vh,
                                preferred_element_type=jnp.float32))
    return jnp.concatenate(heads, axis=-1).reshape(B * Tq, D)


# ---------------------------------------------------------------- Pallas kernel
def _decoder_kernel(B, T, S, nhead, hd,
                    tgt_ref, memk_ref, mem_ref, qpos_ref,
                    sa_wqk_ref, sa_wv_ref, sa_wo_ref,
                    ca_wq_ref, ca_wk_ref, ca_wv_ref, ca_wo_ref,
                    w1_ref, w2_ref,
                    sa_bqk_ref, bd_ref, b1_ref,
                    out_ref):
    D = nhead * hd

    # layer 0: initialise the resident running state from tgt
    @pl.when(pl.program_id(0) == 0)
    def _():
        out_ref[...] = tgt_ref[...]

    x = out_ref[...]          # (B*T, D) running tgt (VMEM-resident across layers)
    qpos = qpos_ref[...]      # (B*T, D)
    memk = memk_ref[...]      # (B*S, D) = memory + pos (precomputed in wrapper)
    mem = mem_ref[...]        # (B*S, D)

    bd = bd_ref[...]          # (13, D) packed biases + layernorm params (f32)
    sa_bv, sa_bo = bd[0:1], bd[1:2]
    ca_bq, ca_bk, ca_bv, ca_bo = bd[2:3], bd[3:4], bd[4:5], bd[5:6]
    b2 = bd[6:7]
    n1w, n1b = bd[7:8], bd[8:9]
    n2w, n2b = bd[9:10], bd[10:11]
    n3w, n3b = bd[11:12], bd[12:13]

    # ---- self-attention: q = k = x + query_pos, value = x
    qk_in = x + qpos
    qk = _mm(qk_in, sa_wqk_ref[...]) + sa_bqk_ref[...]      # fused Q|K  (B*T, 2D)
    v = _mm(x, sa_wv_ref[...]) + sa_bv
    attn = _attention(qk[:, :D], qk[:, D:], v, B, T, T, nhead, hd)
    sa_out = _mm(attn, sa_wo_ref[...]) + sa_bo
    x = _layernorm(x + sa_out, n1w, n1b)

    # ---- cross-attention: q = x + query_pos, k = memory + pos, value = memory
    q = _mm(x + qpos, ca_wq_ref[...]) + ca_bq
    k = _mm(memk, ca_wk_ref[...]) + ca_bk
    v = _mm(mem, ca_wv_ref[...]) + ca_bv
    attn = _attention(q, k, v, B, T, S, nhead, hd)
    ca_out = _mm(attn, ca_wo_ref[...]) + ca_bo
    x = _layernorm(x + ca_out, n2w, n2b)

    # ---- feed-forward (ReLU)
    h = jnp.maximum(_mm(x, w1_ref[...]) + b1_ref[...], 0.0)
    ffn = _mm(h, w2_ref[...]) + b2
    x = _layernorm(x + ffn, n3w, n3b)

    out_ref[...] = x


# ---------------------------------------------------------------- wrapper
def transformer_decoder(tgt, memory, pos, query_pos, params, num_layers, nhead):
    B, T, D = tgt.shape
    S = memory.shape[1]
    hd = D // nhead
    FF = params['w1'].shape[-1]
    L = num_layers

    # 2-D slabs: batch folded into the matmul M dimension.
    tgt2 = tgt.reshape(B * T, D)
    qpos2 = query_pos.reshape(B * T, D)
    mem2 = memory.reshape(B * S, D)
    memk2 = (memory + pos).reshape(B * S, D)   # cross-attn K input, computed once

    def rep(shape):
        # constant block index across the layer axis -> DMA'd once, stays in VMEM
        return pl.BlockSpec(shape, lambda l, _s=shape: (0,) * len(_s))

    def per_layer(shape):
        # leading L dim squeezed; one layer's params streamed per grid step
        nd = len(shape)
        return pl.BlockSpec((None,) + shape, lambda l, _n=nd: (l,) + (0,) * _n)

    data_specs = [rep((B * T, D)), rep((B * S, D)),
                  rep((B * S, D)), rep((B * T, D))]
    weight_specs = [
        per_layer((D, 2 * D)),   # sa_wqk (fused Q|K, (in,out), bf16)
        per_layer((D, D)),       # sa_wv
        per_layer((D, D)),       # sa_wo
        per_layer((D, D)),       # ca_wq
        per_layer((D, D)),       # ca_wk
        per_layer((D, D)),       # ca_wv
        per_layer((D, D)),       # ca_wo
        per_layer((D, FF)),      # w1
        per_layer((FF, D)),      # w2
        per_layer((1, 2 * D)),   # sa_bqk
        per_layer((13, D)),      # packed biases + layernorm params
        per_layer((1, FF)),      # b1
    ]

    out = pl.pallas_call(
        functools.partial(_decoder_kernel, B, T, S, nhead, hd),
        out_shape=jax.ShapeDtypeStruct((B * T, D), jnp.float32),
        grid_spec=pltpu.PrefetchScalarGridSpec(
            num_scalar_prefetch=0,
            grid=(L,),
            in_specs=data_specs + weight_specs,
            out_specs=pl.BlockSpec((B * T, D), lambda l: (0, 0)),
        ),
        compiler_params=pltpu.CompilerParams(
            dimension_semantics=("arbitrary",)),   # output revisited across layers
    )(tgt2, memk2, mem2, qpos2,
      params['sa_wqk'], params['sa_wv'], params['sa_wo'],
      params['ca_wq'], params['ca_wk'], params['ca_wv'], params['ca_wo'],
      params['w1'], params['w2'],
      params['sa_bqk'], params['bd'], params['b1'])
    return out.reshape(B, T, D)


# ---------------------------------------------------------------- params
def init_decoder_params(key, d_model, dim_ff, num_layers):
    """One freshly-initialised layer (PyTorch (out,in) convention), then
    packed / pre-transposed / bf16-cast and replicated L times, matching
    _get_clones(deepcopy) semantics.  The API accepts arbitrary per-layer
    stacks (leading dim = num_layers)."""
    D, FF, L = d_model, dim_ff, num_layers
    ks = jax.random.split(key, 10)

    def W(k, out_f, in_f):
        bound = 1.0 / math.sqrt(in_f)
        return jax.random.uniform(k, (out_f, in_f), jnp.float32,
                                  minval=-bound, maxval=bound)

    sa_wq, sa_wk = W(ks[0], D, D), W(ks[1], D, D)
    sa_wv, sa_wo = W(ks[2], D, D), W(ks[3], D, D)
    ca_wq, ca_wk = W(ks[4], D, D), W(ks[5], D, D)
    ca_wv, ca_wo = W(ks[6], D, D), W(ks[7], D, D)
    w1, w2 = W(ks[8], FF, D), W(ks[9], D, FF)

    zD = jnp.zeros((D,), jnp.float32)
    oD = jnp.ones((D,), jnp.float32)
    bf16 = jnp.bfloat16

    def stackL(x):
        return jnp.stack([x] * L)

    return dict(
        sa_wqk=stackL(jnp.concatenate([sa_wq.T, sa_wk.T], axis=1).astype(bf16)),
        sa_wv=stackL(sa_wv.T.astype(bf16)),
        sa_wo=stackL(sa_wo.T.astype(bf16)),
        ca_wq=stackL(ca_wq.T.astype(bf16)),
        ca_wk=stackL(ca_wk.T.astype(bf16)),
        ca_wv=stackL(ca_wv.T.astype(bf16)),
        ca_wo=stackL(ca_wo.T.astype(bf16)),
        w1=stackL(w1.T.astype(bf16)),
        w2=stackL(w2.T.astype(bf16)),
        sa_bqk=stackL(jnp.zeros((1, 2 * D), jnp.float32)),
        bd=stackL(jnp.stack([zD, zD,            # sa_bv, sa_bo
                             zD, zD, zD, zD,    # ca_bq, ca_bk, ca_bv, ca_bo
                             zD,                # b2
                             oD, zD,            # norm1 w, b
                             oD, zD,            # norm2 w, b
                             oD, zD])),         # norm3 w, b
        b1=stackL(jnp.zeros((1, FF), jnp.float32)),
    )


# ---------------------------------------------------------------- main
if __name__ == "__main__":
    B = 2          # batch
    T = 8          # number of object queries (tgt length)
    S = 16         # memory (flattened H*W) length
    D = 32         # d_model
    H = 4          # nhead
    FF = 64        # dim_feedforward
    L = 2          # num_layers

    key = jax.random.PRNGKey(0)
    k1, k2, k3, k4, kp = jax.random.split(key, 5)
    tgt = jax.random.normal(k1, (B, T, D), jnp.float32)
    memory = jax.random.normal(k2, (B, S, D), jnp.float32)
    pos = jax.random.normal(k3, (B, S, D), jnp.float32)
    query_pos = jax.random.normal(k4, (B, T, D), jnp.float32)

    params = init_decoder_params(kp, D, FF, L)

    # TODO(synk): attention masks / memory_key_padding_mask (not in this
    # module's forward signature) are not implemented.
    out = transformer_decoder(tgt, memory, pos, query_pos, params, L, H)
    jax.block_until_ready(out)
    assert out.shape == (B, T, D)
    print("KERNEL_OK")
</pallas_src>

<mosaic_0001>
module attributes {stable_mosaic.version = 11 : i64} {
  func.func @_decoder_kernel(%arg0: i32, %arg1: memref<16x32xf32, #tpu.memory_space<vmem>>, %arg2: memref<32x32xf32, #tpu.memory_space<vmem>>, %arg3: memref<32x32xf32, #tpu.memory_space<vmem>>, %arg4: memref<16x32xf32, #tpu.memory_space<vmem>>, %arg5: memref<1x32x64xbf16, #tpu.memory_space<vmem>>, %arg6: memref<1x32x32xbf16, #tpu.memory_space<vmem>>, %arg7: memref<1x32x32xbf16, #tpu.memory_space<vmem>>, %arg8: memref<1x32x32xbf16, #tpu.memory_space<vmem>>, %arg9: memref<1x32x32xbf16, #tpu.memory_space<vmem>>, %arg10: memref<1x32x32xbf16, #tpu.memory_space<vmem>>, %arg11: memref<1x32x32xbf16, #tpu.memory_space<vmem>>, %arg12: memref<1x32x64xbf16, #tpu.memory_space<vmem>>, %arg13: memref<1x64x32xbf16, #tpu.memory_space<vmem>>, %arg14: memref<1x1x64xf32, #tpu.memory_space<vmem>>, %arg15: memref<1x13x32xf32, #tpu.memory_space<vmem>>, %arg16: memref<1x1x64xf32, #tpu.memory_space<vmem>>, %arg17: memref<16x32xf32, #tpu.memory_space<vmem>>) attributes {dimension_semantics = [#tpu.dimension_semantics<arbitrary>], iteration_bounds = array<i64: 2>, scalar_prefetch = 0 : i64, scratch_operands = 0 : i64, tpu.core_type = #tpu.core_type<tc>, window_params = [{pipeline_mode = #tpu.pipeline_mode<synchronous>, transform_indices = @transform_0, window_bounds = array<i64: 16, 32>}, {pipeline_mode = #tpu.pipeline_mode<synchronous>, transform_indices = @transform_1, window_bounds = array<i64: 32, 32>}, {pipeline_mode = #tpu.pipeline_mode<synchronous>, transform_indices = @transform_2, window_bounds = array<i64: 32, 32>}, {pipeline_mode = #tpu.pipeline_mode<synchronous>, transform_indices = @transform_3, window_bounds = array<i64: 16, 32>}, {transform_indices = @transform_4, window_bounds = array<i64: 1, 32, 64>}, {transform_indices = @transform_5, window_bounds = array<i64: 1, 32, 32>}, {transform_indices = @transform_6, window_bounds = array<i64: 1, 32, 32>}, {transform_indices = @transform_7, window_bounds = array<i64: 1, 32, 32>}, {transform_indices = @transform_8, window_bounds = array<i64: 1, 32, 32>}, {transform_indices = @transform_9, window_bounds = array<i64: 1, 32, 32>}, {transform_indices = @transform_10, window_bounds = array<i64: 1, 32, 32>}, {transform_indices = @transform_11, window_bounds = array<i64: 1, 32, 64>}, {transform_indices = @transform_12, window_bounds = array<i64: 1, 64, 32>}, {transform_indices = @transform_13, window_bounds = array<i64: 1, 1, 64>}, {transform_indices = @transform_14, window_bounds = array<i64: 1, 13, 32>}, {transform_indices = @transform_15, window_bounds = array<i64: 1, 1, 64>}, {pipeline_mode = #tpu.pipeline_mode<synchronous>, transform_indices = @transform_16, window_bounds = array<i64: 16, 32>}]} {
    %c0_i32 = arith.constant 0 : i32
    %0 = arith.cmpi eq, %arg0, %c0_i32 : i32
    %1 = arith.extui %0 : i1 to i32
    %c0_i32_0 = arith.constant 0 : i32
    %2 = arith.cmpi ne, %1, %c0_i32_0 : i32
    scf.if %2 {
      %c0_104 = arith.constant 0 : index
      %c0_105 = arith.constant 0 : index
      %304 = vector.load %arg1[%c0_104, %c0_105] : memref<16x32xf32, #tpu.memory_space<vmem>>, vector<16x32xf32>
      %c0_106 = arith.constant 0 : index
      %c0_107 = arith.constant 0 : index
      %305 = vector.load %arg17[%c0_106, %c0_107] : memref<16x32xf32, #tpu.memory_space<vmem>>, vector<16x32xf32>
      tpu.vector_store %arg17[%c0_106, %c0_107], %304 {strides = array<i32>} : memref<16x32xf32, #tpu.memory_space<vmem>>, vector<16x32xf32>,
    } else {
    }
    %c0 = arith.constant 0 : index
    %c0_1 = arith.constant 0 : index
    %3 = vector.load %arg17[%c0, %c0_1] : memref<16x32xf32, #tpu.memory_space<vmem>>, vector<16x32xf32>
    %c0_2 = arith.constant 0 : index
    %c0_3 = arith.constant 0 : index
    %4 = vector.load %arg4[%c0_2, %c0_3] : memref<16x32xf32, #tpu.memory_space<vmem>>, vector<16x32xf32>
    %c0_4 = arith.constant 0 : index
    %c0_5 = arith.constant 0 : index
    %5 = vector.load %arg2[%c0_4, %c0_5] : memref<32x32xf32, #tpu.memory_space<vmem>>, vector<32x32xf32>
    %c0_6 = arith.constant 0 : index
    %c0_7 = arith.constant 0 : index
    %6 = vector.load %arg3[%c0_6, %c0_7] : memref<32x32xf32, #tpu.memory_space<vmem>>, vector<32x32xf32>
    %c0_8 = arith.constant 0 : index
    %c0_9 = arith.constant 0 : index
    %c0_10 = arith.constant 0 : index
    %7 = vector.load %arg15[%c0_8, %c0_9, %c0_10] : memref<1x13x32xf32, #tpu.memory_space<vmem>>, vector<1x13x32xf32>
    %8 = vector.shape_cast %7 : vector<1x13x32xf32> to vector<13x32xf32>
    %9 = vector.extract_strided_slice %8 {offsets = [0, 0], sizes = [1, 32], strides = [1, 1]} : vector<13x32xf32> to vector<1x32xf32>
    %10 = vector.extract_strided_slice %8 {offsets = [1, 0], sizes = [1, 32], strides = [1, 1]} : vector<13x32xf32> to vector<1x32xf32>
    %11 = vector.extract_strided_slice %8 {offsets = [2, 0], sizes = [1, 32], strides = [1, 1]} : vector<13x32xf32> to vector<1x32xf32>
    %12 = vector.extract_strided_slice %8 {offsets = [3, 0], sizes = [1, 32], strides = [1, 1]} : vector<13x32xf32> to vector<1x32xf32>
    %13 = vector.extract_strided_slice %8 {offsets = [4, 0], sizes = [1, 32], strides = [1, 1]} : vector<13x32xf32> to vector<1x32xf32>
    %14 = vector.extract_strided_slice %8 {offsets = [5, 0], sizes = [1, 32], strides = [1, 1]} : vector<13x32xf32> to vector<1x32xf32>
    %15 = vector.extract_strided_slice %8 {offsets = [6, 0], sizes = [1, 32], strides = [1, 1]} : vector<13x32xf32> to vector<1x32xf32>
    %16 = vector.extract_strided_slice %8 {offsets = [7, 0], sizes = [1, 32], strides = [1, 1]} : vector<13x32xf32> to vector<1x32xf32>
    %17 = vector.extract_strided_slice %8 {offsets = [8, 0], sizes = [1, 32], strides = [1, 1]} : vector<13x32xf32> to vector<1x32xf32>
    %18 = vector.extract_strided_slice %8 {offsets = [9, 0], sizes = [1, 32], strides = [1, 1]} : vector<13x32xf32> to vector<1x32xf32>
    %19 = vector.extract_strided_slice %8 {offsets = [10, 0], sizes = [1, 32], strides = [1, 1]} : vector<13x32xf32> to vector<1x32xf32>
    %20 = vector.extract_strided_slice %8 {offsets = [11, 0], sizes = [1, 32], strides = [1, 1]} : vector<13x32xf32> to vector<1x32xf32>
    %21 = vector.extract_strided_slice %8 {offsets = [12, 0], sizes = [1, 32], strides = [1, 1]} : vector<13x32xf32> to vector<1x32xf32>
    %22 = arith.addf %3, %4 : vector<16x32xf32>
    %c0_11 = arith.constant 0 : index
    %c0_12 = arith.constant 0 : index
    %c0_13 = arith.constant 0 : index
    %23 = vector.load %arg5[%c0_11, %c0_12, %c0_13] : memref<1x32x64xbf16, #tpu.memory_space<vmem>>, vector<1x32x64xbf16>
    %24 = vector.shape_cast %23 : vector<1x32x64xbf16> to vector<32x64xbf16>
    %25 = arith.truncf %22 : vector<16x32xf32> to vector<16x32xbf16>
    %cst = arith.constant dense<0.000000e+00> : vector<16x64xf32>
    %26 = tpu.matmul %25, %24, %cst {dimension_numbers = #tpu.dot_dimension_numbers<[1], [0], [0], [1], [0, 0, 1, 1], [], []>} : vector<16x32xbf16>, vector<32x64xbf16>, vector<16x64xf32> -> vector<16x64xf32>
    %c0_14 = arith.constant 0 : index
    %c0_15 = arith.constant 0 : index
    %c0_16 = arith.constant 0 : index
    %27 = vector.load %arg14[%c0_14, %c0_15, %c0_16] : memref<1x1x64xf32, #tpu.memory_space<vmem>>, vector<1x1x64xf32>
    %28 = vector.shape_cast %27 : vector<1x1x64xf32> to vector<1x64xf32>
    %29 = vector.broadcast %28 : vector<1x64xf32> to vector<16x64xf32>
    %30 = arith.addf %26, %29 : vector<16x64xf32>
    %c0_17 = arith.constant 0 : index
    %c0_18 = arith.constant 0 : index
    %c0_19 = arith.constant 0 : index
    %31 = vector.load %arg6[%c0_17, %c0_18, %c0_19] : memref<1x32x32xbf16, #tpu.memory_space<vmem>>, vector<1x32x32xbf16>
    %32 = vector.shape_cast %31 : vector<1x32x32xbf16> to vector<32x32xbf16>
    %33 = arith.truncf %3 : vector<16x32xf32> to vector<16x32xbf16>
    %cst_20 = arith.constant dense<0.000000e+00> : vector<16x32xf32>
    %34 = tpu.matmul %33, %32, %cst_20 {dimension_numbers = #tpu.dot_dimension_numbers<[1], [0], [0], [1], [0, 0, 1, 1], [], []>} : vector<16x32xbf16>, vector<32x32xbf16>, vector<16x32xf32> -> vector<16x32xf32>
    %35 = vector.broadcast %9 : vector<1x32xf32> to vector<16x32xf32>
    %36 = arith.addf %34, %35 : vector<16x32xf32>
    %37 = vector.extract_strided_slice %30 {offsets = [0, 0], sizes = [16, 32], strides = [1, 1]} : vector<16x64xf32> to vector<16x32xf32>
    %38 = vector.extract_strided_slice %30 {offsets = [0, 32], sizes = [16, 32], strides = [1, 1]} : vector<16x64xf32> to vector<16x32xf32>
    %cst_21 = arith.constant 0.353553385 : f32
    %39 = vector.broadcast %cst_21 : f32 to vector<16x32xf32>
    %40 = arith.mulf %37, %39 : vector<16x32xf32>
    %41 = arith.truncf %40 : vector<16x32xf32> to vector<16x32xbf16>
    %42 = vector.shape_cast %41 : vector<16x32xbf16> to vector<2x8x32xbf16>
    %43 = arith.truncf %38 : vector<16x32xf32> to vector<16x32xbf16>
    %44 = vector.shape_cast %43 : vector<16x32xbf16> to vector<2x8x32xbf16>
    %45 = arith.truncf %36 : vector<16x32xf32> to vector<16x32xbf16>
    %46 = vector.shape_cast %45 : vector<16x32xbf16> to vector<2x8x32xbf16>
    %47 = vector.extract_strided_slice %42 {offsets = [0, 0, 0], sizes = [2, 8, 8], strides = [1, 1, 1]} : vector<2x8x32xbf16> to vector<2x8x8xbf16>
    %48 = vector.extract_strided_slice %44 {offsets = [0, 0, 0], sizes = [2, 8, 8], strides = [1, 1, 1]} : vector<2x8x32xbf16> to vector<2x8x8xbf16>
    %49 = vector.extract_strided_slice %46 {offsets = [0, 0, 0], sizes = [2, 8, 8], strides = [1, 1, 1]} : vector<2x8x32xbf16> to vector<2x8x8xbf16>
    "tpu.trace_start"() <{level = 10 : i32, message = "bqd,bkd->bqk"}> : () -> ()
    %cst_22 = arith.constant dense<0.000000e+00> : vector<2x8x8xf32>
    %50 = tpu.matmul %47, %48, %cst_22 {dimension_numbers = #tpu.dot_dimension_numbers<[2], [2], [1], [1], [0, 0, 0, 1, 1, 1], [0], [0]>} : vector<2x8x8xbf16>, vector<2x8x8xbf16>, vector<2x8x8xf32> -> vector<2x8x8xf32>
    "tpu.trace_stop"() : () -> ()
    %cst_23 = arith.constant dense<0xFF800000> : vector<2x8xf32>
    %51 = vector.multi_reduction <maximumf>, %50, %cst_23 [2] : vector<2x8x8xf32> to vector<2x8xf32>
    %52 = vector.shape_cast %51 : vector<2x8xf32> to vector<2x8x1xf32>
    %53 = vector.broadcast %52 : vector<2x8x1xf32> to vector<2x8x8xf32>
    %54 = arith.subf %50, %53 : vector<2x8x8xf32>
    %55 = math.exp %54 : vector<2x8x8xf32>
    %cst_24 = arith.constant dense<0.000000e+00> : vector<2x8xf32>
    %56 = vector.multi_reduction <add>, %55, %cst_24 [2] : vector<2x8x8xf32> to vector<2x8xf32>
    %57 = vector.shape_cast %56 : vector<2x8xf32> to vector<2x8x1xf32>
    %58 = tpu.reciprocal %57 {approx = true} : vector<2x8x1xf32> -> vector<2x8x1xf32>
    %59 = vector.broadcast %58 : vector<2x8x1xf32> to vector<2x8x8xf32>
    %60 = arith.mulf %55, %59 : vector<2x8x8xf32>
    %61 = arith.truncf %60 : vector<2x8x8xf32> to vector<2x8x8xbf16>
    "tpu.trace_start"() <{level = 10 : i32, message = "bqk,bkd->bqd"}> : () -> ()
    %cst_25 = arith.constant dense<0.000000e+00> : vector<2x8x8xf32>
    %62 = tpu.matmul %61, %49, %cst_25 {dimension_numbers = #tpu.dot_dimension_numbers<[2], [1], [1], [2], [0, 0, 0, 1, 1, 2], [0], [0]>} : vector<2x8x8xbf16>, vector<2x8x8xbf16>, vector<2x8x8xf32> -> vector<2x8x8xf32>
    "tpu.trace_stop"() : () -> ()
    %63 = vector.extract_strided_slice %42 {offsets = [0, 0, 8], sizes = [2, 8, 8], strides = [1, 1, 1]} : vector<2x8x32xbf16> to vector<2x8x8xbf16>
    %64 = vector.extract_strided_slice %44 {offsets = [0, 0, 8], sizes = [2, 8, 8], strides = [1, 1, 1]} : vector<2x8x32xbf16> to vector<2x8x8xbf16>
    %65 = vector.extract_strided_slice %46 {offsets = [0, 0, 8], sizes = [2, 8, 8], strides = [1, 1, 1]} : vector<2x8x32xbf16> to vector<2x8x8xbf16>
    "tpu.trace_start"() <{level = 10 : i32, message = "bqd,bkd->bqk"}> : () -> ()
    %cst_26 = arith.constant dense<0.000000e+00> : vector<2x8x8xf32>
    %66 = tpu.matmul %63, %64, %cst_26 {dimension_numbers = #tpu.dot_dimension_numbers<[2], [2], [1], [1], [0, 0, 0, 1, 1, 1], [0], [0]>} : vector<2x8x8xbf16>, vector<2x8x8xbf16>, vector<2x8x8xf32> -> vector<2x8x8xf32>
    "tpu.trace_stop"() : () -> ()
    %cst_27 = arith.constant dense<0xFF800000> : vector<2x8xf32>
    %67 = vector.multi_reduction <maximumf>, %66, %cst_27 [2] : vector<2x8x8xf32> to vector<2x8xf32>
    %68 = vector.shape_cast %67 : vector<2x8xf32> to vector<2x8x1xf32>
    %69 = vector.broadcast %68 : vector<2x8x1xf32> to vector<2x8x8xf32>
    %70 = arith.subf %66, %69 : vector<2x8x8xf32>
    %71 = math.exp %70 : vector<2x8x8xf32>
    %cst_28 = arith.constant dense<0.000000e+00> : vector<2x8xf32>
    %72 = vector.multi_reduction <add>, %71, %cst_28 [2] : vector<2x8x8xf32> to vector<2x8xf32>
    %73 = vector.shape_cast %72 : vector<2x8xf32> to vector<2x8x1xf32>
    %74 = tpu.reciprocal %73 {approx = true} : vector<2x8x1xf32> -> vector<2x8x1xf32>
    %75 = vector.broadcast %74 : vector<2x8x1xf32> to vector<2x8x8xf32>
    %76 = arith.mulf %71, %75 : vector<2x8x8xf32>
    %77 = arith.truncf %76 : vector<2x8x8xf32> to vector<2x8x8xbf16>
    "tpu.trace_start"() <{level = 10 : i32, message = "bqk,bkd->bqd"}> : () -> ()
    %cst_29 = arith.constant dense<0.000000e+00> : vector<2x8x8xf32>
    %78 = tpu.matmul %77, %65, %cst_29 {dimension_numbers = #tpu.dot_dimension_numbers<[2], [1], [1], [2], [0, 0, 0, 1, 1, 2], [0], [0]>} : vector<2x8x8xbf16>, vector<2x8x8xbf16>, vector<2x8x8xf32> -> vector<2x8x8xf32>
    "tpu.trace_stop"() : () -> ()
    %79 = vector.extract_strided_slice %42 {offsets = [0, 0, 16], sizes = [2, 8, 8], strides = [1, 1, 1]} : vector<2x8x32xbf16> to vector<2x8x8xbf16>
    %80 = vector.extract_strided_slice %44 {offsets = [0, 0, 16], sizes = [2, 8, 8], strides = [1, 1, 1]} : vector<2x8x32xbf16> to vector<2x8x8xbf16>
    %81 = vector.extract_strided_slice %46 {offsets = [0, 0, 16], sizes = [2, 8, 8], strides = [1, 1, 1]} : vector<2x8x32xbf16> to vector<2x8x8xbf16>
    "tpu.trace_start"() <{level = 10 : i32, message = "bqd,bkd->bqk"}> : () -> ()
    %cst_30 = arith.constant dense<0.000000e+00> : vector<2x8x8xf32>
    %82 = tpu.matmul %79, %80, %cst_30 {dimension_numbers = #tpu.dot_dimension_numbers<[2], [2], [1], [1], [0, 0, 0, 1, 1, 1], [0], [0]>} : vector<2x8x8xbf16>, vector<2x8x8xbf16>, vector<2x8x8xf32> -> vector<2x8x8xf32>
    "tpu.trace_stop"() : () -> ()
    %cst_31 = arith.constant dense<0xFF800000> : vector<2x8xf32>
    %83 = vector.multi_reduction <maximumf>, %82, %cst_31 [2] : vector<2x8x8xf32> to vector<2x8xf32>
    %84 = vector.shape_cast %83 : vector<2x8xf32> to vector<2x8x1xf32>
    %85 = vector.broadcast %84 : vector<2x8x1xf32> to vector<2x8x8xf32>
    %86 = arith.subf %82, %85 : vector<2x8x8xf32>
    %87 = math.exp %86 : vector<2x8x8xf32>
    %cst_32 = arith.constant dense<0.000000e+00> : vector<2x8xf32>
    %88 = vector.multi_reduction <add>, %87, %cst_32 [2] : vector<2x8x8xf32> to vector<2x8xf32>
    %89 = vector.shape_cast %88 : vector<2x8xf32> to vector<2x8x1xf32>
    %90 = tpu.reciprocal %89 {approx = true} : vector<2x8x1xf32> -> vector<2x8x1xf32>
    %91 = vector.broadcast %90 : vector<2x8x1xf32> to vector<2x8x8xf32>
    %92 = arith.mulf %87, %91 : vector<2x8x8xf32>
    %93 = arith.truncf %92 : vector<2x8x8xf32> to vector<2x8x8xbf16>
    "tpu.trace_start"() <{level = 10 : i32, message = "bqk,bkd->bqd"}> : () -> ()
    %cst_33 = arith.constant dense<0.000000e+00> : vector<2x8x8xf32>
    %94 = tpu.matmul %93, %81, %cst_33 {dimension_numbers = #tpu.dot_dimension_numbers<[2], [1], [1], [2], [0, 0, 0, 1, 1, 2], [0], [0]>} : vector<2x8x8xbf16>, vector<2x8x8xbf16>, vector<2x8x8xf32> -> vector<2x8x8xf32>
    "tpu.trace_stop"() : () -> ()
    %95 = vector.extract_strided_slice %42 {offsets = [0, 0, 24], sizes = [2, 8, 8], strides = [1, 1, 1]} : vector<2x8x32xbf16> to vector<2x8x8xbf16>
    %96 = vector.extract_strided_slice %44 {offsets = [0, 0, 24], sizes = [2, 8, 8], strides = [1, 1, 1]} : vector<2x8x32xbf16> to vector<2x8x8xbf16>
    %97 = vector.extract_strided_slice %46 {offsets = [0, 0, 24], sizes = [2, 8, 8], strides = [1, 1, 1]} : vector<2x8x32xbf16> to vector<2x8x8xbf16>
    "tpu.trace_start"() <{level = 10 : i32, message = "bqd,bkd->bqk"}> : () -> ()
    %cst_34 = arith.constant dense<0.000000e+00> : vector<2x8x8xf32>
    %98 = tpu.matmul %95, %96, %cst_34 {dimension_numbers = #tpu.dot_dimension_numbers<[2], [2], [1], [1], [0, 0, 0, 1, 1, 1], [0], [0]>} : vector<2x8x8xbf16>, vector<2x8x8xbf16>, vector<2x8x8xf32> -> vector<2x8x8xf32>
    "tpu.trace_stop"() : () -> ()
    %cst_35 = arith.constant dense<0xFF800000> : vector<2x8xf32>
    %99 = vector.multi_reduction <maximumf>, %98, %cst_35 [2] : vector<2x8x8xf32> to vector<2x8xf32>
    %100 = vector.shape_cast %99 : vector<2x8xf32> to vector<2x8x1xf32>
    %101 = vector.broadcast %100 : vector<2x8x1xf32> to vector<2x8x8xf32>
    %102 = arith.subf %98, %101 : vector<2x8x8xf32>
    %103 = math.exp %102 : vector<2x8x8xf32>
    %cst_36 = arith.constant dense<0.000000e+00> : vector<2x8xf32>
    %104 = vector.multi_reduction <add>, %103, %cst_36 [2] : vector<2x8x8xf32> to vector<2x8xf32>
    %105 = vector.shape_cast %104 : vector<2x8xf32> to vector<2x8x1xf32>
    %106 = tpu.reciprocal %105 {approx = true} : vector<2x8x1xf32> -> vector<2x8x1xf32>
    %107 = vector.broadcast %106 : vector<2x8x1xf32> to vector<2x8x8xf32>
    %108 = arith.mulf %103, %107 : vector<2x8x8xf32>
    %109 = arith.truncf %108 : vector<2x8x8xf32> to vector<2x8x8xbf16>
    "tpu.trace_start"() <{level = 10 : i32, message = "bqk,bkd->bqd"}> : () -> ()
    %cst_37 = arith.constant dense<0.000000e+00> : vector<2x8x8xf32>
    %110 = tpu.matmul %109, %97, %cst_37 {dimension_numbers = #tpu.dot_dimension_numbers<[2], [1], [1], [2], [0, 0, 0, 1, 1, 2], [0], [0]>} : vector<2x8x8xbf16>, vector<2x8x8xbf16>, vector<2x8x8xf32> -> vector<2x8x8xf32>
    "tpu.trace_stop"() : () -> ()
    %111 = tpu.concatenate %62, %78, %94, %110 in 2 : vector<2x8x8xf32>, vector<2x8x8xf32>, vector<2x8x8xf32>, vector<2x8x8xf32> -> vector<2x8x32xf32>
    %112 = vector.shape_cast %111 : vector<2x8x32xf32> to vector<16x32xf32>
    %c0_38 = arith.constant 0 : index
    %c0_39 = arith.constant 0 : index
    %c0_40 = arith.constant 0 : index
    %113 = vector.load %arg7[%c0_38, %c0_39, %c0_40] : memref<1x32x32xbf16, #tpu.memory_space<vmem>>, vector<1x32x32xbf16>
    %114 = vector.shape_cast %113 : vector<1x32x32xbf16> to vector<32x32xbf16>
    %115 = arith.truncf %112 : vector<16x32xf32> to vector<16x32xbf16>
    %cst_41 = arith.constant dense<0.000000e+00> : vector<16x32xf32>
    %116 = tpu.matmul %115, %114, %cst_41 {dimension_numbers = #tpu.dot_dimension_numbers<[1], [0], [0], [1], [0, 0, 1, 1], [], []>} : vector<16x32xbf16>, vector<32x32xbf16>, vector<16x32xf32> -> vector<16x32xf32>
    %117 = vector.broadcast %10 : vector<1x32xf32> to vector<16x32xf32>
    %118 = arith.addf %116, %117 : vector<16x32xf32>
    %119 = arith.addf %3, %118 : vector<16x32xf32>
    %cst_42 = arith.constant dense<0.000000e+00> : vector<16xf32>
    %120 = vector.multi_reduction <add>, %119, %cst_42 [1] : vector<16x32xf32> to vector<16xf32>
    %121 = vector.shape_cast %120 : vector<16xf32> to vector<16x1xf32>
    %cst_43 = arith.constant 3.200000e+01 : f32
    %122 = vector.broadcast %cst_43 : f32 to vector<16x1xf32>
    %123 = arith.divf %121, %122 : vector<16x1xf32>
    %124 = vector.broadcast %123 : vector<16x1xf32> to vector<16x32xf32>
    %125 = arith.subf %119, %124 : vector<16x32xf32>
    %126 = arith.mulf %125, %125 : vector<16x32xf32>
    %cst_44 = arith.constant dense<0.000000e+00> : vector<16xf32>
    %127 = vector.multi_reduction <add>, %126, %cst_44 [1] : vector<16x32xf32> to vector<16xf32>
    %128 = vector.shape_cast %127 : vector<16xf32> to vector<16x1xf32>
    %cst_45 = arith.constant 3.200000e+01 : f32
    %129 = vector.broadcast %cst_45 : f32 to vector<16x1xf32>
    %130 = arith.divf %128, %129 : vector<16x1xf32>
    %131 = vector.broadcast %123 : vector<16x1xf32> to vector<16x32xf32>
    %132 = arith.subf %119, %131 : vector<16x32xf32>
    %cst_46 = arith.constant 9.99999974E-6 : f32
    %133 = vector.broadcast %cst_46 : f32 to vector<16x1xf32>
    %134 = arith.addf %130, %133 : vector<16x1xf32>
    %135 = math.rsqrt %134 : vector<16x1xf32>
    %136 = vector.broadcast %135 : vector<16x1xf32> to vector<16x32xf32>
    %137 = arith.mulf %132, %136 : vector<16x32xf32>
    %138 = vector.broadcast %16 : vector<1x32xf32> to vector<16x32xf32>
    %139 = arith.mulf %137, %138 : vector<16x32xf32>
    %140 = vector.broadcast %17 : vector<1x32xf32> to vector<16x32xf32>
    %141 = arith.addf %139, %140 : vector<16x32xf32>
    %142 = arith.addf %141, %4 : vector<16x32xf32>
    %c0_47 = arith.constant 0 : index
    %c0_48 = arith.constant 0 : index
    %c0_49 = arith.constant 0 : index
    %143 = vector.load %arg8[%c0_47, %c0_48, %c0_49] : memref<1x32x32xbf16, #tpu.memory_space<vmem>>, vector<1x32x32xbf16>
    %144 = vector.shape_cast %143 : vector<1x32x32xbf16> to vector<32x32xbf16>
    %145 = arith.truncf %142 : vector<16x32xf32> to vector<16x32xbf16>
    %cst_50 = arith.constant dense<0.000000e+00> : vector<16x32xf32>
    %146 = tpu.matmul %145, %144, %cst_50 {dimension_numbers = #tpu.dot_dimension_numbers<[1], [0], [0], [1], [0, 0, 1, 1], [], []>} : vector<16x32xbf16>, vector<32x32xbf16>, vector<16x32xf32> -> vector<16x32xf32>
    %147 = vector.broadcast %11 : vector<1x32xf32> to vector<16x32xf32>
    %148 = arith.addf %146, %147 : vector<16x32xf32>
    %c0_51 = arith.constant 0 : index
    %c0_52 = arith.constant 0 : index
    %c0_53 = arith.constant 0 : index
    %149 = vector.load %arg9[%c0_51, %c0_52, %c0_53] : memref<1x32x32xbf16, #tpu.memory_space<vmem>>, vector<1x32x32xbf16>
    %150 = vector.shape_cast %149 : vector<1x32x32xbf16> to vector<32x32xbf16>
    %151 = arith.truncf %5 : vector<32x32xf32> to vector<32x32xbf16>
    %cst_54 = arith.constant dense<0.000000e+00> : vector<32x32xf32>
    %152 = tpu.matmul %151, %150, %cst_54 {dimension_numbers = #tpu.dot_dimension_numbers<[1], [0], [0], [1], [0, 0, 1, 1], [], []>} : vector<32x32xbf16>, vector<32x32xbf16>, vector<32x32xf32> -> vector<32x32xf32>
    %153 = vector.broadcast %12 : vector<1x32xf32> to vector<32x32xf32>
    %154 = arith.addf %152, %153 : vector<32x32xf32>
    %c0_55 = arith.constant 0 : index
    %c0_56 = arith.constant 0 : index
    %c0_57 = arith.constant 0 : index
    %155 = vector.load %arg10[%c0_55, %c0_56, %c0_57] : memref<1x32x32xbf16, #tpu.memory_space<vmem>>, vector<1x32x32xbf16>
    %156 = vector.shape_cast %155 : vector<1x32x32xbf16> to vector<32x32xbf16>
    %157 = arith.truncf %6 : vector<32x32xf32> to vector<32x32xbf16>
    %cst_58 = arith.constant dense<0.000000e+00> : vector<32x32xf32>
    %158 = tpu.matmul %157, %156, %cst_58 {dimension_numbers = #tpu.dot_dimension_numbers<[1], [0], [0], [1], [0, 0, 1, 1], [], []>} : vector<32x32xbf16>, vector<32x32xbf16>, vector<32x32xf32> -> vector<32x32xf32>
    %159 = vector.broadcast %13 : vector<1x32xf32> to vector<32x32xf32>
    %160 = arith.addf %158, %159 : vector<32x32xf32>
    %cst_59 = arith.constant 0.353553385 : f32
    %161 = vector.broadcast %cst_59 : f32 to vector<16x32xf32>
    %162 = arith.mulf %148, %161 : vector<16x32xf32>
    %163 = arith.truncf %162 : vector<16x32xf32> to vector<16x32xbf16>
    %164 = vector.shape_cast %163 : vector<16x32xbf16> to vector<2x8x32xbf16>
    %165 = arith.truncf %154 : vector<32x32xf32> to vector<32x32xbf16>
    %166 = vector.shape_cast %165 : vector<32x32xbf16> to vector<2x16x32xbf16>
    %167 = arith.truncf %160 : vector<32x32xf32> to vector<32x32xbf16>
    %168 = vector.shape_cast %167 : vector<32x32xbf16> to vector<2x16x32xbf16>
    %169 = vector.extract_strided_slice %164 {offsets = [0, 0, 0], sizes = [2, 8, 8], strides = [1, 1, 1]} : vector<2x8x32xbf16> to vector<2x8x8xbf16>
    %170 = vector.extract_strided_slice %166 {offsets = [0, 0, 0], sizes = [2, 16, 8], strides = [1, 1, 1]} : vector<2x16x32xbf16> to vector<2x16x8xbf16>
    %171 = vector.extract_strided_slice %168 {offsets = [0, 0, 0], sizes = [2, 16, 8], strides = [1, 1, 1]} : vector<2x16x32xbf16> to vector<2x16x8xbf16>
    "tpu.trace_start"() <{level = 10 : i32, message = "bqd,bkd->bqk"}> : () -> ()
    %cst_60 = arith.constant dense<0.000000e+00> : vector<2x8x16xf32>
    %172 = tpu.matmul %169, %170, %cst_60 {dimension_numbers = #tpu.dot_dimension_numbers<[2], [2], [1], [1], [0, 0, 0, 1, 1, 1], [0], [0]>} : vector<2x8x8xbf16>, vector<2x16x8xbf16>, vector<2x8x16xf32> -> vector<2x8x16xf32>
    "tpu.trace_stop"() : () -> ()
    %cst_61 = arith.constant dense<0xFF800000> : vector<2x8xf32>
    %173 = vector.multi_reduction <maximumf>, %172, %cst_61 [2] : vector<2x8x16xf32> to vector<2x8xf32>
    %174 = vector.shape_cast %173 : vector<2x8xf32> to vector<2x8x1xf32>
    %175 = vector.broadcast %174 : vector<2x8x1xf32> to vector<2x8x16xf32>
    %176 = arith.subf %172, %175 : vector<2x8x16xf32>
    %177 = math.exp %176 : vector<2x8x16xf32>
    %cst_62 = arith.constant dense<0.000000e+00> : vector<2x8xf32>
    %178 = vector.multi_reduction <add>, %177, %cst_62 [2] : vector<2x8x16xf32> to vector<2x8xf32>
    %179 = vector.shape_cast %178 : vector<2x8xf32> to vector<2x8x1xf32>
    %180 = tpu.reciprocal %179 {approx = true} : vector<2x8x1xf32> -> vector<2x8x1xf32>
    %181 = vector.broadcast %180 : vector<2x8x1xf32> to vector<2x8x16xf32>
    %182 = arith.mulf %177, %181 : vector<2x8x16xf32>
    %183 = arith.truncf %182 : vector<2x8x16xf32> to vector<2x8x16xbf16>
    "tpu.trace_start"() <{level = 10 : i32, message = "bqk,bkd->bqd"}> : () -> ()
    %cst_63 = arith.constant dense<0.000000e+00> : vector<2x8x8xf32>
    %184 = tpu.matmul %183, %171, %cst_63 {dimension_numbers = #tpu.dot_dimension_numbers<[2], [1], [1], [2], [0, 0, 0, 1, 1, 2], [0], [0]>} : vector<2x8x16xbf16>, vector<2x16x8xbf16>, vector<2x8x8xf32> -> vector<2x8x8xf32>
    "tpu.trace_stop"() : () -> ()
    %185 = vector.extract_strided_slice %164 {offsets = [0, 0, 8], sizes = [2, 8, 8], strides = [1, 1, 1]} : vector<2x8x32xbf16> to vector<2x8x8xbf16>
    %186 = vector.extract_strided_slice %166 {offsets = [0, 0, 8], sizes = [2, 16, 8], strides = [1, 1, 1]} : vector<2x16x32xbf16> to vector<2x16x8xbf16>
    %187 = vector.extract_strided_slice %168 {offsets = [0, 0, 8], sizes = [2, 16, 8], strides = [1, 1, 1]} : vector<2x16x32xbf16> to vector<2x16x8xbf16>
    "tpu.trace_start"() <{level = 10 : i32, message = "bqd,bkd->bqk"}> : () -> ()
    %cst_64 = arith.constant dense<0.000000e+00> : vector<2x8x16xf32>
    %188 = tpu.matmul %185, %186, %cst_64 {dimension_numbers = #tpu.dot_dimension_numbers<[2], [2], [1], [1], [0, 0, 0, 1, 1, 1], [0], [0]>} : vector<2x8x8xbf16>, vector<2x16x8xbf16>, vector<2x8x16xf32> -> vector<2x8x16xf32>
    "tpu.trace_stop"() : () -> ()
    %cst_65 = arith.constant dense<0xFF800000> : vector<2x8xf32>
    %189 = vector.multi_reduction <maximumf>, %188, %cst_65 [2] : vector<2x8x16xf32> to vector<2x8xf32>
    %190 = vector.shape_cast %189 : vector<2x8xf32> to vector<2x8x1xf32>
    %191 = vector.broadcast %190 : vector<2x8x1xf32> to vector<2x8x16xf32>
    %192 = arith.subf %188, %191 : vector<2x8x16xf32>
    %193 = math.exp %192 : vector<2x8x16xf32>
    %cst_66 = arith.constant dense<0.000000e+00> : vector<2x8xf32>
    %194 = vector.multi_reduction <add>, %193, %cst_66 [2] : vector<2x8x16xf32> to vector<2x8xf32>
    %195 = vector.shape_cast %194 : vector<2x8xf32> to vector<2x8x1xf32>
    %196 = tpu.reciprocal %195 {approx = true} : vector<2x8x1xf32> -> vector<2x8x1xf32>
    %197 = vector.broadcast %196 : vector<2x8x1xf32> to vector<2x8x16xf32>
    %198 = arith.mulf %193, %197 : vector<2x8x16xf32>
    %199 = arith.truncf %198 : vector<2x8x16xf32> to vector<2x8x16xbf16>
    "tpu.trace_start"() <{level = 10 : i32, message = "bqk,bkd->bqd"}> : () -> ()
    %cst_67 = arith.constant dense<0.000000e+00> : vector<2x8x8xf32>
    %200 = tpu.matmul %199, %187, %cst_67 {dimension_numbers = #tpu.dot_dimension_numbers<[2], [1], [1], [2], [0, 0, 0, 1, 1, 2], [0], [0]>} : vector<2x8x16xbf16>, vector<2x16x8xbf16>, vector<2x8x8xf32> -> vector<2x8x8xf32>
    "tpu.trace_stop"() : () -> ()
    %201 = vector.extract_strided_slice %164 {offsets = [0, 0, 16], sizes = [2, 8, 8], strides = [1, 1, 1]} : vector<2x8x32xbf16> to vector<2x8x8xbf16>
    %202 = vector.extract_strided_slice %166 {offsets = [0, 0, 16], sizes = [2, 16, 8], strides = [1, 1, 1]} : vector<2x16x32xbf16> to vector<2x16x8xbf16>
    %203 = vector.extract_strided_slice %168 {offsets = [0, 0, 16], sizes = [2, 16, 8], strides = [1, 1, 1]} : vector<2x16x32xbf16> to vector<2x16x8xbf16>
    "tpu.trace_start"() <{level = 10 : i32, message = "bqd,bkd->bqk"}> : () -> ()
    %cst_68 = arith.constant dense<0.000000e+00> : vector<2x8x16xf32>
    %204 = tpu.matmul %201, %202, %cst_68 {dimension_numbers = #tpu.dot_dimension_numbers<[2], [2], [1], [1], [0, 0, 0, 1, 1, 1], [0], [0]>} : vector<2x8x8xbf16>, vector<2x16x8xbf16>, vector<2x8x16xf32> -> vector<2x8x16xf32>
    "tpu.trace_stop"() : () -> ()
    %cst_69 = arith.constant dense<0xFF800000> : vector<2x8xf32>
    %205 = vector.multi_reduction <maximumf>, %204, %cst_69 [2] : vector<2x8x16xf32> to vector<2x8xf32>
    %206 = vector.shape_cast %205 : vector<2x8xf32> to vector<2x8x1xf32>
    %207 = vector.broadcast %206 : vector<2x8x1xf32> to vector<2x8x16xf32>
    %208 = arith.subf %204, %207 : vector<2x8x16xf32>
    %209 = math.exp %208 : vector<2x8x16xf32>
    %cst_70 = arith.constant dense<0.000000e+00> : vector<2x8xf32>
    %210 = vector.multi_reduction <add>, %209, %cst_70 [2] : vector<2x8x16xf32> to vector<2x8xf32>
    %211 = vector.shape_cast %210 : vector<2x8xf32> to vector<2x8x1xf32>
    %212 = tpu.reciprocal %211 {approx = true} : vector<2x8x1xf32> -> vector<2x8x1xf32>
    %213 = vector.broadcast %212 : vector<2x8x1xf32> to vector<2x8x16xf32>
    %214 = arith.mulf %209, %213 : vector<2x8x16xf32>
    %215 = arith.truncf %214 : vector<2x8x16xf32> to vector<2x8x16xbf16>
    "tpu.trace_start"() <{level = 10 : i32, message = "bqk,bkd->bqd"}> : () -> ()
    %cst_71 = arith.constant dense<0.000000e+00> : vector<2x8x8xf32>
    %216 = tpu.matmul %215, %203, %cst_71 {dimension_numbers = #tpu.dot_dimension_numbers<[2], [1], [1], [2], [0, 0, 0, 1, 1, 2], [0], [0]>} : vector<2x8x16xbf16>, vector<2x16x8xbf16>, vector<2x8x8xf32> -> vector<2x8x8xf32>
    "tpu.trace_stop"() : () -> ()
    %217 = vector.extract_strided_slice %164 {offsets = [0, 0, 24], sizes = [2, 8, 8], strides = [1, 1, 1]} : vector<2x8x32xbf16> to vector<2x8x8xbf16>
    %218 = vector.extract_strided_slice %166 {offsets = [0, 0, 24], sizes = [2, 16, 8], strides = [1, 1, 1]} : vector<2x16x32xbf16> to vector<2x16x8xbf16>
    %219 = vector.extract_strided_slice %168 {offsets = [0, 0, 24], sizes = [2, 16, 8], strides = [1, 1, 1]} : vector<2x16x32xbf16> to vector<2x16x8xbf16>
    "tpu.trace_start"() <{level = 10 : i32, message = "bqd,bkd->bqk"}> : () -> ()
    %cst_72 = arith.constant dense<0.000000e+00> : vector<2x8x16xf32>
    %220 = tpu.matmul %217, %218, %cst_72 {dimension_numbers = #tpu.dot_dimension_numbers<[2], [2], [1], [1], [0, 0, 0, 1, 1, 1], [0], [0]>} : vector<2x8x8xbf16>, vector<2x16x8xbf16>, vector<2x8x16xf32> -> vector<2x8x16xf32>
    "tpu.trace_stop"() : () -> ()
    %cst_73 = arith.constant dense<0xFF800000> : vector<2x8xf32>
    %221 = vector.multi_reduction <maximumf>, %220, %cst_73 [2] : vector<2x8x16xf32> to vector<2x8xf32>
    %222 = vector.shape_cast %221 : vector<2x8xf32> to vector<2x8x1xf32>
    %223 = vector.broadcast %222 : vector<2x8x1xf32> to vector<2x8x16xf32>
    %224 = arith.subf %220, %223 : vector<2x8x16xf32>
    %225 = math.exp %224 : vector<2x8x16xf32>
    %cst_74 = arith.constant dense<0.000000e+00> : vector<2x8xf32>
    %226 = vector.multi_reduction <add>, %225, %cst_74 [2] : vector<2x8x16xf32> to vector<2x8xf32>
    %227 = vector.shape_cast %226 : vector<2x8xf32> to vector<2x8x1xf32>
    %228 = tpu.reciprocal %227 {approx = true} : vector<2x8x1xf32> -> vector<2x8x1xf32>
    %229 = vector.broadcast %228 : vector<2x8x1xf32> to vector<2x8x16xf32>
    %230 = arith.mulf %225, %229 : vector<2x8x16xf32>
    %231 = arith.truncf %230 : vector<2x8x16xf32> to vector<2x8x16xbf16>
    "tpu.trace_start"() <{level = 10 : i32, message = "bqk,bkd->bqd"}> : () -> ()
    %cst_75 = arith.constant dense<0.000000e+00> : vector<2x8x8xf32>
    %232 = tpu.matmul %231, %219, %cst_75 {dimension_numbers = #tpu.dot_dimension_numbers<[2], [1], [1], [2], [0, 0, 0, 1, 1, 2], [0], [0]>} : vector<2x8x16xbf16>, vector<2x16x8xbf16>, vector<2x8x8xf32> -> vector<2x8x8xf32>
    "tpu.trace_stop"() : () -> ()
    %233 = tpu.concatenate %184, %200, %216, %232 in 2 : vector<2x8x8xf32>, vector<2x8x8xf32>, vector<2x8x8xf32>, vector<2x8x8xf32> -> vector<2x8x32xf32>
    %234 = vector.shape_cast %233 : vector<2x8x32xf32> to vector<16x32xf32>
    %c0_76 = arith.constant 0 : index
    %c0_77 = arith.constant 0 : index
    %c0_78 = arith.constant 0 : index
    %235 = vector.load %arg11[%c0_76, %c0_77, %c0_78] : memref<1x32x32xbf16, #tpu.memory_space<vmem>>, vector<1x32x32xbf16>
    %236 = vector.shape_cast %235 : vector<1x32x32xbf16> to vector<32x32xbf16>
    %237 = arith.truncf %234 : vector<16x32xf32> to vector<16x32xbf16>
    %cst_79 = arith.constant dense<0.000000e+00> : vector<16x32xf32>
    %238 = tpu.matmul %237, %236, %cst_79 {dimension_numbers = #tpu.dot_dimension_numbers<[1], [0], [0], [1], [0, 0, 1, 1], [], []>} : vector<16x32xbf16>, vector<32x32xbf16>, vector<16x32xf32> -> vector<16x32xf32>
    %239 = vector.broadcast %14 : vector<1x32xf32> to vector<16x32xf32>
    %240 = arith.addf %238, %239 : vector<16x32xf32>
    %241 = arith.addf %141, %240 : vector<16x32xf32>
    %cst_80 = arith.constant dense<0.000000e+00> : vector<16xf32>
    %242 = vector.multi_reduction <add>, %241, %cst_80 [1] : vector<16x32xf32> to vector<16xf32>
    %243 = vector.shape_cast %242 : vector<16xf32> to vector<16x1xf32>
    %cst_81 = arith.constant 3.200000e+01 : f32
    %244 = vector.broadcast %cst_81 : f32 to vector<16x1xf32>
    %245 = arith.divf %243, %244 : vector<16x1xf32>
    %246 = vector.broadcast %245 : vector<16x1xf32> to vector<16x32xf32>
    %247 = arith.subf %241, %246 : vector<16x32xf32>
    %248 = arith.mulf %247, %247 : vector<16x32xf32>
    %cst_82 = arith.constant dense<0.000000e+00> : vector<16xf32>
    %249 = vector.multi_reduction <add>, %248, %cst_82 [1] : vector<16x32xf32> to vector<16xf32>
    %250 = vector.shape_cast %249 : vector<16xf32> to vector<16x1xf32>
    %cst_83 = arith.constant 3.200000e+01 : f32
    %251 = vector.broadcast %cst_83 : f32 to vector<16x1xf32>
    %252 = arith.divf %250, %251 : vector<16x1xf32>
    %253 = vector.broadcast %245 : vector<16x1xf32> to vector<16x32xf32>
    %254 = arith.subf %241, %253 : vector<16x32xf32>
    %cst_84 = arith.constant 9.99999974E-6 : f32
    %255 = vector.broadcast %cst_84 : f32 to vector<16x1xf32>
    %256 = arith.addf %252, %255 : vector<16x1xf32>
    %257 = math.rsqrt %256 : vector<16x1xf32>
    %258 = vector.broadcast %257 : vector<16x1xf32> to vector<16x32xf32>
    %259 = arith.mulf %254, %258 : vector<16x32xf32>
    %260 = vector.broadcast %18 : vector<1x32xf32> to vector<16x32xf32>
    %261 = arith.mulf %259, %260 : vector<16x32xf32>
    %262 = vector.broadcast %19 : vector<1x32xf32> to vector<16x32xf32>
    %263 = arith.addf %261, %262 : vector<16x32xf32>
    %c0_85 = arith.constant 0 : index
    %c0_86 = arith.constant 0 : index
    %c0_87 = arith.constant 0 : index
    %264 = vector.load %arg12[%c0_85, %c0_86, %c0_87] : memref<1x32x64xbf16, #tpu.memory_space<vmem>>, vector<1x32x64xbf16>
    %265 = vector.shape_cast %264 : vector<1x32x64xbf16> to vector<32x64xbf16>
    %266 = arith.truncf %263 : vector<16x32xf32> to vector<16x32xbf16>
    %cst_88 = arith.constant dense<0.000000e+00> : vector<16x64xf32>
    %267 = tpu.matmul %266, %265, %cst_88 {dimension_numbers = #tpu.dot_dimension_numbers<[1], [0], [0], [1], [0, 0, 1, 1], [], []>} : vector<16x32xbf16>, vector<32x64xbf16>, vector<16x64xf32> -> vector<16x64xf32>
    %c0_89 = arith.constant 0 : index
    %c0_90 = arith.constant 0 : index
    %c0_91 = arith.constant 0 : index
    %268 = vector.load %arg16[%c0_89, %c0_90, %c0_91] : memref<1x1x64xf32, #tpu.memory_space<vmem>>, vector<1x1x64xf32>
    %269 = vector.shape_cast %268 : vector<1x1x64xf32> to vector<1x64xf32>
    %270 = vector.broadcast %269 : vector<1x64xf32> to vector<16x64xf32>
    %271 = arith.addf %267, %270 : vector<16x64xf32>
    %cst_92 = arith.constant 0.000000e+00 : f32
    %272 = vector.broadcast %cst_92 : f32 to vector<16x64xf32>
    %273 = arith.maximumf %271, %272 : vector<16x64xf32>
    %c0_93 = arith.constant 0 : index
    %c0_94 = arith.constant 0 : index
    %c0_95 = arith.constant 0 : index
    %274 = vector.load %arg13[%c0_93, %c0_94, %c0_95] : memref<1x64x32xbf16, #tpu.memory_space<vmem>>, vector<1x64x32xbf16>
    %275 = vector.shape_cast %274 : vector<1x64x32xbf16> to vector<64x32xbf16>
    %276 = arith.truncf %273 : vector<16x64xf32> to vector<16x64xbf16>
    %cst_96 = arith.constant dense<0.000000e+00> : vector<16x32xf32>
    %277 = tpu.matmul %276, %275, %cst_96 {dimension_numbers = #tpu.dot_dimension_numbers<[1], [0], [0], [1], [0, 0, 1, 1], [], []>} : vector<16x64xbf16>, vector<64x32xbf16>, vector<16x32xf32> -> vector<16x32xf32>
    %278 = vector.broadcast %15 : vector<1x32xf32> to vector<16x32xf32>
    %279 = arith.addf %277, %278 : vector<16x32xf32>
    %280 = arith.addf %263, %279 : vector<16x32xf32>
    %cst_97 = arith.constant dense<0.000000e+00> : vector<16xf32>
    %281 = vector.multi_reduction <add>, %280, %cst_97 [1] : vector<16x32xf32> to vector<16xf32>
    %282 = vector.shape_cast %281 : vector<16xf32> to vector<16x1xf32>
    %cst_98 = arith.constant 3.200000e+01 : f32
    %283 = vector.broadcast %cst_98 : f32 to vector<16x1xf32>
    %284 = arith.divf %282, %283 : vector<16x1xf32>
    %285 = vector.broadcast %284 : vector<16x1xf32> to vector<16x32xf32>
    %286 = arith.subf %280, %285 : vector<16x32xf32>
    %287 = arith.mulf %286, %286 : vector<16x32xf32>
    %cst_99 = arith.constant dense<0.000000e+00> : vector<16xf32>
    %288 = vector.multi_reduction <add>, %287, %cst_99 [1] : vector<16x32xf32> to vector<16xf32>
    %289 = vector.shape_cast %288 : vector<16xf32> to vector<16x1xf32>
    %cst_100 = arith.constant 3.200000e+01 : f32
    %290 = vector.broadcast %cst_100 : f32 to vector<16x1xf32>
    %291 = arith.divf %289, %290 : vector<16x1xf32>
    %292 = vector.broadcast %284 : vector<16x1xf32> to vector<16x32xf32>
    %293 = arith.subf %280, %292 : vector<16x32xf32>
    %cst_101 = arith.constant 9.99999974E-6 : f32
    %294 = vector.broadcast %cst_101 : f32 to vector<16x1xf32>
    %295 = arith.addf %291, %294 : vector<16x1xf32>
    %296 = math.rsqrt %295 : vector<16x1xf32>
    %297 = vector.broadcast %296 : vector<16x1xf32> to vector<16x32xf32>
    %298 = arith.mulf %293, %297 : vector<16x32xf32>
    %299 = vector.broadcast %20 : vector<1x32xf32> to vector<16x32xf32>
    %300 = arith.mulf %298, %299 : vector<16x32xf32>
    %301 = vector.broadcast %21 : vector<1x32xf32> to vector<16x32xf32>
    %302 = arith.addf %300, %301 : vector<16x32xf32>
    %c0_102 = arith.constant 0 : index
    %c0_103 = arith.constant 0 : index
    %303 = vector.load %arg17[%c0_102, %c0_103] : memref<16x32xf32, #tpu.memory_space<vmem>>, vector<16x32xf32>
    tpu.vector_store %arg17[%c0_102, %c0_103], %302 {strides = array<i32>} : memref<16x32xf32, #tpu.memory_space<vmem>>, vector<16x32xf32>,
    return
  }
  func.func @transform_0(%arg0: i32) -> (i32, i32) {
    %c0_i32 = arith.constant 0 : i32
    %c0_i32_0 = arith.constant 0 : i32
    %c0_i32_1 = arith.constant 0 : i32
    return %c0_i32, %c0_i32_0 : i32, i32
  }
  func.func @transform_1(%arg0: i32) -> (i32, i32) {
    %c0_i32 = arith.constant 0 : i32
    %c0_i32_0 = arith.constant 0 : i32
    %c0_i32_1 = arith.constant 0 : i32
    return %c0_i32, %c0_i32_0 : i32, i32
  }
  func.func @transform_2(%arg0: i32) -> (i32, i32) {
    %c0_i32 = arith.constant 0 : i32
    %c0_i32_0 = arith.constant 0 : i32
    %c0_i32_1 = arith.constant 0 : i32
    return %c0_i32, %c0_i32_0 : i32, i32
  }
  func.func @transform_3(%arg0: i32) -> (i32, i32) {
    %c0_i32 = arith.constant 0 : i32
    %c0_i32_0 = arith.constant 0 : i32
    %c0_i32_1 = arith.constant 0 : i32
    return %c0_i32, %c0_i32_0 : i32, i32
  }
  func.func @transform_4(%arg0: i32) -> (i32, i32, i32) {
    %c0_i32 = arith.constant 0 : i32
    %c0_i32_0 = arith.constant 0 : i32
    %c0_i32_1 = arith.constant 0 : i32
    return %arg0, %c0_i32, %c0_i32_0 : i32, i32, i32
  }
  func.func @transform_5(%arg0: i32) -> (i32, i32, i32) {
    %c0_i32 = arith.constant 0 : i32
    %c0_i32_0 = arith.constant 0 : i32
    %c0_i32_1 = arith.constant 0 : i32
    return %arg0, %c0_i32, %c0_i32_0 : i32, i32, i32
  }
  func.func @transform_6(%arg0: i32) -> (i32, i32, i32) {
    %c0_i32 = arith.constant 0 : i32
    %c0_i32_0 = arith.constant 0 : i32
    %c0_i32_1 = arith.constant 0 : i32
    return %arg0, %c0_i32, %c0_i32_0 : i32, i32, i32
  }
  func.func @transform_7(%arg0: i32) -> (i32, i32, i32) {
    %c0_i32 = arith.constant 0 : i32
    %c0_i32_0 = arith.constant 0 : i32
    %c0_i32_1 = arith.constant 0 : i32
    return %arg0, %c0_i32, %c0_i32_0 : i32, i32, i32
  }
  func.func @transform_8(%arg0: i32) -> (i32, i32, i32) {
    %c0_i32 = arith.constant 0 : i32
    %c0_i32_0 = arith.constant 0 : i32
    %c0_i32_1 = arith.constant 0 : i32
    return %arg0, %c0_i32, %c0_i32_0 : i32, i32, i32
  }
  func.func @transform_9(%arg0: i32) -> (i32, i32, i32) {
    %c0_i32 = arith.constant 0 : i32
    %c0_i32_0 = arith.constant 0 : i32
    %c0_i32_1 = arith.constant 0 : i32
    return %arg0, %c0_i32, %c0_i32_0 : i32, i32, i32
  }
  func.func @transform_10(%arg0: i32) -> (i32, i32, i32) {
    %c0_i32 = arith.constant 0 : i32
    %c0_i32_0 = arith.constant 0 : i32
    %c0_i32_1 = arith.constant 0 : i32
    return %arg0, %c0_i32, %c0_i32_0 : i32, i32, i32
  }
  func.func @transform_11(%arg0: i32) -> (i32, i32, i32) {
    %c0_i32 = arith.constant 0 : i32
    %c0_i32_0 = arith.constant 0 : i32
    %c0_i32_1 = arith.constant 0 : i32
    return %arg0, %c0_i32, %c0_i32_0 : i32, i32, i32
  }
  func.func @transform_12(%arg0: i32) -> (i32, i32, i32) {
    %c0_i32 = arith.constant 0 : i32
    %c0_i32_0 = arith.constant 0 : i32
    %c0_i32_1 = arith.constant 0 : i32
    return %arg0, %c0_i32, %c0_i32_0 : i32, i32, i32
  }
  func.func @transform_13(%arg0: i32) -> (i32, i32, i32) {
    %c0_i32 = arith.constant 0 : i32
    %c0_i32_0 = arith.constant 0 : i32
    %c0_i32_1 = arith.constant 0 : i32
    return %arg0, %c0_i32, %c0_i32_0 : i32, i32, i32
  }
  func.func @transform_14(%arg0: i32) -> (i32, i32, i32) {
    %c0_i32 = arith.constant 0 : i32
    %c0_i32_0 = arith.constant 0 : i32
    %c0_i32_1 = arith.constant 0 : i32
    return %arg0, %c0_i32, %c0_i32_0 : i32, i32, i32
  }
  func.func @transform_15(%arg0: i32) -> (i32, i32, i32) {
    %c0_i32 = arith.constant 0 : i32
    %c0_i32_0 = arith.constant 0 : i32
    %c0_i32_1 = arith.constant 0 : i32
    return %arg0, %c0_i32, %c0_i32_0 : i32, i32, i32
  }
  func.func @transform_16(%arg0: i32) -> (i32, i32) {
    %c0_i32 = arith.constant 0 : i32
    %c0_i32_0 = arith.constant 0 : i32
    %c0_i32_1 = arith.constant 0 : i32
    return %c0_i32, %c0_i32_0 : i32, i32
  }
}

</mosaic_0001>

<llo_original>
// kernel: tpu_custom_call.1
$region0: #{tpu_custom_call.1}
  #allocation0 [shape = 'u32[]', space=smem, size = 0x4, offset = 0x4, fixed_abs, tag = 'smem constant byte address 0x4 - core index']
  #allocation1 [shape = 'u32[72,128]{1,0:T(1,128)}', space=vmem, size = 0x9000, scoped, tag = 'internal scratch']
  %s0 = inlined_call_operand.hbm [shape: f32[16,32], index: 0, kind: input, shape index: {}]
  %s1 = inlined_call_operand.vmem [shape: f32[32,32], index: 1, kind: input, shape index: {}]
  %s2 = inlined_call_operand.vmem [shape: f32[32,32], index: 2, kind: input, shape index: {}]
  %s3 = inlined_call_operand.hbm [shape: f32[16,32], index: 3, kind: input, shape index: {}]
  %s4 = inlined_call_operand.vmem [shape: bf16[2,32,64], index: 4, kind: input, shape index: {}]
  %s5 = inlined_call_operand.hbm [shape: bf16[2,32,32], index: 5, kind: input, shape index: {}]
  %s6 = inlined_call_operand.hbm [shape: bf16[2,32,32], index: 6, kind: input, shape index: {}]
  %s7 = inlined_call_operand.hbm [shape: bf16[2,32,32], index: 7, kind: input, shape index: {}]
  %s8 = inlined_call_operand.vmem [shape: bf16[2,32,32], index: 8, kind: input, shape index: {}]
  %s9 = inlined_call_operand.hbm [shape: bf16[2,32,32], index: 9, kind: input, shape index: {}]
  %s10 = inlined_call_operand.hbm [shape: bf16[2,32,32], index: 10, kind: input, shape index: {}]
  %s11 = inlined_call_operand.hbm [shape: bf16[2,32,64], index: 11, kind: input, shape index: {}]
  %s12 = inlined_call_operand.vmem [shape: bf16[2,64,32], index: 12, kind: input, shape index: {}]
  %s13 = inlined_call_operand.vmem [shape: f32[2,1,64], index: 13, kind: input, shape index: {}]
  %s14 = inlined_call_operand.vmem [shape: f32[2,13,32], index: 14, kind: input, shape index: {}]
  %s15 = inlined_call_operand.vmem [shape: f32[2,1,64], index: 15, kind: input, shape index: {}]
  %s16 = inlined_call_operand.hbm [shape: f32[16,32], index: 16, kind: output, shape index: {}]
  %s17 = sld [smem:[#allocation0]]
  $region133: #{tpu_custom_call.1} parent=0
    _
  %s19 = ssub.s32 1, %s17
  %s20 = scalar_select 0, %s19, %s17
  $region1: #{tpu_custom_call.1} parent=0
    #allocation2 [shape = 'u8[8192]{0}', space=vmem, size = 0x2000, scoped, tag = 'input window, operand 0, single buffered']
    #allocation3 [shape = 's32[2]{0}', space=sflag, size = 0x8, scoped, tag = 'scoped memory for tpu_custom_call.1']
    #allocation4 [shape = 's32[2]{0}', space=sflag, size = 0x8, scoped, tag = 'scoped memory for tpu_custom_call.1']
    #allocation5 [shape = 'u8[8192]{0}', space=vmem, size = 0x2000, scoped, tag = 'input window, operand 3, single buffered']
    #allocation6 [shape = 's32[1]{0}', space=sflag, size = 0x4, scoped, tag = 'scoped memory for tpu_custom_call.1']
    #allocation7 [shape = 'u8[16384]{0}', space=vmem, size = 0x4000, scoped, tag = 'input window, operand 5']
    #allocation8 [shape = 'u8[16384]{0}', space=vmem, size = 0x4000, scoped, tag = 'input window, operand 6']
    #allocation9 [shape = 'u8[16384]{0}', space=vmem, size = 0x4000, scoped, tag = 'input window, operand 7']
    #allocation10 [shape = 'u8[16384]{0}', space=vmem, size = 0x4000, scoped, tag = 'input window, operand 9']
    #allocation11 [shape = 'u8[16384]{0}', space=vmem, size = 0x4000, scoped, tag = 'input window, operand 10']
    #allocation12 [shape = 'u8[16384]{0}', space=vmem, size = 0x4000, scoped, tag = 'input window, operand 11']
    #allocation13 [shape = 'u8[8192]{0}', space=vmem, size = 0x2000, scoped, tag = 'output window, operand 0, single buffered']
    %21 = vsyncpa [#allocation3], 0
    %22 = vsyncpa [#allocation6], 0
    %23 = vsyncpa [#allocation4], 0
    loop: start=0, step=1, limit=4
    $region2: #{tpu_custom_call.1} parent=1 // loop_pre_header
      _
    $region3: #{tpu_custom_call.1} parent=1 // loop_header
      %s25 = sphi 0, %s29
      %p26 = scmp.ge.s32.totalorder %s25, 4
      %s33 = sphi 0, %s33
      %s35 = sphi 0, %s33
      %s36 = sphi 0, %s35
      %s50 = sphi 0, %s36
      %s54 = sphi 0, %s54
      %s56 = sphi 0, %s54
      %s57 = sphi 0, %s56
      %s71 = sphi 0, %s57
      %s75 = sphi 0, %s75
      %s77 = sphi 0, %s75
      %s78 = sphi 0, %s77
      %s92 = sphi 0, %s78
      %s96 = sphi 0, %s96
      %s98 = sphi 0, %s96
      %s99 = sphi 0, %s98
      %s113 = sphi 0, %s99
      %s119 = sphi 0, %s121
      %s122 = sphi 0, %s119
      %s123 = sphi 0, %s122
      %s139 = sphi 0, %s123
      %s145 = sphi 0, %s147
      %s148 = sphi 0, %s145
      %s149 = sphi 0, %s148
      %s165 = sphi 0, %s149
      %s171 = sphi 0, %s173
      %s174 = sphi 0, %s171
      %s175 = sphi 0, %s174
      %s191 = sphi 0, %s175
      %s197 = sphi 0, %s199
      %s200 = sphi 0, %s197
      %s201 = sphi 0, %s200
      %s217 = sphi 0, %s201
      %s223 = sphi 0, %s225
      %s226 = sphi 0, %s223
      %s227 = sphi 0, %s226
      %s243 = sphi 0, %s227
      %s249 = sphi 0, %s251
      %s252 = sphi 0, %s249
      %s253 = sphi 0, %s252
      %s269 = sphi 0, %s253
      %s275 = sphi 0, %s277
      %s278 = sphi 0, %s275
      %s279 = sphi 0, %s278
      %s295 = sphi 0, %s279
      %s301 = sphi 0, %s303
      %s304 = sphi 0, %s301
      %s305 = sphi 0, %s304
      %s321 = sphi 0, %s305
      %s327 = sphi 0, %s329
      %s330 = sphi 0, %s327
      %s331 = sphi 0, %s330
      %s347 = sphi 0, %s331
      %s353 = sphi 0, %s355
      %s356 = sphi 0, %s353
      %s357 = sphi 0, %s356
      %s373 = sphi 0, %s357
      %s379 = sphi 0, %s381
      %s382 = sphi 0, %s379
      %s383 = sphi 0, %s382
      %s399 = sphi 0, %s383
      %s405 = sphi 0, %s407
      %s408 = sphi 0, %s405
      %s409 = sphi 0, %s408
      %s425 = sphi 0, %s409
      %s429 = sphi 0, %s429
      %s431 = sphi 0, %s429
      %s432 = sphi 0, %s431
      %s446 = sphi 0, %s432
    $region4: #{tpu_custom_call.1} parent=1 // loop_header_branch
      %28 = sbr.rel (%p26) target = $region8
    $region5: #{tpu_custom_call.1} parent=1 // loop_body
      %s30 = ssub.s32 %s25, 1
      %s31 = ssub.s32 %s25, 2
      %s32 = sadd.s32 %s25, 1
      %s34 = sadd.s32 %s33, 1
      %p37 = scmp.eq.s32.totalorder %s25, 1
      %p38 = scmp.ne.s32.totalorder %s33, %s35
      %p39 = scmp.eq.s32.totalorder %s25, 0
      %p40 = por %p38, %p39
      %p41 = scmp.ne.s32.totalorder %s33, %s35
      %p42 = scmp.eq.s32.totalorder %s30, 1
      %p43 = por %p41, %p42
      %p44 = scmp.ne.s32.totalorder %s35, %s36
      %p45 = scmp.eq.s32.totalorder %s30, 0
      %p46 = por %p44, %p45
      %p47 = scmp.ne.s32.totalorder %s35, %s36
      %p48 = scmp.eq.s32.totalorder %s31, 1
      %p49 = por %p47, %p48
      %p51 = scmp.ne.s32.totalorder %s36, %s50
      %p52 = scmp.eq.s32.totalorder %s31, 0
      %p53 = por %p51, %p52
      %s55 = sadd.s32 %s54, 1
      %p58 = scmp.eq.s32.totalorder %s25, 1
      %p59 = scmp.ne.s32.totalorder %s54, %s56
      %p60 = scmp.eq.s32.totalorder %s25, 0
      %p61 = por %p59, %p60
      %p62 = scmp.ne.s32.totalorder %s54, %s56
      %p63 = scmp.eq.s32.totalorder %s30, 1
      %p64 = por %p62, %p63
      %p65 = scmp.ne.s32.totalorder %s56, %s57
      %p66 = scmp.eq.s32.totalorder %s30, 0
      %p67 = por %p65, %p66
      %p68 = scmp.ne.s32.totalorder %s56, %s57
      %p69 = scmp.eq.s32.totalorder %s31, 1
      %p70 = por %p68, %p69
      %p72 = scmp.ne.s32.totalorder %s57, %s71
      %p73 = scmp.eq.s32.totalorder %s31, 0
      %p74 = por %p72, %p73
      %s76 = sadd.s32 %s75, 1
      %p79 = scmp.eq.s32.totalorder %s25, 1
      %p80 = scmp.ne.s32.totalorder %s75, %s77
      %p81 = scmp.eq.s32.totalorder %s25, 0
      %p82 = por %p80, %p81
      %p83 = scmp.ne.s32.totalorder %s75, %s77
      %p84 = scmp.eq.s32.totalorder %s30, 1
      %p85 = por %p83, %p84
      %p86 = scmp.ne.s32.totalorder %s77, %s78
      %p87 = scmp.eq.s32.totalorder %s30, 0
      %p88 = por %p86, %p87
      %p89 = scmp.ne.s32.totalorder %s77, %s78
      %p90 = scmp.eq.s32.totalorder %s31, 1
      %p91 = por %p89, %p90
      %p93 = scmp.ne.s32.totalorder %s78, %s92
      %p94 = scmp.eq.s32.totalorder %s31, 0
      %p95 = por %p93, %p94
      %s97 = sadd.s32 %s96, 1
      %p100 = scmp.eq.s32.totalorder %s25, 1
      %p101 = scmp.ne.s32.totalorder %s96, %s98
      %p102 = scmp.eq.s32.totalorder %s25, 0
      %p103 = por %p101, %p102
      %p104 = scmp.ne.s32.totalorder %s96, %s98
      %p105 = scmp.eq.s32.totalorder %s30, 1
      %p106 = por %p104, %p105
      %p107 = scmp.ne.s32.totalorder %s98, %s99
      %p108 = scmp.eq.s32.totalorder %s30, 0
      %p109 = por %p107, %p108
      %p110 = scmp.ne.s32.totalorder %s98, %s99
      %p111 = scmp.eq.s32.totalorder %s31, 1
      %p112 = por %p110, %p111
      %p114 = scmp.ne.s32.totalorder %s99, %s113
      %p115 = scmp.eq.s32.totalorder %s31, 0
      %p116 = por %p114, %p115
      %s117 = ssub.s32 %s25, %s32
      %p118 = scmp.eq.s32.totalorder %s117, 0
      %s120 = sadd.s32 %s119, 1
      %s121 = scalar_select %p118, %s119, %s120
      %p124 = pneg %p118
      %p125 = scmp.eq.s32.totalorder %s25, 1
      %p126 = por %p124, %p125
      %p127 = scmp.ne.s32.totalorder %s119, %s122
      %p128 = scmp.eq.s32.totalorder %s25, 0
      %p129 = por %p127, %p128
      %p130 = scmp.ne.s32.totalorder %s119, %s122
      %p131 = scmp.eq.s32.totalorder %s30, 1
      %p132 = por %p130, %p131
      %p133 = scmp.ne.s32.totalorder %s122, %s123
      %p134 = scmp.eq.s32.totalorder %s30, 0
      %p135 = por %p133, %p134
      %p136 = scmp.ne.s32.totalorder %s122, %s123
      %p137 = scmp.eq.s32.totalorder %s31, 1
      %p138 = por %p136, %p137
      %p140 = scmp.ne.s32.totalorder %s123, %s139
      %p141 = scmp.eq.s32.totalorder %s31, 0
      %p142 = por %p140, %p141
      %s143 = ssub.s32 %s25, %s32
      %p144 = scmp.eq.s32.totalorder %s143, 0
      %s146 = sadd.s32 %s145, 1
      %s147 = scalar_select %p144, %s145, %s146
      %p150 = pneg %p144
      %p151 = scmp.eq.s32.totalorder %s25, 1
      %p152 = por %p150, %p151
      %p153 = scmp.ne.s32.totalorder %s145, %s148
      %p154 = scmp.eq.s32.totalorder %s25, 0
      %p155 = por %p153, %p154
      %p156 = scmp.ne.s32.totalorder %s145, %s148
      %p157 = scmp.eq.s32.totalorder %s30, 1
      %p158 = por %p156, %p157
      %p159 = scmp.ne.s32.totalorder %s148, %s149
      %p160 = scmp.eq.s32.totalorder %s30, 0
      %p161 = por %p159, %p160
      %p162 = scmp.ne.s32.totalorder %s148, %s149
      %p163 = scmp.eq.s32.totalorder %s31, 1
      %p164 = por %p162, %p163
      %p166 = scmp.ne.s32.totalorder %s149, %s165
      %p167 = scmp.eq.s32.totalorder %s31, 0
      %p168 = por %p166, %p167
      %s169 = ssub.s32 %s25, %s32
      %p170 = scmp.eq.s32.totalorder %s169, 0
      %s172 = sadd.s32 %s171, 1
      %s173 = scalar_select %p170, %s171, %s172
      %p176 = pneg %p170
      %p177 = scmp.eq.s32.totalorder %s25, 1
      %p178 = por %p176, %p177
      %p179 = scmp.ne.s32.totalorder %s171, %s174
      %p180 = scmp.eq.s32.totalorder %s25, 0
      %p181 = por %p179, %p180
      %p182 = scmp.ne.s32.totalorder %s171, %s174
      %p183 = scmp.eq.s32.totalorder %s30, 1
      %p184 = por %p182, %p183
      %p185 = scmp.ne.s32.totalorder %s174, %s175
      %p186 = scmp.eq.s32.totalorder %s30, 0
      %p187 = por %p185, %p186
      %p188 = scmp.ne.s32.totalorder %s174, %s175
      %p189 = scmp.eq.s32.totalorder %s31, 1
      %p190 = por %p188, %p189
      %p192 = scmp.ne.s32.totalorder %s175, %s191
      %p193 = scmp.eq.s32.totalorder %s31, 0
      %p194 = por %p192, %p193
      %s195 = ssub.s32 %s25, %s32
      %p196 = scmp.eq.s32.totalorder %s195, 0
      %s198 = sadd.s32 %s197, 1
      %s199 = scalar_select %p196, %s197, %s198
      %p202 = pneg %p196
      %p203 = scmp.eq.s32.totalorder %s25, 1
      %p204 = por %p202, %p203
      %p205 = scmp.ne.s32.totalorder %s197, %s200
      %p206 = scmp.eq.s32.totalorder %s25, 0
      %p207 = por %p205, %p206
      %p208 = scmp.ne.s32.totalorder %s197, %s200
      %p209 = scmp.eq.s32.totalorder %s30, 1
      %p210 = por %p208, %p209
      %p211 = scmp.ne.s32.totalorder %s200, %s201
      %p212 = scmp.eq.s32.totalorder %s30, 0
      %p213 = por %p211, %p212
      %p214 = scmp.ne.s32.totalorder %s200, %s201
      %p215 = scmp.eq.s32.totalorder %s31, 1
      %p216 = por %p214, %p215
      %p218 = scmp.ne.s32.totalorder %s201, %s217
      %p219 = scmp.eq.s32.totalorder %s31, 0
      %p220 = por %p218, %p219
      %s221 = ssub.s32 %s25, %s32
      %p222 = scmp.eq.s32.totalorder %s221, 0
      %s224 = sadd.s32 %s223, 1
      %s225 = scalar_select %p222, %s223, %s224
      %p228 = pneg %p222
      %p229 = scmp.eq.s32.totalorder %s25, 1
      %p230 = por %p228, %p229
      %p231 = scmp.ne.s32.totalorder %s223, %s226
      %p232 = scmp.eq.s32.totalorder %s25, 0
      %p233 = por %p231, %p232
      %p234 = scmp.ne.s32.totalorder %s223, %s226
      %p235 = scmp.eq.s32.totalorder %s30, 1
      %p236 = por %p234, %p235
      %p237 = scmp.ne.s32.totalorder %s226, %s227
      %p238 = scmp.eq.s32.totalorder %s30, 0
      %p239 = por %p237, %p238
      %p240 = scmp.ne.s32.totalorder %s226, %s227
      %p241 = scmp.eq.s32.totalorder %s31, 1
      %p242 = por %p240, %p241
      %p244 = scmp.ne.s32.totalorder %s227, %s243
      %p245 = scmp.eq.s32.totalorder %s31, 0
      %p246 = por %p244, %p245
      %s247 = ssub.s32 %s25, %s32
      %p248 = scmp.eq.s32.totalorder %s247, 0
      %s250 = sadd.s32 %s249, 1
      %s251 = scalar_select %p248, %s249, %s250
      %p254 = pneg %p248
      %p255 = scmp.eq.s32.totalorder %s25, 1
      %p256 = por %p254, %p255
      %p257 = scmp.ne.s32.totalorder %s249, %s252
      %p258 = scmp.eq.s32.totalorder %s25, 0
      %p259 = por %p257, %p258
      %p260 = scmp.ne.s32.totalorder %s249, %s252
      %p261 = scmp.eq.s32.totalorder %s30, 1
      %p262 = por %p260, %p261
      %p263 = scmp.ne.s32.totalorder %s252, %s253
      %p264 = scmp.eq.s32.totalorder %s30, 0
      %p265 = por %p263, %p264
      %p266 = scmp.ne.s32.totalorder %s252, %s253
      %p267 = scmp.eq.s32.totalorder %s31, 1
      %p268 = por %p266, %p267
      %p270 = scmp.ne.s32.totalorder %s253, %s269
      %p271 = scmp.eq.s32.totalorder %s31, 0
      %p272 = por %p270, %p271
      %s273 = ssub.s32 %s25, %s32
      %p274 = scmp.eq.s32.totalorder %s273, 0
      %s276 = sadd.s32 %s275, 1
      %s277 = scalar_select %p274, %s275, %s276
      %p280 = pneg %p274
      %p281 = scmp.eq.s32.totalorder %s25, 1
      %p282 = por %p280, %p281
      %p283 = scmp.ne.s32.totalorder %s275, %s278
      %p284 = scmp.eq.s32.totalorder %s25, 0
      %p285 = por %p283, %p284
      %p286 = scmp.ne.s32.totalorder %s275, %s278
      %p287 = scmp.eq.s32.totalorder %s30, 1
      %p288 = por %p286, %p287
      %p289 = scmp.ne.s32.totalorder %s278, %s279
      %p290 = scmp.eq.s32.totalorder %s30, 0
      %p291 = por %p289, %p290
      %p292 = scmp.ne.s32.totalorder %s278, %s279
      %p293 = scmp.eq.s32.totalorder %s31, 1
      %p294 = por %p292, %p293
      %p296 = scmp.ne.s32.totalorder %s279, %s295
      %p297 = scmp.eq.s32.totalorder %s31, 0
      %p298 = por %p296, %p297
      %s299 = ssub.s32 %s25, %s32
      %p300 = scmp.eq.s32.totalorder %s299, 0
      %s302 = sadd.s32 %s301, 1
      %s303 = scalar_select %p300, %s301, %s302
      %p306 = pneg %p300
      %p307 = scmp.eq.s32.totalorder %s25, 1
      %p308 = por %p306, %p307
      %p309 = scmp.ne.s32.totalorder %s301, %s304
      %p310 = scmp.eq.s32.totalorder %s25, 0
      %p311 = por %p309, %p310
      %p312 = scmp.ne.s32.totalorder %s301, %s304
      %p313 = scmp.eq.s32.totalorder %s30, 1
      %p314 = por %p312, %p313
      %p315 = scmp.ne.s32.totalorder %s304, %s305
      %p316 = scmp.eq.s32.totalorder %s30, 0
      %p317 = por %p315, %p316
      %p318 = scmp.ne.s32.totalorder %s304, %s305
      %p319 = scmp.eq.s32.totalorder %s31, 1
      %p320 = por %p318, %p319
      %p322 = scmp.ne.s32.totalorder %s305, %s321
      %p323 = scmp.eq.s32.totalorder %s31, 0
      %p324 = por %p322, %p323
      %s325 = ssub.s32 %s25, %s32
      %p326 = scmp.eq.s32.totalorder %s325, 0
      %s328 = sadd.s32 %s327, 1
      %s329 = scalar_select %p326, %s327, %s328
      %p332 = pneg %p326
      %p333 = scmp.eq.s32.totalorder %s25, 1
      %p334 = por %p332, %p333
      %p335 = scmp.ne.s32.totalorder %s327, %s330
      %p336 = scmp.eq.s32.totalorder %s25, 0
      %p337 = por %p335, %p336
      %p338 = scmp.ne.s32.totalorder %s327, %s330
      %p339 = scmp.eq.s32.totalorder %s30, 1
      %p340 = por %p338, %p339
      %p341 = scmp.ne.s32.totalorder %s330, %s331
      %p342 = scmp.eq.s32.totalorder %s30, 0
      %p343 = por %p341, %p342
      %p344 = scmp.ne.s32.totalorder %s330, %s331
      %p345 = scmp.eq.s32.totalorder %s31, 1
      %p346 = por %p344, %p345
      %p348 = scmp.ne.s32.totalorder %s331, %s347
      %p349 = scmp.eq.s32.totalorder %s31, 0
      %p350 = por %p348, %p349
      %s351 = ssub.s32 %s25, %s32
      %p352 = scmp.eq.s32.totalorder %s351, 0
      %s354 = sadd.s32 %s353, 1
      %s355 = scalar_select %p352, %s353, %s354
      %p358 = pneg %p352
      %p359 = scmp.eq.s32.totalorder %s25, 1
      %p360 = por %p358, %p359
      %p361 = scmp.ne.s32.totalorder %s353, %s356
      %p362 = scmp.eq.s32.totalorder %s25, 0
      %p363 = por %p361, %p362
      %p364 = scmp.ne.s32.totalorder %s353, %s356
      %p365 = scmp.eq.s32.totalorder %s30, 1
      %p366 = por %p364, %p365
      %p367 = scmp.ne.s32.totalorder %s356, %s357
      %p368 = scmp.eq.s32.totalorder %s30, 0
      %p369 = por %p367, %p368
      %p370 = scmp.ne.s32.totalorder %s356, %s357
      %p371 = scmp.eq.s32.totalorder %s31, 1
      %p372 = por %p370, %p371
      %p374 = scmp.ne.s32.totalorder %s357, %s373
      %p375 = scmp.eq.s32.totalorder %s31, 0
      %p376 = por %p374, %p375
      %s377 = ssub.s32 %s25, %s32
      %p378 = scmp.eq.s32.totalorder %s377, 0
      %s380 = sadd.s32 %s379, 1
      %s381 = scalar_select %p378, %s379, %s380
      %p384 = pneg %p378
      %p385 = scmp.eq.s32.totalorder %s25, 1
      %p386 = por %p384, %p385
      %p387 = scmp.ne.s32.totalorder %s379, %s382
      %p388 = scmp.eq.s32.totalorder %s25, 0
      %p389 = por %p387, %p388
      %p390 = scmp.ne.s32.totalorder %s379, %s382
      %p391 = scmp.eq.s32.totalorder %s30, 1
      %p392 = por %p390, %p391
      %p393 = scmp.ne.s32.totalorder %s382, %s383
      %p394 = scmp.eq.s32.totalorder %s30, 0
      %p395 = por %p393, %p394
      %p396 = scmp.ne.s32.totalorder %s382, %s383
      %p397 = scmp.eq.s32.totalorder %s31, 1
      %p398 = por %p396, %p397
      %p400 = scmp.ne.s32.totalorder %s383, %s399
      %p401 = scmp.eq.s32.totalorder %s31, 0
      %p402 = por %p400, %p401
      %s403 = ssub.s32 %s25, %s32
      %p404 = scmp.eq.s32.totalorder %s403, 0
      %s406 = sadd.s32 %s405, 1
      %s407 = scalar_select %p404, %s405, %s406
      %p410 = pneg %p404
      %p411 = scmp.eq.s32.totalorder %s25, 1
      %p412 = por %p410, %p411
      %p413 = scmp.ne.s32.totalorder %s405, %s408
      %p414 = scmp.eq.s32.totalorder %s25, 0
      %p415 = por %p413, %p414
      %p416 = scmp.ne.s32.totalorder %s405, %s408
      %p417 = scmp.eq.s32.totalorder %s30, 1
      %p418 = por %p416, %p417
      %p419 = scmp.ne.s32.totalorder %s408, %s409
      %p420 = scmp.eq.s32.totalorder %s30, 0
      %p421 = por %p419, %p420
      %p422 = scmp.ne.s32.totalorder %s408, %s409
      %p423 = scmp.eq.s32.totalorder %s31, 1
      %p424 = por %p422, %p423
      %p426 = scmp.ne.s32.totalorder %s409, %s425
      %p427 = scmp.eq.s32.totalorder %s31, 0
      %p428 = por %p426, %p427
      %s430 = sadd.s32 %s429, 1
      %p433 = scmp.eq.s32.totalorder %s25, 1
      %p434 = scmp.ne.s32.totalorder %s429, %s431
      %p435 = scmp.eq.s32.totalorder %s25, 0
      %p436 = por %p434, %p435
      %p437 = scmp.ne.s32.totalorder %s429, %s431
      %p438 = scmp.eq.s32.totalorder %s30, 1
      %p439 = por %p437, %p438
      %p440 = scmp.ne.s32.totalorder %s431, %s432
      %p441 = scmp.eq.s32.totalorder %s30, 0
      %p442 = por %p440, %p441
      %p443 = scmp.ne.s32.totalorder %s431, %s432
      %p444 = scmp.eq.s32.totalorder %s31, 1
      %p445 = por %p443, %p444
      %p447 = scmp.ne.s32.totalorder %s432, %s446
      %p448 = scmp.eq.s32.totalorder %s31, 0
      %p449 = por %p447, %p448
      %p450 = scmp.le.s32.totalorder 1, %s25
      %p451 = scmp.lt.s32.totalorder %s25, 3
      %p452 = pnand %p450, %p451
      %p453 = pneg %p452
      // Predicated region
      $region9: #{tpu_custom_call.1} parent=5 // pred_check
        _
      $region10: #{tpu_custom_call.1} parent=5 // pred_check_branch
        %455 = sbr.rel (%p452) target = $region12
      $region11: #{tpu_custom_call.1} parent=5 // pred_region
        %s456 = ssub.s32 %s25, 1
        // Predicated region
        $region13: #{tpu_custom_call.1} parent=11 // pred_check
          %p457 = pneg %p46
        $region14: #{tpu_custom_call.1} parent=11 // pred_check_branch
          %459 = sbr.rel (%p457) target = $region16
        $region15: #{tpu_custom_call.1} parent=11 // pred_region
          %461 = vsyncadd [#allocation3], 0
          %s462 = sshll.u32 %s0, 4
          %s463 = int_to_ptr.hbm [resolvable:$true] %s462
          %s464 = sshll.u32 [#allocation2], 4
          %s465 = int_to_ptr.vmem [resolvable:$true] %s464
          %470 = dma.hbm_to_vmem [thread:$0]  %s463, 256, %s465, [#allocation3], 128, 128, 8
        $region16: #{tpu_custom_call.1} parent=11 // pred_fallthru
          _
        // Predicated region
        $region17: #{tpu_custom_call.1} parent=11 // pred_check
          %p471 = pneg %p67
        $region18: #{tpu_custom_call.1} parent=11 // pred_check_branch
          %473 = sbr.rel (%p471) target = $region20
        $region19: #{tpu_custom_call.1} parent=11 // pred_region
          _
        $region20: #{tpu_custom_call.1} parent=11 // pred_fallthru
          _
        // Predicated region
        $region21: #{tpu_custom_call.1} parent=11 // pred_check
          %p474 = pneg %p88
        $region22: #{tpu_custom_call.1} parent=11 // pred_check_branch
          %476 = sbr.rel (%p474) target = $region24
        $region23: #{tpu_custom_call.1} parent=11 // pred_region
          _
        $region24: #{tpu_custom_call.1} parent=11 // pred_fallthru
          _
        // Predicated region
        $region25: #{tpu_custom_call.1} parent=11 // pred_check
          %p477 = pneg %p109
        $region26: #{tpu_custom_call.1} parent=11 // pred_check_branch
          %479 = sbr.rel (%p477) target = $region28
        $region27: #{tpu_custom_call.1} parent=11 // pred_region
          %481 = vsyncadd [#allocation6], 0
          %s482 = sshll.u32 %s3, 4
          %s483 = int_to_ptr.hbm [resolvable:$true] %s482
          %s484 = sshll.u32 [#allocation5], 4
          %s485 = int_to_ptr.vmem [resolvable:$true] %s484
          %490 = dma.hbm_to_vmem [thread:$0]  %s483, 256, %s485, [#allocation6], 128, 128, 8
        $region28: #{tpu_custom_call.1} parent=11 // pred_fallthru
          _
      $region12: #{tpu_custom_call.1} parent=5 // pred_fallthru
        _
      %p491 = scmp.lt.s32.totalorder %s25, 2
      // Predicated region
      $region29: #{tpu_custom_call.1} parent=5 // pred_check
        %p492 = pneg %p491
      $region30: #{tpu_custom_call.1} parent=5 // pred_check_branch
        %494 = sbr.rel (%p492) target = $region32
      $region31: #{tpu_custom_call.1} parent=5 // pred_region
        // Predicated region
        $region33: #{tpu_custom_call.1} parent=31 // pred_check
          %p495 = pneg %p129
        $region34: #{tpu_custom_call.1} parent=31 // pred_check_branch
          %497 = sbr.rel (%p495) target = $region36
        $region35: #{tpu_custom_call.1} parent=31 // pred_region
          %p498 = scmp.lt.s32.totalorder %s25, 1
          %s499 = scalar_select %p498, %s25, 1
          %s500 = smul.addr %s499, 4
          %s501 = smul.addr %s500, 4
          %s502 = scalar_lea.vmem %s4, %s501
        $region36: #{tpu_custom_call.1} parent=31 // pred_fallthru
          _
        // Predicated region
        $region37: #{tpu_custom_call.1} parent=31 // pred_check
          %p503 = pneg %p155
        $region38: #{tpu_custom_call.1} parent=31 // pred_check_branch
          %505 = sbr.rel (%p503) target = $region40
        $region39: #{tpu_custom_call.1} parent=31 // pred_region
          %s506 = sand.u32 %s25, 1
          %s507 = scalar_lea.sflag [#allocation3], %s506
          %s508 = sand.u32 %s145, 1
          %s509 = smul.addr %s508, 16
          %s510 = scalar_lea.vmem [#allocation7], %s509
          %512 = vsyncadd %s507, 0
          %s513 = smul.addr %s25, 4
          %s514 = smul.addr %s513, 4
          %s515 = scalar_lea.hbm %s5, %s514
          %s516 = sshll.u32 %s515, 4
          %s517 = int_to_ptr.hbm [resolvable:$true] %s516
          %s518 = sshll.u32 %s510, 4
          %s519 = int_to_ptr.vmem [resolvable:$true] %s518
          %524 = dma.hbm_to_vmem [thread:$0]  %s517, 256, %s519, %s507, 64, 64, 4
        $region40: #{tpu_custom_call.1} parent=31 // pred_fallthru
          _
        // Predicated region
        $region41: #{tpu_custom_call.1} parent=31 // pred_check
          %p525 = pneg %p181
        $region42: #{tpu_custom_call.1} parent=31 // pred_check_branch
          %527 = sbr.rel (%p525) target = $region44
        $region43: #{tpu_custom_call.1} parent=31 // pred_region
          %s528 = sand.u32 %s25, 1
          %s529 = scalar_lea.sflag [#allocation3], %s528
          %s530 = sand.u32 %s171, 1
          %s531 = smul.addr %s530, 16
          %s532 = scalar_lea.vmem [#allocation8], %s531
          %534 = vsyncadd %s529, 0
          %s535 = smul.addr %s25, 4
          %s536 = smul.addr %s535, 4
          %s537 = scalar_lea.hbm %s6, %s536
          %s538 = sshll.u32 %s537, 4
          %s539 = int_to_ptr.hbm [resolvable:$true] %s538
          %s540 = sshll.u32 %s532, 4
          %s541 = int_to_ptr.vmem [resolvable:$true] %s540
          %546 = dma.hbm_to_vmem [thread:$0]  %s539, 256, %s541, %s529, 64, 64, 4
        $region44: #{tpu_custom_call.1} parent=31 // pred_fallthru
          _
        // Predicated region
        $region45: #{tpu_custom_call.1} parent=31 // pred_check
          %p547 = pneg %p207
        $region46: #{tpu_custom_call.1} parent=31 // pred_check_branch
          %549 = sbr.rel (%p547) target = $region48
        $region47: #{tpu_custom_call.1} parent=31 // pred_region
          %s550 = sand.u32 %s25, 1
          %s551 = scalar_lea.sflag [#allocation3], %s550
          %s552 = sand.u32 %s197, 1
          %s553 = smul.addr %s552, 16
          %s554 = scalar_lea.vmem [#allocation9], %s553
          %556 = vsyncadd %s551, 0
          %s557 = smul.addr %s25, 4
          %s558 = smul.addr %s557, 4
          %s559 = scalar_lea.hbm %s7, %s558
          %s560 = sshll.u32 %s559, 4
          %s561 = int_to_ptr.hbm [resolvable:$true] %s560
          %s562 = sshll.u32 %s554, 4
          %s563 = int_to_ptr.vmem [resolvable:$true] %s562
          %568 = dma.hbm_to_vmem [thread:$0]  %s561, 256, %s563, %s551, 64, 64, 4
        $region48: #{tpu_custom_call.1} parent=31 // pred_fallthru
          _
        // Predicated region
        $region49: #{tpu_custom_call.1} parent=31 // pred_check
          %p569 = pneg %p233
        $region50: #{tpu_custom_call.1} parent=31 // pred_check_branch
          %571 = sbr.rel (%p569) target = $region52
        $region51: #{tpu_custom_call.1} parent=31 // pred_region
          %p572 = scmp.lt.s32.totalorder %s25, 1
          %s573 = scalar_select %p572, %s25, 1
          %s574 = smul.addr %s573, 4
          %s575 = smul.addr %s574, 4
          %s576 = scalar_lea.vmem %s8, %s575
        $region52: #{tpu_custom_call.1} parent=31 // pred_fallthru
          _
        // Predicated region
        $region53: #{tpu_custom_call.1} parent=31 // pred_check
          %p577 = pneg %p259
        $region54: #{tpu_custom_call.1} parent=31 // pred_check_branch
          %579 = sbr.rel (%p577) target = $region56
        $region55: #{tpu_custom_call.1} parent=31 // pred_region
          %s580 = sand.u32 %s25, 1
          %s581 = scalar_lea.sflag [#allocation3], %s580
          %s582 = sand.u32 %s249, 1
          %s583 = smul.addr %s582, 16
          %s584 = scalar_lea.vmem [#allocation10], %s583
          %586 = vsyncadd %s581, 0
          %s587 = smul.addr %s25, 4
          %s588 = smul.addr %s587, 4
          %s589 = scalar_lea.hbm %s9, %s588
          %s590 = sshll.u32 %s589, 4
          %s591 = int_to_ptr.hbm [resolvable:$true] %s590
          %s592 = sshll.u32 %s584, 4
          %s593 = int_to_ptr.vmem [resolvable:$true] %s592
          %598 = dma.hbm_to_vmem [thread:$0]  %s591, 256, %s593, %s581, 64, 64, 4
        $region56: #{tpu_custom_call.1} parent=31 // pred_fallthru
          _
        // Predicated region
        $region57: #{tpu_custom_call.1} parent=31 // pred_check
          %p599 = pneg %p285
        $region58: #{tpu_custom_call.1} parent=31 // pred_check_branch
          %601 = sbr.rel (%p599) target = $region60
        $region59: #{tpu_custom_call.1} parent=31 // pred_region
          %s602 = sand.u32 %s25, 1
          %s603 = scalar_lea.sflag [#allocation3], %s602
          %s604 = sand.u32 %s275, 1
          %s605 = smul.addr %s604, 16
          %s606 = scalar_lea.vmem [#allocation11], %s605
          %608 = vsyncadd %s603, 0
          %s609 = smul.addr %s25, 4
          %s610 = smul.addr %s609, 4
          %s611 = scalar_lea.hbm %s10, %s610
          %s612 = sshll.u32 %s611, 4
          %s613 = int_to_ptr.hbm [resolvable:$true] %s612
          %s614 = sshll.u32 %s606, 4
          %s615 = int_to_ptr.vmem [resolvable:$true] %s614
          %620 = dma.hbm_to_vmem [thread:$0]  %s613, 256, %s615, %s603, 64, 64, 4
        $region60: #{tpu_custom_call.1} parent=31 // pred_fallthru
          _
        // Predicated region
        $region61: #{tpu_custom_call.1} parent=31 // pred_check
          %p621 = pneg %p311
        $region62: #{tpu_custom_call.1} parent=31 // pred_check_branch
          %623 = sbr.rel (%p621) target = $region64
        $region63: #{tpu_custom_call.1} parent=31 // pred_region
          %s624 = sand.u32 %s25, 1
          %s625 = scalar_lea.sflag [#allocation3], %s624
          %s626 = sand.u32 %s301, 1
          %s627 = smul.addr %s626, 16
          %s628 = scalar_lea.vmem [#allocation12], %s627
          %630 = vsyncadd %s625, 0
          %s631 = smul.addr %s25, 4
          %s632 = smul.addr %s631, 4
          %s633 = scalar_lea.hbm %s11, %s632
          %s634 = sshll.u32 %s633, 4
          %s635 = int_to_ptr.hbm [resolvable:$true] %s634
          %s636 = sshll.u32 %s628, 4
          %s637 = int_to_ptr.vmem [resolvable:$true] %s636
          %642 = dma.hbm_to_vmem [thread:$0]  %s635, 256, %s637, %s625, 64, 64, 4
        $region64: #{tpu_custom_call.1} parent=31 // pred_fallthru
          _
        // Predicated region
        $region65: #{tpu_custom_call.1} parent=31 // pred_check
          %p643 = pneg %p337
        $region66: #{tpu_custom_call.1} parent=31 // pred_check_branch
          %645 = sbr.rel (%p643) target = $region68
        $region67: #{tpu_custom_call.1} parent=31 // pred_region
          %p646 = scmp.lt.s32.totalorder %s25, 1
          %s647 = scalar_select %p646, %s25, 1
          %s648 = smul.addr %s647, 8
          %s649 = smul.addr %s648, 4
          %s650 = scalar_lea.vmem %s12, %s649
        $region68: #{tpu_custom_call.1} parent=31 // pred_fallthru
          _
        // Predicated region
        $region69: #{tpu_custom_call.1} parent=31 // pred_check
          %p651 = pneg %p363
        $region70: #{tpu_custom_call.1} parent=31 // pred_check_branch
          %653 = sbr.rel (%p651) target = $region72
        $region71: #{tpu_custom_call.1} parent=31 // pred_region
          %p654 = scmp.lt.s32.totalorder %s25, 1
          %s655 = scalar_select %p654, %s25, 1
          %s656 = scalar_lea.vmem %s13, %s655
        $region72: #{tpu_custom_call.1} parent=31 // pred_fallthru
          _
        // Predicated region
        $region73: #{tpu_custom_call.1} parent=31 // pred_check
          %p657 = pneg %p389
        $region74: #{tpu_custom_call.1} parent=31 // pred_check_branch
          %659 = sbr.rel (%p657) target = $region76
        $region75: #{tpu_custom_call.1} parent=31 // pred_region
          %p660 = scmp.lt.s32.totalorder %s25, 1
          %s661 = scalar_select %p660, %s25, 1
          %s662 = smul.addr %s661, 2
          %s663 = smul.addr %s662, 8
          %s664 = scalar_lea.vmem %s14, %s663
        $region76: #{tpu_custom_call.1} parent=31 // pred_fallthru
          _
        // Predicated region
        $region77: #{tpu_custom_call.1} parent=31 // pred_check
          %p665 = pneg %p415
        $region78: #{tpu_custom_call.1} parent=31 // pred_check_branch
          %667 = sbr.rel (%p665) target = $region80
        $region79: #{tpu_custom_call.1} parent=31 // pred_region
          %p668 = scmp.lt.s32.totalorder %s25, 1
          %s669 = scalar_select %p668, %s25, 1
          %s670 = scalar_lea.vmem %s15, %s669
        $region80: #{tpu_custom_call.1} parent=31 // pred_fallthru
          _
      $region32: #{tpu_custom_call.1} parent=5 // pred_fallthru
        _
      %p671 = scmp.le.s32.totalorder 1, %s25
      %p672 = scmp.lt.s32.totalorder %s25, 3
      %p673 = pnand %p671, %p672
      %p674 = pneg %p673
      // Predicated region
      $region81: #{tpu_custom_call.1} parent=5 // pred_check
        _
      $region82: #{tpu_custom_call.1} parent=5 // pred_check_branch
        %676 = sbr.rel (%p673) target = $region84
      $region83: #{tpu_custom_call.1} parent=5 // pred_region
        %s677 = ssub.s32 %s25, 1
        // Predicated region
        $region85: #{tpu_custom_call.1} parent=83 // pred_check
          %p678 = pneg %p46
        $region86: #{tpu_custom_call.1} parent=83 // pred_check_branch
          %680 = sbr.rel (%p678) target = $region88
        $region87: #{tpu_custom_call.1} parent=83 // pred_region
          %682 = dma.done [#allocation3], 256
        $region88: #{tpu_custom_call.1} parent=83 // pred_fallthru
          _
        // Predicated region
        $region89: #{tpu_custom_call.1} parent=83 // pred_check
          %p683 = pneg %p109
        $region90: #{tpu_custom_call.1} parent=83 // pred_check_branch
          %685 = sbr.rel (%p683) target = $region92
        $region91: #{tpu_custom_call.1} parent=83 // pred_region
          %687 = dma.done [#allocation6], 256
        $region92: #{tpu_custom_call.1} parent=83 // pred_fallthru
          _
        %s688 = sand.u32 %s30, 1
        %s689 = scalar_lea.sflag [#allocation3], %s688
        %s690 = sand.u32 %s148, 1
        %s691 = smul.addr %s690, 16
        %s692 = scalar_lea.vmem [#allocation7], %s691
        // Predicated region
        $region93: #{tpu_custom_call.1} parent=83 // pred_check
          %p693 = pneg %p161
        $region94: #{tpu_custom_call.1} parent=83 // pred_check_branch
          %695 = sbr.rel (%p693) target = $region96
        $region95: #{tpu_custom_call.1} parent=83 // pred_region
          %697 = dma.done %s689, 256
        $region96: #{tpu_custom_call.1} parent=83 // pred_fallthru
          _
        %s698 = sand.u32 %s30, 1
        %s699 = scalar_lea.sflag [#allocation3], %s698
        %s700 = sand.u32 %s174, 1
        %s701 = smul.addr %s700, 16
        %s702 = scalar_lea.vmem [#allocation8], %s701
        // Predicated region
        $region97: #{tpu_custom_call.1} parent=83 // pred_check
          %p703 = pneg %p187
        $region98: #{tpu_custom_call.1} parent=83 // pred_check_branch
          %705 = sbr.rel (%p703) target = $region100
        $region99: #{tpu_custom_call.1} parent=83 // pred_region
          %707 = dma.done %s699, 256
        $region100: #{tpu_custom_call.1} parent=83 // pred_fallthru
          _
        %s708 = sand.u32 %s30, 1
        %s709 = scalar_lea.sflag [#allocation3], %s708
        %s710 = sand.u32 %s200, 1
        %s711 = smul.addr %s710, 16
        %s712 = scalar_lea.vmem [#allocation9], %s711
        // Predicated region
        $region101: #{tpu_custom_call.1} parent=83 // pred_check
          %p713 = pneg %p213
        $region102: #{tpu_custom_call.1} parent=83 // pred_check_branch
          %715 = sbr.rel (%p713) target = $region104
        $region103: #{tpu_custom_call.1} parent=83 // pred_region
          %717 = dma.done %s709, 256
        $region104: #{tpu_custom_call.1} parent=83 // pred_fallthru
          _
        %s718 = sand.u32 %s30, 1
        %s719 = scalar_lea.sflag [#allocation3], %s718
        %s720 = sand.u32 %s252, 1
        %s721 = smul.addr %s720, 16
        %s722 = scalar_lea.vmem [#allocation10], %s721
        // Predicated region
        $region105: #{tpu_custom_call.1} parent=83 // pred_check
          %p723 = pneg %p265
        $region106: #{tpu_custom_call.1} parent=83 // pred_check_branch
          %725 = sbr.rel (%p723) target = $region108
        $region107: #{tpu_custom_call.1} parent=83 // pred_region
          %727 = dma.done %s719, 256
        $region108: #{tpu_custom_call.1} parent=83 // pred_fallthru
          _
        %s728 = sand.u32 %s30, 1
        %s729 = scalar_lea.sflag [#allocation3], %s728
        %s730 = sand.u32 %s278, 1
        %s731 = smul.addr %s730, 16
        %s732 = scalar_lea.vmem [#allocation11], %s731
        // Predicated region
        $region109: #{tpu_custom_call.1} parent=83 // pred_check
          %p733 = pneg %p291
        $region110: #{tpu_custom_call.1} parent=83 // pred_check_branch
          %735 = sbr.rel (%p733) target = $region112
        $region111: #{tpu_custom_call.1} parent=83 // pred_region
          %737 = dma.done %s729, 256
        $region112: #{tpu_custom_call.1} parent=83 // pred_fallthru
          _
        %s738 = sand.u32 %s30, 1
        %s739 = scalar_lea.sflag [#allocation3], %s738
        %s740 = sand.u32 %s304, 1
        %s741 = smul.addr %s740, 16
        %s742 = scalar_lea.vmem [#allocation12], %s741
        // Predicated region
        $region113: #{tpu_custom_call.1} parent=83 // pred_check
          %p743 = pneg %p317
        $region114: #{tpu_custom_call.1} parent=83 // pred_check_branch
          %745 = sbr.rel (%p743) target = $region116
        $region115: #{tpu_custom_call.1} parent=83 // pred_region
          %747 = dma.done %s739, 256
        $region116: #{tpu_custom_call.1} parent=83 // pred_fallthru
          _
        %p748 = pneg %p46
        %p749 = pneg %p43
        %p750 = pneg %p67
        %p751 = pneg %p64
        %p752 = pneg %p88
        %p753 = pneg %p85
        %p754 = pneg %p109
        %p755 = pneg %p106
        %p756 = scmp.lt.s32.totalorder %s30, 1
        %s757 = scalar_select %p756, %s30, 1
        %s758 = smul.addr %s757, 4
        %s759 = smul.addr %s758, 4
        %s760 = scalar_lea.vmem %s4, %s759
        %p761 = pneg %p135
        %p762 = pneg %p132
        %s763 = sand.u32 %s30, 1
        %s764 = scalar_lea.sflag [#allocation3], %s763
        %s765 = sand.u32 %s148, 1
        %s766 = smul.addr %s765, 16
        %s767 = scalar_lea.vmem [#allocation7], %s766
        %p768 = pneg %p161
        %p769 = pneg %p158
        %s770 = sand.u32 %s30, 1
        %s771 = scalar_lea.sflag [#allocation3], %s770
        %s772 = sand.u32 %s174, 1
        %s773 = smul.addr %s772, 16
        %s774 = scalar_lea.vmem [#allocation8], %s773
        %p775 = pneg %p187
        %p776 = pneg %p184
        %s777 = sand.u32 %s30, 1
        %s778 = scalar_lea.sflag [#allocation3], %s777
        %s779 = sand.u32 %s200, 1
        %s780 = smul.addr %s779, 16
        %s781 = scalar_lea.vmem [#allocation9], %s780
        %p782 = pneg %p213
        %p783 = pneg %p210
        %p784 = scmp.lt.s32.totalorder %s30, 1
        %s785 = scalar_select %p784, %s30, 1
        %s786 = smul.addr %s785, 4
        %s787 = smul.addr %s786, 4
        %s788 = scalar_lea.vmem %s8, %s787
        %p789 = pneg %p239
        %p790 = pneg %p236
        %s791 = sand.u32 %s30, 1
        %s792 = scalar_lea.sflag [#allocation3], %s791
        %s793 = sand.u32 %s252, 1
        %s794 = smul.addr %s793, 16
        %s795 = scalar_lea.vmem [#allocation10], %s794
        %p796 = pneg %p265
        %p797 = pneg %p262
        %s798 = sand.u32 %s30, 1
        %s799 = scalar_lea.sflag [#allocation3], %s798
        %s800 = sand.u32 %s278, 1
        %s801 = smul.addr %s800, 16
        %s802 = scalar_lea.vmem [#allocation11], %s801
        %p803 = pneg %p291
        %p804 = pneg %p288
        %s805 = sand.u32 %s30, 1
        %s806 = scalar_lea.sflag [#allocation3], %s805
        %s807 = sand.u32 %s304, 1
        %s808 = smul.addr %s807, 16
        %s809 = scalar_lea.vmem [#allocation12], %s808
        %p810 = pneg %p317
        %p811 = pneg %p314
        %p812 = scmp.lt.s32.totalorder %s30, 1
        %s813 = scalar_select %p812, %s30, 1
        %s814 = smul.addr %s813, 8
        %s815 = smul.addr %s814, 4
        %s816 = scalar_lea.vmem %s12, %s815
        %p817 = pneg %p343
        %p818 = pneg %p340
        %p819 = scmp.lt.s32.totalorder %s30, 1
        %s820 = scalar_select %p819, %s30, 1
        %s821 = scalar_lea.vmem %s13, %s820
        %p822 = pneg %p369
        %p823 = pneg %p366
        %p824 = scmp.lt.s32.totalorder %s30, 1
        %s825 = scalar_select %p824, %s30, 1
        %s826 = smul.addr %s825, 2
        %s827 = smul.addr %s826, 8
        %s828 = scalar_lea.vmem %s14, %s827
        %p829 = pneg %p395
        %p830 = pneg %p392
        %p831 = scmp.lt.s32.totalorder %s30, 1
        %s832 = scalar_select %p831, %s30, 1
        %s833 = scalar_lea.vmem %s15, %s832
        %p834 = pneg %p421
        %p835 = pneg %p418
        %p836 = pneg %p442
        %p837 = pneg %p439
        %p838 = scmp.lt.s32.totalorder %s30, 1
        %s839 = scalar_select %p838, %s30, 1
        %s840 = smul.addr %s839, 4
        %s841 = smul.addr %s840, 4
        %s842 = scalar_lea.vmem %s4, %s841
        %p843 = scmp.lt.s32.totalorder %s30, 1
        %s844 = scalar_select %p843, %s30, 1
        %s845 = smul.addr %s844, 4
        %s846 = smul.addr %s845, 4
        %s847 = scalar_lea.vmem %s8, %s846
        %p848 = scmp.lt.s32.totalorder %s30, 1
        %s849 = scalar_select %p848, %s30, 1
        %s850 = smul.addr %s849, 8
        %s851 = smul.addr %s850, 4
        %s852 = scalar_lea.vmem %s12, %s851
        %p853 = scmp.lt.s32.totalorder %s30, 1
        %s854 = scalar_select %p853, %s30, 1
        %s855 = scalar_lea.vmem %s13, %s854
        %p856 = scmp.lt.s32.totalorder %s30, 1
        %s857 = scalar_select %p856, %s30, 1
        %s858 = smul.addr %s857, 2
        %s859 = smul.addr %s858, 8
        %s860 = scalar_lea.vmem %s14, %s859
        %p861 = scmp.lt.s32.totalorder %s30, 1
        %s862 = scalar_select %p861, %s30, 1
        %s863 = scalar_lea.vmem %s15, %s862
        %p865 = scmp.eq.s32.totalorder %s30, 0
        // Predicated region
        $region117: #{tpu_custom_call.1} parent=83 // pred_check
          %p866 = pneg %p865
        $region118: #{tpu_custom_call.1} parent=83 // pred_check_branch
          %868 = sbr.rel (%p866) target = $region120
        $region119: #{tpu_custom_call.1} parent=83 // pred_region
          %v869 = vld [vmem:[#allocation2] sm:$0xff]
          %v870 = vld [vmem:[#allocation2 + $0x8] sm:$0xff]
          %vm871 = vcmask 261120
          %872 = vst.msk [vmem:[#allocation13] sm:$0xff] %vm871, %v869
          %873 = vst.msk [vmem:[#allocation13 + $0x8] sm:$0xff] %vm871, %v870
        $region120: #{tpu_custom_call.1} parent=83 // pred_fallthru
          _
        %v874 = vld [vmem:[#allocation13] sm:$0xff]
        %v875 = vld [vmem:[#allocation13 + $0x8] sm:$0xff]
        %v876 = vld [vmem:[#allocation5] sm:$0xff]
        %v877 = vld [vmem:[#allocation5 + $0x8] sm:$0xff]
        %v878 = vld [vmem:[%s1] sm:$0xff]
        %v879 = vld [vmem:[%s1 + $0x8] sm:$0xff]
        %v880 = vld [vmem:[%s1 + $0x10] sm:$0xff]
        %v881 = vld [vmem:[%s1 + $0x18] sm:$0xff]
        %v882 = vld [vmem:[%s2] sm:$0xff]
        %v883 = vld [vmem:[%s2 + $0x8] sm:$0xff]
        %v884 = vld [vmem:[%s2 + $0x10] sm:$0xff]
        %v885 = vld [vmem:[%s2 + $0x18] sm:$0xff]
        %v886 = vld [vmem:[%s860] sm:$0xff]
        %v887 = vld [vmem:[%s860 + $0x8] sm:$0x1f]
        %v888 = vadd.f32 %v874, %v876
        %v889 = vadd.f32 %v875, %v877
        %v890 = vld [vmem:[%s842] sm:$0xf]
        %v891 = vld [vmem:[%s842 + $0x4] sm:$0xf]
        %v892 = vld [vmem:[%s842 + $0x8] sm:$0xf]
        %v893 = vld [vmem:[%s842 + $0xc] sm:$0xf]
        %v894 = vpack.c.bf16 %v889, %v888
        %v895 = vld [vmem:[%s855] sm:$0x1]
        %v897 = vperm.slane %v895, 0
        %v903 = vunpack.c.l.b16 %v890
        %v904 = vunpack.c.l.b16 %v891
        %v905 = vunpack.c.l.b16 %v892
        %v906 = vunpack.c.l.b16 %v893
        %v907 = vpack.c.b16 %v904, %v903
        %v908 = vpack.c.b16 %v906, %v905
        %vm911 = vcmask 261120
        %v913 = vsel %vm911, %v894, 0
        %915 = vmatpush.bf16.msra.mxu0 0
        %916 = vmatpush.bf16.msra.mxu0 0
        %917 = vmatpush.bf16.msra.mxu0 0
        %918 = vmatpush.bf16.msra.mxu0 0
        %919 = vmatpush.bf16.msra.mxu0 0
        %920 = vmatpush.bf16.msra.mxu0 0
        %921 = vmatpush.bf16.msra.mxu0 %v908
        %922 = vmatpush.bf16.msra.mxu0 %v907
        %923 = vmatmul.bf16.gmra.mxu0 %v913
        %v924 = vpop.f32.mrf.mxu0
        %v925 = vadd.f32 %v897, %v924
        %v926 = vpop.f32.mrf.mxu0
        %v927 = vadd.f32 %v897, %v926
        %928 = vdwg.mxu0
        %v929 = vld [vmem:[%s692] sm:$0xf]
        %v930 = vld [vmem:[%s692 + $0x4] sm:$0xf]
        %v931 = vld [vmem:[%s692 + $0x8] sm:$0xf]
        %v932 = vld [vmem:[%s692 + $0xc] sm:$0xf]
        %v933 = vpack.c.bf16 %v875, %v874
        %v934 = vperm.slane %v886, 0
        %v939 = vunpack.c.l.b16 %v929
        %v940 = vunpack.c.l.b16 %v930
        %v941 = vunpack.c.l.b16 %v931
        %v942 = vunpack.c.l.b16 %v932
        %v943 = vpack.c.b16 %v940, %v939
        %v944 = vpack.c.b16 %v942, %v941
        %v948 = vsel %vm911, %v933, 0
        %950 = vmatpush.bf16.msra.mxu0 0
        %951 = vmatpush.bf16.msra.mxu0 0
        %952 = vmatpush.bf16.msra.mxu0 0
        %953 = vmatpush.bf16.msra.mxu0 0
        %954 = vmatpush.bf16.msra.mxu0 0
        %955 = vmatpush.bf16.msra.mxu0 0
        %956 = vmatpush.bf16.msra.mxu0 %v944
        %957 = vmatpush.bf16.msra.mxu0 %v943
        %958 = vmatmul.bf16.gmra.mxu0 %v948
        %v959 = vpop.f32.mrf.mxu0
        %v960 = vadd.f32 %v934, %v959
        %v961 = vpop.f32.mrf.mxu0
        %v962 = vadd.f32 %v934, %v961
        %963 = vdwg.mxu0
        %v964 = vmul.f32 %v925, 0.35355338
        %v965 = vmul.f32 %v927, 0.35355338
        %v966 = vpack.c.bf16 %v964, %v964
        %v967 = vpack.c.bf16 %v965, %v965
        %v968 = vpack.c.bf16 %v925, %v925
        %v969 = vpack.c.bf16 %v927, %v927
        %v970 = vpack.c.bf16 %v960, %v960
        %v971 = vpack.c.bf16 %v962, %v962
        %v973 = vunpack.c.l.b16 %v968
        %v974 = vpack.c.b16 %v973, %v973
        %975 = vrot.lane.b32.xlu0 %v974, 96
        %v976 = vpop.permute.xlu0 %975
        %vm977 = vcmask 64512
        %v979 = vsel %vm977, %v966, 0
        %v982 = vsel %vm977, %v976, 0
        %984 = vmatpush.bf16.xpose.msra.mxu0 0
        %985 = vmatpush.bf16.xpose.msra.mxu0 0
        %986 = vmatpush.bf16.xpose.msra.mxu0 0
        %987 = vmatpush.bf16.xpose.msra.mxu0 0
        %988 = vmatpush.bf16.xpose.msra.mxu0 0
        %989 = vmatpush.bf16.xpose.msra.mxu0 0
        %990 = vmatpush.bf16.xpose.msra.mxu0 0
        %991 = vmatpush.bf16.xpose.msra.mxu0 %v982
        %992 = vmatmul.bf16.gmra.mxu0 %v979
        %v993 = vpop.f32.mrf.mxu0
        %v994 = vadd.f32 0.0, %v993
        %v995 = vpop.f32.mrf.mxu0
        %996 = vdwg.mxu0
        %v998 = vunpack.c.l.b16 %v969
        %v999 = vpack.c.b16 %v998, %v998
        %1000 = vrot.lane.b32.xlu0 %v999, 96
        %v1001 = vpop.permute.xlu0 %1000
        %v1003 = vsel %vm977, %v967, 0
        %v1006 = vsel %vm977, %v1001, 0
        %1008 = vmatpush.bf16.xpose.msra.mxu0 0
        %1009 = vmatpush.bf16.xpose.msra.mxu0 0
        %1010 = vmatpush.bf16.xpose.msra.mxu0 0
        %1011 = vmatpush.bf16.xpose.msra.mxu0 0
        %1012 = vmatpush.bf16.xpose.msra.mxu0 0
        %1013 = vmatpush.bf16.xpose.msra.mxu0 0
        %1014 = vmatpush.bf16.xpose.msra.mxu0 0
        %1015 = vmatpush.bf16.xpose.msra.mxu0 %v1006
        %1016 = vmatmul.bf16.gmra.mxu0 %v1003
        %v1017 = vpop.f32.mrf.mxu0
        %v1018 = vadd.f32 0.0, %v1017
        %v1019 = vpop.f32.mrf.mxu0
        %1020 = vdwg.mxu0
        %v1021 = vsel %vm977, %v994, -inf
        %1022 = vmax.xlane.f32.xlu0 %v1021
        %v1023 = vpop.xlane.xlu0 %1022
        %v1024 = vsel %vm977, %v1018, -inf
        %1025 = vmax.xlane.f32.xlu0 %v1024
        %v1026 = vpop.xlane.xlu0 %1025
        %v1027 = vsub.f32 %v994, %v1023
        %v1028 = vsub.f32 %v1018, %v1026
        %v1029 = vmul.f32 %v1027, 1.442695
        %v1030 = vpow.pop %v1029
        %v1031 = vmul.f32 %v1028, 1.442695
        %v1032 = vpow.pop %v1031
        %v1033 = vsel %vm977, %v1030, 0.0
        %1034 = vadd.xlane.f32.xlu0 %v1033
        %v1035 = vpop.xlane.xlu0 %1034
        %v1036 = vsel %vm977, %v1032, 0.0
        %1037 = vadd.xlane.f32.xlu0 %v1036
        %v1038 = vpop.xlane.xlu0 %1037
        %v1039 = vrcp.pop %v1035
        %v1040 = vrcp.pop %v1038
        %v1041 = vmul.f32 %v1030, %v1039
        %v1042 = vmul.f32 %v1032, %v1040
        %v1043 = vpack.c.bf16 %v1041, %v1041
        %v1044 = vpack.c.bf16 %v1042, %v1042
        %v1046 = vsel %vm977, %v1043, 0
        %vm1048 = vcmask 1043456
        %v1050 = vsel %vm1048, %v970, 0
        %1052 = vmatpush.bf16.msra.mxu0 0
        %1053 = vmatpush.bf16.msra.mxu0 0
        %1054 = vmatpush.bf16.msra.mxu0 0
        %1055 = vmatpush.bf16.msra.mxu0 0
        %1056 = vmatpush.bf16.msra.mxu0 0
        %1057 = vmatpush.bf16.msra.mxu0 0
        %1058 = vmatpush.bf16.msra.mxu0 0
        %1059 = vmatpush.bf16.msra.mxu0 %v1050
        %1060 = vmatmul.bf16.gmra.mxu0 %v1046
        %v1061 = vpop.f32.mrf.mxu0
        %v1062 = vadd.f32 0.0, %v1061
        %v1063 = vpop.f32.mrf.mxu0
        %1064 = vdwg.mxu0
        %v1066 = vsel %vm977, %v1044, 0
        %v1069 = vsel %vm1048, %v971, 0
        %1071 = vmatpush.bf16.msra.mxu0 0
        %1072 = vmatpush.bf16.msra.mxu0 0
        %1073 = vmatpush.bf16.msra.mxu0 0
        %1074 = vmatpush.bf16.msra.mxu0 0
        %1075 = vmatpush.bf16.msra.mxu0 0
        %1076 = vmatpush.bf16.msra.mxu0 0
        %1077 = vmatpush.bf16.msra.mxu0 0
        %1078 = vmatpush.bf16.msra.mxu0 %v1069
        %1079 = vmatmul.bf16.gmra.mxu0 %v1066
        %v1080 = vpop.f32.mrf.mxu0
        %v1081 = vadd.f32 0.0, %v1080
        %v1082 = vpop.f32.mrf.mxu0
        %1083 = vdwg.mxu0
        %v1085 = vunpack.c.l.b16 %v966
        %v1086 = vpack.c.b16 %v1085, %v1085
        %1087 = vrot.lane.b32.xlu0 %v1086, 120
        %v1088 = vpop.permute.xlu0 %1087
        %1089 = vrot.lane.b32.xlu0 %v974, 88
        %v1090 = vpop.permute.xlu0 %1089
        %v1092 = vsel %vm977, %v1088, 0
        %v1095 = vsel %vm977, %v1090, 0
        %1097 = vmatpush.bf16.xpose.msra.mxu0 0
        %1098 = vmatpush.bf16.xpose.msra.mxu0 0
        %1099 = vmatpush.bf16.xpose.msra.mxu0 0
        %1100 = vmatpush.bf16.xpose.msra.mxu0 0
        %1101 = vmatpush.bf16.xpose.msra.mxu0 0
        %1102 = vmatpush.bf16.xpose.msra.mxu0 0
        %1103 = vmatpush.bf16.xpose.msra.mxu0 0
        %1104 = vmatpush.bf16.xpose.msra.mxu0 %v1095
        %1105 = vmatmul.bf16.gmra.mxu0 %v1092
        %v1106 = vpop.f32.mrf.mxu0
        %v1107 = vadd.f32 0.0, %v1106
        %v1108 = vpop.f32.mrf.mxu0
        %1109 = vdwg.mxu0
        %v1111 = vunpack.c.l.b16 %v967
        %v1112 = vpack.c.b16 %v1111, %v1111
        %1113 = vrot.lane.b32.xlu0 %v1112, 120
        %v1114 = vpop.permute.xlu0 %1113
        %1115 = vrot.lane.b32.xlu0 %v999, 88
        %v1116 = vpop.permute.xlu0 %1115
        %v1118 = vsel %vm977, %v1114, 0
        %v1121 = vsel %vm977, %v1116, 0
        %1123 = vmatpush.bf16.xpose.msra.mxu0 0
        %1124 = vmatpush.bf16.xpose.msra.mxu0 0
        %1125 = vmatpush.bf16.xpose.msra.mxu0 0
        %1126 = vmatpush.bf16.xpose.msra.mxu0 0
        %1127 = vmatpush.bf16.xpose.msra.mxu0 0
        %1128 = vmatpush.bf16.xpose.msra.mxu0 0
        %1129 = vmatpush.bf16.xpose.msra.mxu0 0
        %1130 = vmatpush.bf16.xpose.msra.mxu0 %v1121
        %1131 = vmatmul.bf16.gmra.mxu0 %v1118
        %v1132 = vpop.f32.mrf.mxu0
        %v1133 = vadd.f32 0.0, %v1132
        %v1134 = vpop.f32.mrf.mxu0
        %1135 = vdwg.mxu0
        %v1136 = vsel %vm977, %v1107, -inf
        %1137 = vmax.xlane.f32.xlu0 %v1136
        %v1138 = vpop.xlane.xlu0 %1137
        %v1139 = vsel %vm977, %v1133, -inf
        %1140 = vmax.xlane.f32.xlu0 %v1139
        %v1141 = vpop.xlane.xlu0 %1140
        %v1142 = vsub.f32 %v1107, %v1138
        %v1143 = vsub.f32 %v1133, %v1141
        %v1144 = vmul.f32 %v1142, 1.442695
        %v1145 = vpow.pop %v1144
        %v1146 = vmul.f32 %v1143, 1.442695
        %v1147 = vpow.pop %v1146
        %v1148 = vsel %vm977, %v1145, 0.0
        %1149 = vadd.xlane.f32.xlu0 %v1148
        %v1150 = vpop.xlane.xlu0 %1149
        %v1151 = vsel %vm977, %v1147, 0.0
        %1152 = vadd.xlane.f32.xlu0 %v1151
        %v1153 = vpop.xlane.xlu0 %1152
        %v1154 = vrcp.pop %v1150
        %v1155 = vrcp.pop %v1153
        %v1156 = vmul.f32 %v1145, %v1154
        %v1157 = vmul.f32 %v1147, %v1155
        %v1158 = vpack.c.bf16 %v1156, %v1156
        %v1159 = vpack.c.bf16 %v1157, %v1157
        %v1161 = vunpack.c.l.b16 %v970
        %v1162 = vpack.c.b16 %v1161, %v1161
        %1163 = vrot.lane.b32.xlu0 %v1162, 120
        %v1164 = vpop.permute.xlu0 %1163
        %v1166 = vsel %vm977, %v1158, 0
        %v1169 = vsel %vm1048, %v1164, 0
        %1171 = vmatpush.bf16.msra.mxu0 0
        %1172 = vmatpush.bf16.msra.mxu0 0
        %1173 = vmatpush.bf16.msra.mxu0 0
        %1174 = vmatpush.bf16.msra.mxu0 0
        %1175 = vmatpush.bf16.msra.mxu0 0
        %1176 = vmatpush.bf16.msra.mxu0 0
        %1177 = vmatpush.bf16.msra.mxu0 0
        %1178 = vmatpush.bf16.msra.mxu0 %v1169
        %1179 = vmatmul.bf16.gmra.mxu0 %v1166
        %v1180 = vpop.f32.mrf.mxu0
        %v1181 = vadd.f32 0.0, %v1180
        %v1182 = vpop.f32.mrf.mxu0
        %1183 = vdwg.mxu0
        %v1185 = vunpack.c.l.b16 %v971
        %v1186 = vpack.c.b16 %v1185, %v1185
        %1187 = vrot.lane.b32.xlu0 %v1186, 120
        %v1188 = vpop.permute.xlu0 %1187
        %v1190 = vsel %vm977, %v1159, 0
        %v1193 = vsel %vm1048, %v1188, 0
        %1195 = vmatpush.bf16.msra.mxu0 0
        %1196 = vmatpush.bf16.msra.mxu0 0
        %1197 = vmatpush.bf16.msra.mxu0 0
        %1198 = vmatpush.bf16.msra.mxu0 0
        %1199 = vmatpush.bf16.msra.mxu0 0
        %1200 = vmatpush.bf16.msra.mxu0 0
        %1201 = vmatpush.bf16.msra.mxu0 0
        %1202 = vmatpush.bf16.msra.mxu0 %v1193
        %1203 = vmatmul.bf16.gmra.mxu0 %v1190
        %v1204 = vpop.f32.mrf.mxu0
        %v1205 = vadd.f32 0.0, %v1204
        %v1206 = vpop.f32.mrf.mxu0
        %1207 = vdwg.mxu0
        %1208 = vrot.lane.b32.xlu0 %v1086, 112
        %v1209 = vpop.permute.xlu0 %1208
        %1210 = vrot.lane.b32.xlu0 %v974, 80
        %v1211 = vpop.permute.xlu0 %1210
        %v1213 = vsel %vm977, %v1209, 0
        %v1216 = vsel %vm977, %v1211, 0
        %1218 = vmatpush.bf16.xpose.msra.mxu0 0
        %1219 = vmatpush.bf16.xpose.msra.mxu0 0
        %1220 = vmatpush.bf16.xpose.msra.mxu0 0
        %1221 = vmatpush.bf16.xpose.msra.mxu0 0
        %1222 = vmatpush.bf16.xpose.msra.mxu0 0
        %1223 = vmatpush.bf16.xpose.msra.mxu0 0
        %1224 = vmatpush.bf16.xpose.msra.mxu0 0
        %1225 = vmatpush.bf16.xpose.msra.mxu0 %v1216
        %1226 = vmatmul.bf16.gmra.mxu0 %v1213
        %v1227 = vpop.f32.mrf.mxu0
        %v1228 = vadd.f32 0.0, %v1227
        %v1229 = vpop.f32.mrf.mxu0
        %1230 = vdwg.mxu0
        %1231 = vrot.lane.b32.xlu0 %v1112, 112
        %v1232 = vpop.permute.xlu0 %1231
        %1233 = vrot.lane.b32.xlu0 %v999, 80
        %v1234 = vpop.permute.xlu0 %1233
        %v1236 = vsel %vm977, %v1232, 0
        %v1239 = vsel %vm977, %v1234, 0
        %1241 = vmatpush.bf16.xpose.msra.mxu0 0
        %1242 = vmatpush.bf16.xpose.msra.mxu0 0
        %1243 = vmatpush.bf16.xpose.msra.mxu0 0
        %1244 = vmatpush.bf16.xpose.msra.mxu0 0
        %1245 = vmatpush.bf16.xpose.msra.mxu0 0
        %1246 = vmatpush.bf16.xpose.msra.mxu0 0
        %1247 = vmatpush.bf16.xpose.msra.mxu0 0
        %1248 = vmatpush.bf16.xpose.msra.mxu0 %v1239
        %1249 = vmatmul.bf16.gmra.mxu0 %v1236
        %v1250 = vpop.f32.mrf.mxu0
        %v1251 = vadd.f32 0.0, %v1250
        %v1252 = vpop.f32.mrf.mxu0
        %1253 = vdwg.mxu0
        %v1254 = vsel %vm977, %v1228, -inf
        %1255 = vmax.xlane.f32.xlu0 %v1254
        %v1256 = vpop.xlane.xlu0 %1255
        %v1257 = vsel %vm977, %v1251, -inf
        %1258 = vmax.xlane.f32.xlu0 %v1257
        %v1259 = vpop.xlane.xlu0 %1258
        %v1260 = vsub.f32 %v1228, %v1256
        %v1261 = vsub.f32 %v1251, %v1259
        %v1262 = vmul.f32 %v1260, 1.442695
        %v1263 = vpow.pop %v1262
        %v1264 = vmul.f32 %v1261, 1.442695
        %v1265 = vpow.pop %v1264
        %v1266 = vsel %vm977, %v1263, 0.0
        %1267 = vadd.xlane.f32.xlu0 %v1266
        %v1268 = vpop.xlane.xlu0 %1267
        %v1269 = vsel %vm977, %v1265, 0.0
        %1270 = vadd.xlane.f32.xlu0 %v1269
        %v1271 = vpop.xlane.xlu0 %1270
        %v1272 = vrcp.pop %v1268
        %v1273 = vrcp.pop %v1271
        %v1274 = vmul.f32 %v1263, %v1272
        %v1275 = vmul.f32 %v1265, %v1273
        %v1276 = vpack.c.bf16 %v1274, %v1274
        %v1277 = vpack.c.bf16 %v1275, %v1275
        %1278 = vrot.lane.b32.xlu0 %v1162, 112
        %v1279 = vpop.permute.xlu0 %1278
        %v1281 = vsel %vm977, %v1276, 0
        %v1284 = vsel %vm1048, %v1279, 0
        %1286 = vmatpush.bf16.msra.mxu0 0
        %1287 = vmatpush.bf16.msra.mxu0 0
        %1288 = vmatpush.bf16.msra.mxu0 0
        %1289 = vmatpush.bf16.msra.mxu0 0
        %1290 = vmatpush.bf16.msra.mxu0 0
        %1291 = vmatpush.bf16.msra.mxu0 0
        %1292 = vmatpush.bf16.msra.mxu0 0
        %1293 = vmatpush.bf16.msra.mxu0 %v1284
        %1294 = vmatmul.bf16.gmra.mxu0 %v1281
        %v1295 = vpop.f32.mrf.mxu0
        %v1296 = vadd.f32 0.0, %v1295
        %v1297 = vpop.f32.mrf.mxu0
        %1298 = vdwg.mxu0
        %1299 = vrot.lane.b32.xlu0 %v1186, 112
        %v1300 = vpop.permute.xlu0 %1299
        %v1302 = vsel %vm977, %v1277, 0
        %v1305 = vsel %vm1048, %v1300, 0
        %1307 = vmatpush.bf16.msra.mxu0 0
        %1308 = vmatpush.bf16.msra.mxu0 0
        %1309 = vmatpush.bf16.msra.mxu0 0
        %1310 = vmatpush.bf16.msra.mxu0 0
        %1311 = vmatpush.bf16.msra.mxu0 0
        %1312 = vmatpush.bf16.msra.mxu0 0
        %1313 = vmatpush.bf16.msra.mxu0 0
        %1314 = vmatpush.bf16.msra.mxu0 %v1305
        %1315 = vmatmul.bf16.gmra.mxu0 %v1302
        %v1316 = vpop.f32.mrf.mxu0
        %v1317 = vadd.f32 0.0, %v1316
        %v1318 = vpop.f32.mrf.mxu0
        %1319 = vdwg.mxu0
        %1320 = vrot.lane.b32.xlu0 %v1086, 104
        %v1321 = vpop.permute.xlu0 %1320
        %1322 = vrot.lane.b32.xlu0 %v974, 72
        %v1323 = vpop.permute.xlu0 %1322
        %v1325 = vsel %vm977, %v1321, 0
        %v1328 = vsel %vm977, %v1323, 0
        %1330 = vmatpush.bf16.xpose.msra.mxu0 0
        %1331 = vmatpush.bf16.xpose.msra.mxu0 0
        %1332 = vmatpush.bf16.xpose.msra.mxu0 0
        %1333 = vmatpush.bf16.xpose.msra.mxu0 0
        %1334 = vmatpush.bf16.xpose.msra.mxu0 0
        %1335 = vmatpush.bf16.xpose.msra.mxu0 0
        %1336 = vmatpush.bf16.xpose.msra.mxu0 0
        %1337 = vmatpush.bf16.xpose.msra.mxu0 %v1328
        %1338 = vmatmul.bf16.gmra.mxu0 %v1325
        %v1339 = vpop.f32.mrf.mxu0
        %v1340 = vadd.f32 0.0, %v1339
        %v1341 = vpop.f32.mrf.mxu0
        %1342 = vdwg.mxu0
        %1343 = vrot.lane.b32.xlu0 %v1112, 104
        %v1344 = vpop.permute.xlu0 %1343
        %1345 = vrot.lane.b32.xlu0 %v999, 72
        %v1346 = vpop.permute.xlu0 %1345
        %v1348 = vsel %vm977, %v1344, 0
        %v1351 = vsel %vm977, %v1346, 0
        %1353 = vmatpush.bf16.xpose.msra.mxu0 0
        %1354 = vmatpush.bf16.xpose.msra.mxu0 0
        %1355 = vmatpush.bf16.xpose.msra.mxu0 0
        %1356 = vmatpush.bf16.xpose.msra.mxu0 0
        %1357 = vmatpush.bf16.xpose.msra.mxu0 0
        %1358 = vmatpush.bf16.xpose.msra.mxu0 0
        %1359 = vmatpush.bf16.xpose.msra.mxu0 0
        %1360 = vmatpush.bf16.xpose.msra.mxu0 %v1351
        %1361 = vmatmul.bf16.gmra.mxu0 %v1348
        %v1362 = vpop.f32.mrf.mxu0
        %v1363 = vadd.f32 0.0, %v1362
        %v1364 = vpop.f32.mrf.mxu0
        %1365 = vdwg.mxu0
        %v1366 = vsel %vm977, %v1340, -inf
        %1367 = vmax.xlane.f32.xlu0 %v1366
        %v1368 = vpop.xlane.xlu0 %1367
        %v1369 = vsel %vm977, %v1363, -inf
        %1370 = vmax.xlane.f32.xlu0 %v1369
        %v1371 = vpop.xlane.xlu0 %1370
        %v1372 = vsub.f32 %v1340, %v1368
        %v1373 = vsub.f32 %v1363, %v1371
        %v1374 = vmul.f32 %v1372, 1.442695
        %v1375 = vpow.pop %v1374
        %v1376 = vmul.f32 %v1373, 1.442695
        %v1377 = vpow.pop %v1376
        %v1378 = vsel %vm977, %v1375, 0.0
        %1379 = vadd.xlane.f32.xlu0 %v1378
        %v1380 = vpop.xlane.xlu0 %1379
        %v1381 = vsel %vm977, %v1377, 0.0
        %1382 = vadd.xlane.f32.xlu0 %v1381
        %v1383 = vpop.xlane.xlu0 %1382
        %v1384 = vrcp.pop %v1380
        %v1385 = vrcp.pop %v1383
        %v1386 = vmul.f32 %v1375, %v1384
        %v1387 = vmul.f32 %v1377, %v1385
        %v1388 = vpack.c.bf16 %v1386, %v1386
        %v1389 = vpack.c.bf16 %v1387, %v1387
        %1390 = vrot.lane.b32.xlu0 %v1162, 104
        %v1391 = vpop.permute.xlu0 %1390
        %v1393 = vsel %vm977, %v1388, 0
        %v1396 = vsel %vm1048, %v1391, 0
        %1398 = vmatpush.bf16.msra.mxu0 0
        %1399 = vmatpush.bf16.msra.mxu0 0
        %1400 = vmatpush.bf16.msra.mxu0 0
        %1401 = vmatpush.bf16.msra.mxu0 0
        %1402 = vmatpush.bf16.msra.mxu0 0
        %1403 = vmatpush.bf16.msra.mxu0 0
        %1404 = vmatpush.bf16.msra.mxu0 0
        %1405 = vmatpush.bf16.msra.mxu0 %v1396
        %1406 = vmatmul.bf16.gmra.mxu0 %v1393
        %v1407 = vpop.f32.mrf.mxu0
        %v1408 = vadd.f32 0.0, %v1407
        %v1409 = vpop.f32.mrf.mxu0
        %1410 = vdwg.mxu0
        %1411 = vrot.lane.b32.xlu0 %v1186, 104
        %v1412 = vpop.permute.xlu0 %1411
        %v1414 = vsel %vm977, %v1389, 0
        %v1417 = vsel %vm1048, %v1412, 0
        %1419 = vmatpush.bf16.msra.mxu0 0
        %1420 = vmatpush.bf16.msra.mxu0 0
        %1421 = vmatpush.bf16.msra.mxu0 0
        %1422 = vmatpush.bf16.msra.mxu0 0
        %1423 = vmatpush.bf16.msra.mxu0 0
        %1424 = vmatpush.bf16.msra.mxu0 0
        %1425 = vmatpush.bf16.msra.mxu0 0
        %1426 = vmatpush.bf16.msra.mxu0 %v1417
        %1427 = vmatmul.bf16.gmra.mxu0 %v1414
        %v1428 = vpop.f32.mrf.mxu0
        %v1429 = vadd.f32 0.0, %v1428
        %v1430 = vpop.f32.mrf.mxu0
        %1431 = vdwg.mxu0
        %1434 = vrot.lane.b32.xlu0 %v1181, 8
        %v1435 = vpop.permute.xlu0 %1434
        %1436 = vrot.lane.b32.xlu0 %v1205, 8
        %v1437 = vpop.permute.xlu0 %1436
        %1442 = vrot.lane.b32.xlu0 %v1296, 16
        %v1443 = vpop.permute.xlu0 %1442
        %1444 = vrot.lane.b32.xlu0 %v1317, 16
        %v1445 = vpop.permute.xlu0 %1444
        %1450 = vrot.lane.b32.xlu0 %v1408, 24
        %v1451 = vpop.permute.xlu0 %1450
        %1452 = vrot.lane.b32.xlu0 %v1429, 24
        %v1453 = vpop.permute.xlu0 %1452
        %v1456 = vsel %vm977, %v1062, %v1435
        %v1457 = vsel %vm977, %v1081, %v1437
        %vm1458 = vcmask 130048
        %v1459 = vsel %vm1458, %v1456, %v1443
        %v1460 = vsel %vm1458, %v1457, %v1445
        %vm1461 = vcmask 195584
        %v1462 = vsel %vm1461, %v1459, %v1451
        %v1463 = vsel %vm1461, %v1460, %v1453
        %v1464 = vld [vmem:[%s702] sm:$0xf]
        %v1465 = vld [vmem:[%s702 + $0x4] sm:$0xf]
        %v1466 = vld [vmem:[%s702 + $0x8] sm:$0xf]
        %v1467 = vld [vmem:[%s702 + $0xc] sm:$0xf]
        %v1468 = vpack.c.bf16 %v1463, %v1462
        %v1469 = vperm.slane %v886, 1
        %v1474 = vunpack.c.l.b16 %v1464
        %v1475 = vunpack.c.l.b16 %v1465
        %v1476 = vunpack.c.l.b16 %v1466
        %v1477 = vunpack.c.l.b16 %v1467
        %v1478 = vpack.c.b16 %v1475, %v1474
        %v1479 = vpack.c.b16 %v1477, %v1476
        %v1483 = vsel %vm911, %v1468, 0
        %1485 = vmatpush.bf16.msra.mxu0 0
        %1486 = vmatpush.bf16.msra.mxu0 0
        %1487 = vmatpush.bf16.msra.mxu0 0
        %1488 = vmatpush.bf16.msra.mxu0 0
        %1489 = vmatpush.bf16.msra.mxu0 0
        %1490 = vmatpush.bf16.msra.mxu0 0
        %1491 = vmatpush.bf16.msra.mxu0 %v1479
        %1492 = vmatpush.bf16.msra.mxu0 %v1478
        %1493 = vmatmul.bf16.gmra.mxu0 %v1483
        %v1494 = vpop.f32.mrf.mxu0
        %v1495 = vadd.f32 %v1469, %v1494
        %v1496 = vpop.f32.mrf.mxu0
        %v1497 = vadd.f32 %v1469, %v1496
        %1498 = vdwg.mxu0
        %v1499 = vadd.f32 %v874, %v1495
        %v1500 = vadd.f32 %v875, %v1497
        %v1501 = vsel %vm911, %v1499, 0.0
        %1502 = vadd.xlane.f32.xlu0 %v1501
        %v1503 = vpop.xlane.xlu0 %1502
        %v1504 = vsel %vm911, %v1500, 0.0
        %1505 = vadd.xlane.f32.xlu0 %v1504
        %v1506 = vpop.xlane.xlu0 %1505
        %v1507 = vrcp.pop 32.0
        %v1508 = vmul.f32 32.0, %v1507
        %v1509 = vsub.f32 1.0, %v1508
        %v1510 = vmul.f32 %v1507, %v1509
        %v1511 = vadd.f32 %v1507, %v1510
        %vm1512 = vweird.f32 %v1507
        %v1513 = vsel %vm1512, %v1507, %v1511
        %v1514 = vmul.f32 %v1503, %v1513
        %v1515 = vmul.f32 %v1506, %v1513
        %v1516 = vsub.f32 %v1499, %v1514
        %v1517 = vsub.f32 %v1500, %v1515
        %v1518 = vmul.f32 %v1516, %v1516
        %v1519 = vmul.f32 %v1517, %v1517
        %v1520 = vsel %vm911, %v1518, 0.0
        %1521 = vadd.xlane.f32.xlu0 %v1520
        %v1522 = vpop.xlane.xlu0 %1521
        %v1523 = vsel %vm911, %v1519, 0.0
        %1524 = vadd.xlane.f32.xlu0 %v1523
        %v1525 = vpop.xlane.xlu0 %1524
        %v1526 = vmul.f32 %v1522, %v1513
        %v1527 = vmul.f32 %v1525, %v1513
        %v1528 = vadd.f32 %v1526, 1e-05
        %v1529 = vadd.f32 %v1527, 1e-05
        %v1530 = vrsqrt.pop %v1528
        %v1531 = vmul.f32 %v1530, %v1528
        %v1532 = vmul.f32 %v1531, %v1530
        %v1533 = vmul.f32 0.5, %v1532
        %v1534 = vsub.f32 1.5, %v1533
        %v1535 = vmul.f32 %v1530, %v1534
        %vm1536 = vweird.f32 %v1528
        %vm1537 = vweird.f32 %v1530
        %vm1538 = vmor %vm1536, %vm1537
        %v1539 = vsel %vm1538, %v1530, %v1535
        %v1540 = vrsqrt.pop %v1529
        %v1541 = vmul.f32 %v1540, %v1529
        %v1542 = vmul.f32 %v1541, %v1540
        %v1543 = vmul.f32 0.5, %v1542
        %v1544 = vsub.f32 1.5, %v1543
        %v1545 = vmul.f32 %v1540, %v1544
        %vm1546 = vweird.f32 %v1529
        %vm1547 = vweird.f32 %v1540
        %vm1548 = vmor %vm1546, %vm1547
        %v1549 = vsel %vm1548, %v1540, %v1545
        %v1550 = vmul.f32 %v1516, %v1539
        %v1551 = vmul.f32 %v1517, %v1549
        %v1552 = vperm.slane %v886, 7
        %v1553 = vmul.f32 %v1550, %v1552
        %v1554 = vmul.f32 %v1551, %v1552
        %v1555 = vperm.slane %v887, 0
        %v1556 = vadd.f32 %v1553, %v1555
        %v1557 = vadd.f32 %v1554, %v1555
        %v1558 = vadd.f32 %v1556, %v876
        %v1559 = vadd.f32 %v1557, %v877
        %v1560 = vld [vmem:[%s712] sm:$0xf]
        %v1561 = vld [vmem:[%s712 + $0x4] sm:$0xf]
        %v1562 = vld [vmem:[%s712 + $0x8] sm:$0xf]
        %v1563 = vld [vmem:[%s712 + $0xc] sm:$0xf]
        %v1564 = vpack.c.bf16 %v1559, %v1558
        %v1565 = vperm.slane %v886, 2
        %v1570 = vunpack.c.l.b16 %v1560
        %v1571 = vunpack.c.l.b16 %v1561
        %v1572 = vunpack.c.l.b16 %v1562
        %v1573 = vunpack.c.l.b16 %v1563
        %v1574 = vpack.c.b16 %v1571, %v1570
        %v1575 = vpack.c.b16 %v1573, %v1572
        %v1579 = vsel %vm911, %v1564, 0
        %1581 = vmatpush.bf16.msra.mxu0 0
        %1582 = vmatpush.bf16.msra.mxu0 0
        %1583 = vmatpush.bf16.msra.mxu0 0
        %1584 = vmatpush.bf16.msra.mxu0 0
        %1585 = vmatpush.bf16.msra.mxu0 0
        %1586 = vmatpush.bf16.msra.mxu0 0
        %1587 = vmatpush.bf16.msra.mxu0 %v1575
        %1588 = vmatpush.bf16.msra.mxu0 %v1574
        %1589 = vmatmul.bf16.gmra.mxu0 %v1579
        %v1590 = vpop.f32.mrf.mxu0
        %v1591 = vadd.f32 %v1565, %v1590
        %v1592 = vpop.f32.mrf.mxu0
        %v1593 = vadd.f32 %v1565, %v1592
        %1594 = vdwg.mxu0
        %v1595 = vld [vmem:[%s847] sm:$0xf]
        %v1596 = vld [vmem:[%s847 + $0x4] sm:$0xf]
        %v1597 = vld [vmem:[%s847 + $0x8] sm:$0xf]
        %v1598 = vld [vmem:[%s847 + $0xc] sm:$0xf]
        %v1599 = vpack.c.bf16 %v879, %v878
        %v1600 = vpack.c.bf16 %v881, %v880
        %v1601 = vperm.slane %v886, 3
        %v1606 = vunpack.c.l.b16 %v1595
        %v1607 = vunpack.c.l.b16 %v1596
        %v1608 = vunpack.c.l.b16 %v1597
        %v1609 = vunpack.c.l.b16 %v1598
        %v1610 = vpack.c.b16 %v1607, %v1606
        %v1611 = vpack.c.b16 %v1609, %v1608
        %v1615 = vsel %vm911, %v1599, 0
        %v1618 = vsel %vm911, %v1600, 0
        %1620 = vmatpush.bf16.msra.mxu0 0
        %1621 = vmatpush.bf16.msra.mxu0 0
        %1622 = vmatpush.bf16.msra.mxu0 0
        %1623 = vmatpush.bf16.msra.mxu0 0
        %1624 = vmatpush.bf16.msra.mxu0 0
        %1625 = vmatpush.bf16.msra.mxu0 0
        %1626 = vmatpush.bf16.msra.mxu0 %v1611
        %1627 = vmatpush.bf16.msra.mxu0 %v1610
        %1628 = vmatmul.bf16.gmra.mxu0 %v1615
        %v1629 = vpop.f32.mrf.mxu0
        %v1630 = vadd.f32 %v1601, %v1629
        %v1631 = vpop.f32.mrf.mxu0
        %v1632 = vadd.f32 %v1601, %v1631
        %1633 = vmatmul.bf16.gmra.mxu0 %v1618
        %v1634 = vpop.f32.mrf.mxu0
        %v1635 = vadd.f32 %v1601, %v1634
        %v1636 = vpop.f32.mrf.mxu0
        %v1637 = vadd.f32 %v1601, %v1636
        %1638 = vdwg.mxu0
        %v1639 = vld [vmem:[%s722] sm:$0xf]
        %v1640 = vld [vmem:[%s722 + $0x4] sm:$0xf]
        %v1641 = vld [vmem:[%s722 + $0x8] sm:$0xf]
        %v1642 = vld [vmem:[%s722 + $0xc] sm:$0xf]
        %v1643 = vpack.c.bf16 %v883, %v882
        %v1644 = vpack.c.bf16 %v885, %v884
        %v1645 = vperm.slane %v886, 4
        %v1650 = vunpack.c.l.b16 %v1639
        %v1651 = vunpack.c.l.b16 %v1640
        %v1652 = vunpack.c.l.b16 %v1641
        %v1653 = vunpack.c.l.b16 %v1642
        %v1654 = vpack.c.b16 %v1651, %v1650
        %v1655 = vpack.c.b16 %v1653, %v1652
        %v1659 = vsel %vm911, %v1643, 0
        %v1662 = vsel %vm911, %v1644, 0
        %1664 = vmatpush.bf16.msra.mxu0 0
        %1665 = vmatpush.bf16.msra.mxu0 0
        %1666 = vmatpush.bf16.msra.mxu0 0
        %1667 = vmatpush.bf16.msra.mxu0 0
        %1668 = vmatpush.bf16.msra.mxu0 0
        %1669 = vmatpush.bf16.msra.mxu0 0
        %1670 = vmatpush.bf16.msra.mxu0 %v1655
        %1671 = vmatpush.bf16.msra.mxu0 %v1654
        %1672 = vmatmul.bf16.gmra.mxu0 %v1659
        %v1673 = vpop.f32.mrf.mxu0
        %v1674 = vadd.f32 %v1645, %v1673
        %v1675 = vpop.f32.mrf.mxu0
        %v1676 = vadd.f32 %v1645, %v1675
        %1677 = vmatmul.bf16.gmra.mxu0 %v1662
        %v1678 = vpop.f32.mrf.mxu0
        %v1679 = vadd.f32 %v1645, %v1678
        %v1680 = vpop.f32.mrf.mxu0
        %v1681 = vadd.f32 %v1645, %v1680
        %1682 = vdwg.mxu0
        %v1683 = vmul.f32 %v1591, 0.35355338
        %v1684 = vmul.f32 %v1593, 0.35355338
        %v1685 = vpack.c.bf16 %v1683, %v1683
        %v1686 = vpack.c.bf16 %v1684, %v1684
        %v1687 = vpack.c.bf16 %v1630, %v1630
        %v1688 = vpack.c.bf16 %v1632, %v1632
        %v1689 = vpack.c.bf16 %v1635, %v1635
        %v1690 = vpack.c.bf16 %v1637, %v1637
        %v1691 = vpack.c.bf16 %v1674, %v1674
        %v1692 = vpack.c.bf16 %v1676, %v1676
        %v1693 = vpack.c.bf16 %v1679, %v1679
        %v1694 = vpack.c.bf16 %v1681, %v1681
        %v1697 = vunpack.c.l.b16 %v1687
        %v1698 = vunpack.c.l.b16 %v1688
        %v1699 = vpack.c.b16 %v1698, %v1697
        %v1701 = vsel %vm977, %v1685, 0
        %v1704 = vsel %vm977, %v1699, 0
        %1706 = vmatpush.bf16.xpose.msra.mxu0 0
        %1707 = vmatpush.bf16.xpose.msra.mxu0 0
        %1708 = vmatpush.bf16.xpose.msra.mxu0 0
        %1709 = vmatpush.bf16.xpose.msra.mxu0 0
        %1710 = vmatpush.bf16.xpose.msra.mxu0 0
        %1711 = vmatpush.bf16.xpose.msra.mxu0 0
        %1712 = vmatpush.bf16.xpose.msra.mxu0 0
        %1713 = vmatpush.bf16.xpose.msra.mxu0 %v1704
        %1714 = vmatmul.bf16.gmra.mxu0 %v1701
        %v1715 = vpop.f32.mrf.mxu0
        %v1716 = vadd.f32 0.0, %v1715
        %v1717 = vpop.f32.mrf.mxu0
        %1718 = vdwg.mxu0
        %v1721 = vunpack.c.l.b16 %v1689
        %v1722 = vunpack.c.l.b16 %v1690
        %v1723 = vpack.c.b16 %v1722, %v1721
        %v1725 = vsel %vm977, %v1686, 0
        %v1728 = vsel %vm977, %v1723, 0
        %1730 = vmatpush.bf16.xpose.msra.mxu0 0
        %1731 = vmatpush.bf16.xpose.msra.mxu0 0
        %1732 = vmatpush.bf16.xpose.msra.mxu0 0
        %1733 = vmatpush.bf16.xpose.msra.mxu0 0
        %1734 = vmatpush.bf16.xpose.msra.mxu0 0
        %1735 = vmatpush.bf16.xpose.msra.mxu0 0
        %1736 = vmatpush.bf16.xpose.msra.mxu0 0
        %1737 = vmatpush.bf16.xpose.msra.mxu0 %v1728
        %1738 = vmatmul.bf16.gmra.mxu0 %v1725
        %v1739 = vpop.f32.mrf.mxu0
        %v1740 = vadd.f32 0.0, %v1739
        %v1741 = vpop.f32.mrf.mxu0
        %1742 = vdwg.mxu0
        %v1743 = vsel %vm1458, %v1716, -inf
        %1744 = vmax.xlane.f32.xlu0 %v1743
        %v1745 = vpop.xlane.xlu0 %1744
        %v1746 = vsel %vm1458, %v1740, -inf
        %1747 = vmax.xlane.f32.xlu0 %v1746
        %v1748 = vpop.xlane.xlu0 %1747
        %v1749 = vsub.f32 %v1716, %v1745
        %v1750 = vsub.f32 %v1740, %v1748
        %v1751 = vmul.f32 %v1749, 1.442695
        %v1752 = vpow.pop %v1751
        %v1753 = vmul.f32 %v1750, 1.442695
        %v1754 = vpow.pop %v1753
        %v1755 = vsel %vm1458, %v1752, 0.0
        %1756 = vadd.xlane.f32.xlu0 %v1755
        %v1757 = vpop.xlane.xlu0 %1756
        %v1758 = vsel %vm1458, %v1754, 0.0
        %1759 = vadd.xlane.f32.xlu0 %v1758
        %v1760 = vpop.xlane.xlu0 %1759
        %v1761 = vrcp.pop %v1757
        %v1762 = vrcp.pop %v1760
        %v1763 = vmul.f32 %v1752, %v1761
        %v1764 = vmul.f32 %v1754, %v1762
        %v1765 = vpack.c.bf16 %v1763, %v1763
        %v1766 = vpack.c.bf16 %v1764, %v1764
        %v1769 = vunpack.c.l.b16 %v1691
        %v1770 = vunpack.c.l.b16 %v1692
        %v1771 = vpack.c.b16 %v1770, %v1769
        %v1774 = vsel %vm1458, %v1765, 0
        %1776 = vmatpush.bf16.msra.mxu0 0
        %1777 = vmatpush.bf16.msra.mxu0 0
        %1778 = vmatpush.bf16.msra.mxu0 0
        %1779 = vmatpush.bf16.msra.mxu0 0
        %1780 = vmatpush.bf16.msra.mxu0 0
        %1781 = vmatpush.bf16.msra.mxu0 0
        %1782 = vmatpush.bf16.msra.mxu0 0
        %1783 = vmatpush.bf16.msra.mxu0 %v1771
        %1784 = vmatmul.bf16.gmra.mxu0 %v1774
        %v1785 = vpop.f32.mrf.mxu0
        %v1786 = vadd.f32 0.0, %v1785
        %v1787 = vpop.f32.mrf.mxu0
        %1788 = vdwg.mxu0
        %v1791 = vunpack.c.l.b16 %v1693
        %v1792 = vunpack.c.l.b16 %v1694
        %v1793 = vpack.c.b16 %v1792, %v1791
        %v1796 = vsel %vm1458, %v1766, 0
        %1798 = vmatpush.bf16.msra.mxu0 0
        %1799 = vmatpush.bf16.msra.mxu0 0
        %1800 = vmatpush.bf16.msra.mxu0 0
        %1801 = vmatpush.bf16.msra.mxu0 0
        %1802 = vmatpush.bf16.msra.mxu0 0
        %1803 = vmatpush.bf16.msra.mxu0 0
        %1804 = vmatpush.bf16.msra.mxu0 0
        %1805 = vmatpush.bf16.msra.mxu0 %v1793
        %1806 = vmatmul.bf16.gmra.mxu0 %v1796
        %v1807 = vpop.f32.mrf.mxu0
        %v1808 = vadd.f32 0.0, %v1807
        %v1809 = vpop.f32.mrf.mxu0
        %1810 = vdwg.mxu0
        %v1812 = vunpack.c.l.b16 %v1685
        %v1813 = vpack.c.b16 %v1812, %v1812
        %1814 = vrot.lane.b32.xlu0 %v1813, 120
        %v1815 = vpop.permute.xlu0 %1814
        %1816 = vrot.lane.b32.xlu0 %v1699, 120
        %v1817 = vpop.permute.xlu0 %1816
        %v1819 = vsel %vm977, %v1815, 0
        %v1822 = vsel %vm977, %v1817, 0
        %1824 = vmatpush.bf16.xpose.msra.mxu0 0
        %1825 = vmatpush.bf16.xpose.msra.mxu0 0
        %1826 = vmatpush.bf16.xpose.msra.mxu0 0
        %1827 = vmatpush.bf16.xpose.msra.mxu0 0
        %1828 = vmatpush.bf16.xpose.msra.mxu0 0
        %1829 = vmatpush.bf16.xpose.msra.mxu0 0
        %1830 = vmatpush.bf16.xpose.msra.mxu0 0
        %1831 = vmatpush.bf16.xpose.msra.mxu0 %v1822
        %1832 = vmatmul.bf16.gmra.mxu0 %v1819
        %v1833 = vpop.f32.mrf.mxu0
        %v1834 = vadd.f32 0.0, %v1833
        %v1835 = vpop.f32.mrf.mxu0
        %1836 = vdwg.mxu0
        %v1838 = vunpack.c.l.b16 %v1686
        %v1839 = vpack.c.b16 %v1838, %v1838
        %1840 = vrot.lane.b32.xlu0 %v1839, 120
        %v1841 = vpop.permute.xlu0 %1840
        %1842 = vrot.lane.b32.xlu0 %v1723, 120
        %v1843 = vpop.permute.xlu0 %1842
        %v1845 = vsel %vm977, %v1841, 0
        %v1848 = vsel %vm977, %v1843, 0
        %1850 = vmatpush.bf16.xpose.msra.mxu0 0
        %1851 = vmatpush.bf16.xpose.msra.mxu0 0
        %1852 = vmatpush.bf16.xpose.msra.mxu0 0
        %1853 = vmatpush.bf16.xpose.msra.mxu0 0
        %1854 = vmatpush.bf16.xpose.msra.mxu0 0
        %1855 = vmatpush.bf16.xpose.msra.mxu0 0
        %1856 = vmatpush.bf16.xpose.msra.mxu0 0
        %1857 = vmatpush.bf16.xpose.msra.mxu0 %v1848
        %1858 = vmatmul.bf16.gmra.mxu0 %v1845
        %v1859 = vpop.f32.mrf.mxu0
        %v1860 = vadd.f32 0.0, %v1859
        %v1861 = vpop.f32.mrf.mxu0
        %1862 = vdwg.mxu0
        %v1863 = vsel %vm1458, %v1834, -inf
        %1864 = vmax.xlane.f32.xlu0 %v1863
        %v1865 = vpop.xlane.xlu0 %1864
        %v1866 = vsel %vm1458, %v1860, -inf
        %1867 = vmax.xlane.f32.xlu0 %v1866
        %v1868 = vpop.xlane.xlu0 %1867
        %v1869 = vsub.f32 %v1834, %v1865
        %v1870 = vsub.f32 %v1860, %v1868
        %v1871 = vmul.f32 %v1869, 1.442695
        %v1872 = vpow.pop %v1871
        %v1873 = vmul.f32 %v1870, 1.442695
        %v1874 = vpow.pop %v1873
        %v1875 = vsel %vm1458, %v1872, 0.0
        %1876 = vadd.xlane.f32.xlu0 %v1875
        %v1877 = vpop.xlane.xlu0 %1876
        %v1878 = vsel %vm1458, %v1874, 0.0
        %1879 = vadd.xlane.f32.xlu0 %v1878
        %v1880 = vpop.xlane.xlu0 %1879
        %v1881 = vrcp.pop %v1877
        %v1882 = vrcp.pop %v1880
        %v1883 = vmul.f32 %v1872, %v1881
        %v1884 = vmul.f32 %v1874, %v1882
        %v1885 = vpack.c.bf16 %v1883, %v1883
        %v1886 = vpack.c.bf16 %v1884, %v1884
        %1887 = vrot.lane.b32.xlu0 %v1771, 120
        %v1888 = vpop.permute.xlu0 %1887
        %v1891 = vsel %vm1458, %v1885, 0
        %1893 = vmatpush.bf16.msra.mxu0 0
        %1894 = vmatpush.bf16.msra.mxu0 0
        %1895 = vmatpush.bf16.msra.mxu0 0
        %1896 = vmatpush.bf16.msra.mxu0 0
        %1897 = vmatpush.bf16.msra.mxu0 0
        %1898 = vmatpush.bf16.msra.mxu0 0
        %1899 = vmatpush.bf16.msra.mxu0 0
        %1900 = vmatpush.bf16.msra.mxu0 %v1888
        %1901 = vmatmul.bf16.gmra.mxu0 %v1891
        %v1902 = vpop.f32.mrf.mxu0
        %v1903 = vadd.f32 0.0, %v1902
        %v1904 = vpop.f32.mrf.mxu0
        %1905 = vdwg.mxu0
        %1906 = vrot.lane.b32.xlu0 %v1793, 120
        %v1907 = vpop.permute.xlu0 %1906
        %v1910 = vsel %vm1458, %v1886, 0
        %1912 = vmatpush.bf16.msra.mxu0 0
        %1913 = vmatpush.bf16.msra.mxu0 0
        %1914 = vmatpush.bf16.msra.mxu0 0
        %1915 = vmatpush.bf16.msra.mxu0 0
        %1916 = vmatpush.bf16.msra.mxu0 0
        %1917 = vmatpush.bf16.msra.mxu0 0
        %1918 = vmatpush.bf16.msra.mxu0 0
        %1919 = vmatpush.bf16.msra.mxu0 %v1907
        %1920 = vmatmul.bf16.gmra.mxu0 %v1910
        %v1921 = vpop.f32.mrf.mxu0
        %v1922 = vadd.f32 0.0, %v1921
        %v1923 = vpop.f32.mrf.mxu0
        %1924 = vdwg.mxu0
        %1925 = vrot.lane.b32.xlu0 %v1813, 112
        %v1926 = vpop.permute.xlu0 %1925
        %1927 = vrot.lane.b32.xlu0 %v1699, 112
        %v1928 = vpop.permute.xlu0 %1927
        %v1930 = vsel %vm977, %v1926, 0
        %v1933 = vsel %vm977, %v1928, 0
        %1935 = vmatpush.bf16.xpose.msra.mxu0 0
        %1936 = vmatpush.bf16.xpose.msra.mxu0 0
        %1937 = vmatpush.bf16.xpose.msra.mxu0 0
        %1938 = vmatpush.bf16.xpose.msra.mxu0 0
        %1939 = vmatpush.bf16.xpose.msra.mxu0 0
        %1940 = vmatpush.bf16.xpose.msra.mxu0 0
        %1941 = vmatpush.bf16.xpose.msra.mxu0 0
        %1942 = vmatpush.bf16.xpose.msra.mxu0 %v1933
        %1943 = vmatmul.bf16.gmra.mxu0 %v1930
        %v1944 = vpop.f32.mrf.mxu0
        %v1945 = vadd.f32 0.0, %v1944
        %v1946 = vpop.f32.mrf.mxu0
        %1947 = vdwg.mxu0
        %1948 = vrot.lane.b32.xlu0 %v1839, 112
        %v1949 = vpop.permute.xlu0 %1948
        %1950 = vrot.lane.b32.xlu0 %v1723, 112
        %v1951 = vpop.permute.xlu0 %1950
        %v1953 = vsel %vm977, %v1949, 0
        %v1956 = vsel %vm977, %v1951, 0
        %1958 = vmatpush.bf16.xpose.msra.mxu0 0
        %1959 = vmatpush.bf16.xpose.msra.mxu0 0
        %1960 = vmatpush.bf16.xpose.msra.mxu0 0
        %1961 = vmatpush.bf16.xpose.msra.mxu0 0
        %1962 = vmatpush.bf16.xpose.msra.mxu0 0
        %1963 = vmatpush.bf16.xpose.msra.mxu0 0
        %1964 = vmatpush.bf16.xpose.msra.mxu0 0
        %1965 = vmatpush.bf16.xpose.msra.mxu0 %v1956
        %1966 = vmatmul.bf16.gmra.mxu0 %v1953
        %v1967 = vpop.f32.mrf.mxu0
        %v1968 = vadd.f32 0.0, %v1967
        %v1969 = vpop.f32.mrf.mxu0
        %1970 = vdwg.mxu0
        %v1971 = vsel %vm1458, %v1945, -inf
        %1972 = vmax.xlane.f32.xlu0 %v1971
        %v1973 = vpop.xlane.xlu0 %1972
        %v1974 = vsel %vm1458, %v1968, -inf
        %1975 = vmax.xlane.f32.xlu0 %v1974
        %v1976 = vpop.xlane.xlu0 %1975
        %v1977 = vsub.f32 %v1945, %v1973
        %v1978 = vsub.f32 %v1968, %v1976
        %v1979 = vmul.f32 %v1977, 1.442695
        %v1980 = vpow.pop %v1979
        %v1981 = vmul.f32 %v1978, 1.442695
        %v1982 = vpow.pop %v1981
        %v1983 = vsel %vm1458, %v1980, 0.0
        %1984 = vadd.xlane.f32.xlu0 %v1983
        %v1985 = vpop.xlane.xlu0 %1984
        %v1986 = vsel %vm1458, %v1982, 0.0
        %1987 = vadd.xlane.f32.xlu0 %v1986
        %v1988 = vpop.xlane.xlu0 %1987
        %v1989 = vrcp.pop %v1985
        %v1990 = vrcp.pop %v1988
        %v1991 = vmul.f32 %v1980, %v1989
        %v1992 = vmul.f32 %v1982, %v1990
        %v1993 = vpack.c.bf16 %v1991, %v1991
        %v1994 = vpack.c.bf16 %v1992, %v1992
        %1995 = vrot.lane.b32.xlu0 %v1771, 112
        %v1996 = vpop.permute.xlu0 %1995
        %v1999 = vsel %vm1458, %v1993, 0
        %2001 = vmatpush.bf16.msra.mxu0 0
        %2002 = vmatpush.bf16.msra.mxu0 0
        %2003 = vmatpush.bf16.msra.mxu0 0
        %2004 = vmatpush.bf16.msra.mxu0 0
        %2005 = vmatpush.bf16.msra.mxu0 0
        %2006 = vmatpush.bf16.msra.mxu0 0
        %2007 = vmatpush.bf16.msra.mxu0 0
        %2008 = vmatpush.bf16.msra.mxu0 %v1996
        %2009 = vmatmul.bf16.gmra.mxu0 %v1999
        %v2010 = vpop.f32.mrf.mxu0
        %v2011 = vadd.f32 0.0, %v2010
        %v2012 = vpop.f32.mrf.mxu0
        %2013 = vdwg.mxu0
        %2014 = vrot.lane.b32.xlu0 %v1793, 112
        %v2015 = vpop.permute.xlu0 %2014
        %v2018 = vsel %vm1458, %v1994, 0
        %2020 = vmatpush.bf16.msra.mxu0 0
        %2021 = vmatpush.bf16.msra.mxu0 0
        %2022 = vmatpush.bf16.msra.mxu0 0
        %2023 = vmatpush.bf16.msra.mxu0 0
        %2024 = vmatpush.bf16.msra.mxu0 0
        %2025 = vmatpush.bf16.msra.mxu0 0
        %2026 = vmatpush.bf16.msra.mxu0 0
        %2027 = vmatpush.bf16.msra.mxu0 %v2015
        %2028 = vmatmul.bf16.gmra.mxu0 %v2018
        %v2029 = vpop.f32.mrf.mxu0
        %v2030 = vadd.f32 0.0, %v2029
        %v2031 = vpop.f32.mrf.mxu0
        %2032 = vdwg.mxu0
        %2033 = vrot.lane.b32.xlu0 %v1813, 104
        %v2034 = vpop.permute.xlu0 %2033
        %2035 = vrot.lane.b32.xlu0 %v1699, 104
        %v2036 = vpop.permute.xlu0 %2035
        %v2038 = vsel %vm977, %v2034, 0
        %v2041 = vsel %vm977, %v2036, 0
        %2043 = vmatpush.bf16.xpose.msra.mxu0 0
        %2044 = vmatpush.bf16.xpose.msra.mxu0 0
        %2045 = vmatpush.bf16.xpose.msra.mxu0 0
        %2046 = vmatpush.bf16.xpose.msra.mxu0 0
        %2047 = vmatpush.bf16.xpose.msra.mxu0 0
        %2048 = vmatpush.bf16.xpose.msra.mxu0 0
        %2049 = vmatpush.bf16.xpose.msra.mxu0 0
        %2050 = vmatpush.bf16.xpose.msra.mxu0 %v2041
        %2051 = vmatmul.bf16.gmra.mxu0 %v2038
        %v2052 = vpop.f32.mrf.mxu0
        %v2053 = vadd.f32 0.0, %v2052
        %v2054 = vpop.f32.mrf.mxu0
        %2055 = vdwg.mxu0
        %2056 = vrot.lane.b32.xlu0 %v1839, 104
        %v2057 = vpop.permute.xlu0 %2056
        %2058 = vrot.lane.b32.xlu0 %v1723, 104
        %v2059 = vpop.permute.xlu0 %2058
        %v2061 = vsel %vm977, %v2057, 0
        %v2064 = vsel %vm977, %v2059, 0
        %2066 = vmatpush.bf16.xpose.msra.mxu0 0
        %2067 = vmatpush.bf16.xpose.msra.mxu0 0
        %2068 = vmatpush.bf16.xpose.msra.mxu0 0
        %2069 = vmatpush.bf16.xpose.msra.mxu0 0
        %2070 = vmatpush.bf16.xpose.msra.mxu0 0
        %2071 = vmatpush.bf16.xpose.msra.mxu0 0
        %2072 = vmatpush.bf16.xpose.msra.mxu0 0
        %2073 = vmatpush.bf16.xpose.msra.mxu0 %v2064
        %2074 = vmatmul.bf16.gmra.mxu0 %v2061
        %v2075 = vpop.f32.mrf.mxu0
        %v2076 = vadd.f32 0.0, %v2075
        %v2077 = vpop.f32.mrf.mxu0
        %2078 = vdwg.mxu0
        %v2079 = vsel %vm1458, %v2053, -inf
        %2080 = vmax.xlane.f32.xlu0 %v2079
        %v2081 = vpop.xlane.xlu0 %2080
        %v2082 = vsel %vm1458, %v2076, -inf
        %2083 = vmax.xlane.f32.xlu0 %v2082
        %v2084 = vpop.xlane.xlu0 %2083
        %v2085 = vsub.f32 %v2053, %v2081
        %v2086 = vsub.f32 %v2076, %v2084
        %v2087 = vmul.f32 %v2085, 1.442695
        %v2088 = vpow.pop %v2087
        %v2089 = vmul.f32 %v2086, 1.442695
        %v2090 = vpow.pop %v2089
        %v2091 = vsel %vm1458, %v2088, 0.0
        %2092 = vadd.xlane.f32.xlu0 %v2091
        %v2093 = vpop.xlane.xlu0 %2092
        %v2094 = vsel %vm1458, %v2090, 0.0
        %2095 = vadd.xlane.f32.xlu0 %v2094
        %v2096 = vpop.xlane.xlu0 %2095
        %v2097 = vrcp.pop %v2093
        %v2098 = vrcp.pop %v2096
        %v2099 = vmul.f32 %v2088, %v2097
        %v2100 = vmul.f32 %v2090, %v2098
        %v2101 = vpack.c.bf16 %v2099, %v2099
        %v2102 = vpack.c.bf16 %v2100, %v2100
        %2103 = vrot.lane.b32.xlu0 %v1771, 104
        %v2104 = vpop.permute.xlu0 %2103
        %v2107 = vsel %vm1458, %v2101, 0
        %2109 = vmatpush.bf16.msra.mxu0 0
        %2110 = vmatpush.bf16.msra.mxu0 0
        %2111 = vmatpush.bf16.msra.mxu0 0
        %2112 = vmatpush.bf16.msra.mxu0 0
        %2113 = vmatpush.bf16.msra.mxu0 0
        %2114 = vmatpush.bf16.msra.mxu0 0
        %2115 = vmatpush.bf16.msra.mxu0 0
        %2116 = vmatpush.bf16.msra.mxu0 %v2104
        %2117 = vmatmul.bf16.gmra.mxu0 %v2107
        %v2118 = vpop.f32.mrf.mxu0
        %v2119 = vadd.f32 0.0, %v2118
        %v2120 = vpop.f32.mrf.mxu0
        %2121 = vdwg.mxu0
        %2122 = vrot.lane.b32.xlu0 %v1793, 104
        %v2123 = vpop.permute.xlu0 %2122
        %v2126 = vsel %vm1458, %v2102, 0
        %2128 = vmatpush.bf16.msra.mxu0 0
        %2129 = vmatpush.bf16.msra.mxu0 0
        %2130 = vmatpush.bf16.msra.mxu0 0
        %2131 = vmatpush.bf16.msra.mxu0 0
        %2132 = vmatpush.bf16.msra.mxu0 0
        %2133 = vmatpush.bf16.msra.mxu0 0
        %2134 = vmatpush.bf16.msra.mxu0 0
        %2135 = vmatpush.bf16.msra.mxu0 %v2123
        %2136 = vmatmul.bf16.gmra.mxu0 %v2126
        %v2137 = vpop.f32.mrf.mxu0
        %v2138 = vadd.f32 0.0, %v2137
        %v2139 = vpop.f32.mrf.mxu0
        %2140 = vdwg.mxu0
        %2143 = vrot.lane.b32.xlu0 %v1903, 8
        %v2144 = vpop.permute.xlu0 %2143
        %2145 = vrot.lane.b32.xlu0 %v1922, 8
        %v2146 = vpop.permute.xlu0 %2145
        %2151 = vrot.lane.b32.xlu0 %v2011, 16
        %v2152 = vpop.permute.xlu0 %2151
        %2153 = vrot.lane.b32.xlu0 %v2030, 16
        %v2154 = vpop.permute.xlu0 %2153
        %2159 = vrot.lane.b32.xlu0 %v2119, 24
        %v2160 = vpop.permute.xlu0 %2159
        %2161 = vrot.lane.b32.xlu0 %v2138, 24
        %v2162 = vpop.permute.xlu0 %2161
        %v2165 = vsel %vm977, %v1786, %v2144
        %v2166 = vsel %vm977, %v1808, %v2146
        %v2167 = vsel %vm1458, %v2165, %v2152
        %v2168 = vsel %vm1458, %v2166, %v2154
        %v2169 = vsel %vm1461, %v2167, %v2160
        %v2170 = vsel %vm1461, %v2168, %v2162
        %v2171 = vld [vmem:[%s732] sm:$0xf]
        %v2172 = vld [vmem:[%s732 + $0x4] sm:$0xf]
        %v2173 = vld [vmem:[%s732 + $0x8] sm:$0xf]
        %v2174 = vld [vmem:[%s732 + $0xc] sm:$0xf]
        %v2175 = vpack.c.bf16 %v2170, %v2169
        %v2176 = vperm.slane %v886, 5
        %v2181 = vunpack.c.l.b16 %v2171
        %v2182 = vunpack.c.l.b16 %v2172
        %v2183 = vunpack.c.l.b16 %v2173
        %v2184 = vunpack.c.l.b16 %v2174
        %v2185 = vpack.c.b16 %v2182, %v2181
        %v2186 = vpack.c.b16 %v2184, %v2183
        %v2190 = vsel %vm911, %v2175, 0
        %2192 = vmatpush.bf16.msra.mxu0 0
        %2193 = vmatpush.bf16.msra.mxu0 0
        %2194 = vmatpush.bf16.msra.mxu0 0
        %2195 = vmatpush.bf16.msra.mxu0 0
        %2196 = vmatpush.bf16.msra.mxu0 0
        %2197 = vmatpush.bf16.msra.mxu0 0
        %2198 = vmatpush.bf16.msra.mxu0 %v2186
        %2199 = vmatpush.bf16.msra.mxu0 %v2185
        %2200 = vmatmul.bf16.gmra.mxu0 %v2190
        %v2201 = vpop.f32.mrf.mxu0
        %v2202 = vadd.f32 %v2176, %v2201
        %v2203 = vpop.f32.mrf.mxu0
        %v2204 = vadd.f32 %v2176, %v2203
        %2205 = vdwg.mxu0
        %v2206 = vadd.f32 %v1556, %v2202
        %v2207 = vadd.f32 %v1557, %v2204
        %v2208 = vsel %vm911, %v2206, 0.0
        %2209 = vadd.xlane.f32.xlu0 %v2208
        %v2210 = vpop.xlane.xlu0 %2209
        %v2211 = vsel %vm911, %v2207, 0.0
        %2212 = vadd.xlane.f32.xlu0 %v2211
        %v2213 = vpop.xlane.xlu0 %2212
        %v2214 = vmul.f32 %v2210, %v1513
        %v2215 = vmul.f32 %v2213, %v1513
        %v2216 = vsub.f32 %v2206, %v2214
        %v2217 = vsub.f32 %v2207, %v2215
        %v2218 = vmul.f32 %v2216, %v2216
        %v2219 = vmul.f32 %v2217, %v2217
        %v2220 = vsel %vm911, %v2218, 0.0
        %2221 = vadd.xlane.f32.xlu0 %v2220
        %v2222 = vpop.xlane.xlu0 %2221
        %v2223 = vsel %vm911, %v2219, 0.0
        %2224 = vadd.xlane.f32.xlu0 %v2223
        %v2225 = vpop.xlane.xlu0 %2224
        %v2226 = vmul.f32 %v2222, %v1513
        %v2227 = vmul.f32 %v2225, %v1513
        %v2228 = vadd.f32 %v2226, 1e-05
        %v2229 = vadd.f32 %v2227, 1e-05
        %v2230 = vrsqrt.pop %v2228
        %v2231 = vmul.f32 %v2230, %v2228
        %v2232 = vmul.f32 %v2231, %v2230
        %v2233 = vmul.f32 0.5, %v2232
        %v2234 = vsub.f32 1.5, %v2233
        %v2235 = vmul.f32 %v2230, %v2234
        %vm2236 = vweird.f32 %v2228
        %vm2237 = vweird.f32 %v2230
        %vm2238 = vmor %vm2236, %vm2237
        %v2239 = vsel %vm2238, %v2230, %v2235
        %v2240 = vrsqrt.pop %v2229
        %v2241 = vmul.f32 %v2240, %v2229
        %v2242 = vmul.f32 %v2241, %v2240
        %v2243 = vmul.f32 0.5, %v2242
        %v2244 = vsub.f32 1.5, %v2243
        %v2245 = vmul.f32 %v2240, %v2244
        %vm2246 = vweird.f32 %v2229
        %vm2247 = vweird.f32 %v2240
        %vm2248 = vmor %vm2246, %vm2247
        %v2249 = vsel %vm2248, %v2240, %v2245
        %v2250 = vmul.f32 %v2216, %v2239
        %v2251 = vmul.f32 %v2217, %v2249
        %v2252 = vperm.slane %v887, 1
        %v2253 = vmul.f32 %v2250, %v2252
        %v2254 = vmul.f32 %v2251, %v2252
        %v2255 = vperm.slane %v887, 2
        %v2256 = vadd.f32 %v2253, %v2255
        %v2257 = vadd.f32 %v2254, %v2255
        %v2258 = vld [vmem:[%s742] sm:$0xf]
        %v2259 = vld [vmem:[%s742 + $0x4] sm:$0xf]
        %v2260 = vld [vmem:[%s742 + $0x8] sm:$0xf]
        %v2261 = vld [vmem:[%s742 + $0xc] sm:$0xf]
        %v2262 = vpack.c.bf16 %v2257, %v2256
        %v2263 = vld [vmem:[%s863] sm:$0x1]
        %v2265 = vperm.slane %v2263, 0
        %v2271 = vunpack.c.l.b16 %v2258
        %v2272 = vunpack.c.l.b16 %v2259
        %v2273 = vunpack.c.l.b16 %v2260
        %v2274 = vunpack.c.l.b16 %v2261
        %v2275 = vpack.c.b16 %v2272, %v2271
        %v2276 = vpack.c.b16 %v2274, %v2273
        %v2280 = vsel %vm911, %v2262, 0
        %2282 = vmatpush.bf16.msra.mxu0 0
        %2283 = vmatpush.bf16.msra.mxu0 0
        %2284 = vmatpush.bf16.msra.mxu0 0
        %2285 = vmatpush.bf16.msra.mxu0 0
        %2286 = vmatpush.bf16.msra.mxu0 0
        %2287 = vmatpush.bf16.msra.mxu0 0
        %2288 = vmatpush.bf16.msra.mxu0 %v2276
        %2289 = vmatpush.bf16.msra.mxu0 %v2275
        %2290 = vmatmul.bf16.gmra.mxu0 %v2280
        %v2291 = vpop.f32.mrf.mxu0
        %v2292 = vadd.f32 %v2265, %v2291
        %v2293 = vpop.f32.mrf.mxu0
        %v2294 = vadd.f32 %v2265, %v2293
        %2295 = vdwg.mxu0
        %v2296 = vmax.f32 %v2292, 0.0
        %v2297 = vmax.f32 %v2294, 0.0
        %v2298 = vld [vmem:[%s852] sm:$0xf]
        %v2299 = vld [vmem:[%s852 + $0x4] sm:$0xf]
        %v2300 = vld [vmem:[%s852 + $0x8] sm:$0xf]
        %v2301 = vld [vmem:[%s852 + $0xc] sm:$0xf]
        %v2302 = vld [vmem:[%s852 + $0x10] sm:$0xf]
        %v2303 = vld [vmem:[%s852 + $0x14] sm:$0xf]
        %v2304 = vld [vmem:[%s852 + $0x18] sm:$0xf]
        %v2305 = vld [vmem:[%s852 + $0x1c] sm:$0xf]
        %v2306 = vpack.c.bf16 %v2297, %v2296
        %v2307 = vperm.slane %v886, 6
        %v2316 = vunpack.c.l.b16 %v2298
        %v2317 = vunpack.c.l.b16 %v2299
        %v2318 = vunpack.c.l.b16 %v2300
        %v2319 = vunpack.c.l.b16 %v2301
        %v2320 = vunpack.c.l.b16 %v2302
        %v2321 = vunpack.c.l.b16 %v2303
        %v2322 = vunpack.c.l.b16 %v2304
        %v2323 = vunpack.c.l.b16 %v2305
        %v2324 = vpack.c.b16 %v2317, %v2316
        %v2325 = vpack.c.b16 %v2319, %v2318
        %v2326 = vpack.c.b16 %v2321, %v2320
        %v2327 = vpack.c.b16 %v2323, %v2322
        %vm2332 = vcmask 523264
        %v2334 = vsel %vm2332, %v2306, 0
        %2336 = vmatpush.bf16.msra.mxu0 0
        %2337 = vmatpush.bf16.msra.mxu0 0
        %2338 = vmatpush.bf16.msra.mxu0 0
        %2339 = vmatpush.bf16.msra.mxu0 0
        %2340 = vmatpush.bf16.msra.mxu0 %v2327
        %2341 = vmatpush.bf16.msra.mxu0 %v2326
        %2342 = vmatpush.bf16.msra.mxu0 %v2325
        %2343 = vmatpush.bf16.msra.mxu0 %v2324
        %2344 = vmatmul.bf16.gmra.mxu0 %v2334
        %v2345 = vpop.f32.mrf.mxu0
        %v2346 = vadd.f32 %v2307, %v2345
        %v2347 = vpop.f32.mrf.mxu0
        %v2348 = vadd.f32 %v2307, %v2347
        %2349 = vdwg.mxu0
        %v2350 = vadd.f32 %v2256, %v2346
        %v2351 = vadd.f32 %v2257, %v2348
        %v2352 = vsel %vm911, %v2350, 0.0
        %2353 = vadd.xlane.f32.xlu0 %v2352
        %v2354 = vpop.xlane.xlu0 %2353
        %v2355 = vsel %vm911, %v2351, 0.0
        %2356 = vadd.xlane.f32.xlu0 %v2355
        %v2357 = vpop.xlane.xlu0 %2356
        %v2358 = vmul.f32 %v2354, %v1513
        %v2359 = vmul.f32 %v2357, %v1513
        %v2360 = vsub.f32 %v2350, %v2358
        %v2361 = vsub.f32 %v2351, %v2359
        %v2362 = vmul.f32 %v2360, %v2360
        %v2363 = vmul.f32 %v2361, %v2361
        %v2364 = vsel %vm911, %v2362, 0.0
        %2365 = vadd.xlane.f32.xlu0 %v2364
        %v2366 = vpop.xlane.xlu0 %2365
        %v2367 = vsel %vm911, %v2363, 0.0
        %2368 = vadd.xlane.f32.xlu0 %v2367
        %v2369 = vpop.xlane.xlu0 %2368
        %v2370 = vmul.f32 %v2366, %v1513
        %v2371 = vmul.f32 %v2369, %v1513
        %v2372 = vadd.f32 %v2370, 1e-05
        %v2373 = vadd.f32 %v2371, 1e-05
        %v2374 = vrsqrt.pop %v2372
        %v2375 = vmul.f32 %v2374, %v2372
        %v2376 = vmul.f32 %v2375, %v2374
        %v2377 = vmul.f32 0.5, %v2376
        %v2378 = vsub.f32 1.5, %v2377
        %v2379 = vmul.f32 %v2374, %v2378
        %vm2380 = vweird.f32 %v2372
        %vm2381 = vweird.f32 %v2374
        %vm2382 = vmor %vm2380, %vm2381
        %v2383 = vsel %vm2382, %v2374, %v2379
        %v2384 = vrsqrt.pop %v2373
        %v2385 = vmul.f32 %v2384, %v2373
        %v2386 = vmul.f32 %v2385, %v2384
        %v2387 = vmul.f32 0.5, %v2386
        %v2388 = vsub.f32 1.5, %v2387
        %v2389 = vmul.f32 %v2384, %v2388
        %vm2390 = vweird.f32 %v2373
        %vm2391 = vweird.f32 %v2384
        %vm2392 = vmor %vm2390, %vm2391
        %v2393 = vsel %vm2392, %v2384, %v2389
        %v2394 = vmul.f32 %v2360, %v2383
        %v2395 = vmul.f32 %v2361, %v2393
        %v2396 = vperm.slane %v887, 3
        %v2397 = vmul.f32 %v2394, %v2396
        %v2398 = vmul.f32 %v2395, %v2396
        %v2399 = vperm.slane %v887, 4
        %v2400 = vadd.f32 %v2397, %v2399
        %v2401 = vadd.f32 %v2398, %v2399
        %2402 = vst.msk [vmem:[#allocation13] sm:$0xff] %vm911, %v2400
        %2403 = vst.msk [vmem:[#allocation13 + $0x8] sm:$0xff] %vm911, %v2401
        // Predicated region
        $region121: #{tpu_custom_call.1} parent=83 // pred_check
          %p2404 = pneg %p439
        $region122: #{tpu_custom_call.1} parent=83 // pred_check_branch
          %2406 = sbr.rel (%p2404) target = $region124
        $region123: #{tpu_custom_call.1} parent=83 // pred_region
          %2408 = vsyncadd [#allocation4], 0
          %s2409 = sshll.u32 [#allocation13], 4
          %s2410 = int_to_ptr.vmem [resolvable:$true] %s2409
          %s2411 = sshll.u32 %s16, 4
          %s2412 = int_to_ptr.hbm [resolvable:$true] %s2411
          %2417 = dma.vmem_to_hbm [thread:$0]  %s2410, 256, %s2412, [#allocation4], 128, 128, 8
        $region124: #{tpu_custom_call.1} parent=83 // pred_fallthru
          _
        // Predicated region
        $region125: #{tpu_custom_call.1} parent=83 // pred_check
          %p2418 = pneg %p439
        $region126: #{tpu_custom_call.1} parent=83 // pred_check_branch
          %2420 = sbr.rel (%p2418) target = $region128
        $region127: #{tpu_custom_call.1} parent=83 // pred_region
          %2422 = dma.done [#allocation4], 256
        $region128: #{tpu_custom_call.1} parent=83 // pred_fallthru
          _
      $region84: #{tpu_custom_call.1} parent=5 // pred_fallthru
        _
      %p2423 = scmp.le.s32.totalorder 2, %s25
      // Predicated region
      $region129: #{tpu_custom_call.1} parent=5 // pred_check
        %p2424 = pneg %p2423
      $region130: #{tpu_custom_call.1} parent=5 // pred_check_branch
        %2426 = sbr.rel (%p2424) target = $region132
      $region131: #{tpu_custom_call.1} parent=5 // pred_region
        %s2427 = ssub.s32 %s25, 2
      $region132: #{tpu_custom_call.1} parent=5 // pred_fallthru
        _
    $region6: #{tpu_custom_call.1} parent=1 // loop_footer
      %s29 = sadd.s32 1, %s25
    $region7: #{tpu_custom_call.1} parent=1 // loop_footer_branch
      %24 = sbr.rel target = $region3
    $region8: #{tpu_custom_call.1} parent=1 // loop_exit
      _
    %2428 = vsyncpa [#allocation3], 1
    %s2429 = scalar_lea.sflag [#allocation3], 1
    %2430 = vsyncpa %s2429, 1
    %2431 = vsyncpa [#allocation6], 1
    %2432 = vsyncpa [#allocation4], 1
    %s2433 = scalar_lea.sflag [#allocation4], 1
    %2434 = vsyncpa %s2433, 1

</llo_original>
